<compile_context>
chip_gen: v6e
topology: v6e:2x2x1
jax: 0.10.0
libtpu: 0.0.40
codegen_flags: <defaults>
</compile_context>

<pallas_src>
import functools

import jax
import jax.numpy as jnp
from jax import lax
from jax.experimental import pallas as pl
from jax.experimental.pallas import tpu as pltpu


# ---------------------------------------------------------------------------
# In-kernel conv helper.
# Activation layout: (CPAD, NP) -- CPAD padded channels on sublanes,
# NP = imgs_per_tile * H * W flattened pixels on lanes.
# patch_scr: (10*CPAD, NP) bf16 VMEM scratch (9 taps + 1 zero-pad tap).
# ---------------------------------------------------------------------------
def _conv3x3_cp(a, w_l, b_l, m_ref, patch_scr, shifts, activation):
    """3x3 'same' conv on a (CPAD, NP) activation as ONE im2col matmul."""
    cpad, np_ = a.shape

    def tap_col(t):
        s = shifts[t]
        if s == 0:                       # center tap: no shift, mask all-ones
            return a
        rolled = pltpu.roll(a, shift=(-s) % np_, axis=1)      # XLU
        return rolled * m_ref[pl.ds(t, 1), :]                 # f32 VPU (v5e-safe)

    # Store taps in pairs -> 16-row (full bf16 tile) aligned stores.
    for g in range(4):                   # taps (0,1),(2,3),(4,5),(6,7)
        pair = jnp.concatenate([tap_col(2 * g), tap_col(2 * g + 1)], axis=0)
        patch_scr[pl.ds(2 * g * cpad, 2 * cpad), :] = pair.astype(jnp.bfloat16)
    # Last tap paired with zeros (weight columns for the pad rows are zero,
    # but the rows must hold finite values -> write zeros every call).
    tail = jnp.concatenate([tap_col(8), jnp.zeros_like(a)], axis=0)
    patch_scr[pl.ds(8 * cpad, 2 * cpad), :] = tail.astype(jnp.bfloat16)

    # bf16 x bf16 MXU matmul, f32 accumulation; bias/activation in f32.
    acc = jnp.dot(w_l, patch_scr[...], preferred_element_type=jnp.float32) + b_l
    if activation == "relu":
        acc = jnp.maximum(acc, 0.0)
    elif activation == "tanh":
        acc = jnp.tanh(acc)
    return acc


# ---------------------------------------------------------------------------
# Fused kernels.  Weight-stack layer order: 0:e1 1:e2 2:f1 3:f2 4:d1 5:d2
# ---------------------------------------------------------------------------
def _fused_step_kernel(x_ref, m_ref, w_ref, b_ref, z_ref, dec_ref, patch_scr,
                       *, n_ts, dt, shifts):
    """mode='train': encoder (+ optional fused Euler latent step) + decoder."""
    conv = functools.partial(_conv3x3_cp, m_ref=m_ref, patch_scr=patch_scr,
                             shifts=shifts)
    h = conv(x_ref[...], w_ref[0], b_ref[0], activation="relu")   # encoder
    z = conv(h, w_ref[1], b_ref[1], activation="none")
    if n_ts == 1:
        g = conv(z, w_ref[2], b_ref[2], activation="tanh")        # differentiator
        dz = conv(g, w_ref[3], b_ref[3], activation="none")
        z = z + dt * dz                                           # fused Euler
    hd = conv(z, w_ref[4], b_ref[4], activation="relu")           # decoder
    z_ref[...] = z
    dec_ref[...] = conv(hd, w_ref[5], b_ref[5], activation="none")


def _fused_rollout_kernel(x_ref, m_ref, w_ref, b_ref, z_out_ref, dec_out_ref,
                          z_scr, patch_scr, *, dt, shifts):
    """mode='pred': grid = (batch_tile, timestep); latent carried in VMEM."""
    t = pl.program_id(1)
    conv = functools.partial(_conv3x3_cp, m_ref=m_ref, patch_scr=patch_scr,
                             shifts=shifts)

    @pl.when(t == 0)
    def _():                                                      # z_0 = enc(x)
        h = conv(x_ref[...], w_ref[0], b_ref[0], activation="relu")
        z_scr[...] = conv(h, w_ref[1], b_ref[1], activation="none")

    @pl.when(t > 0)
    def _():                                                      # Euler step
        z = z_scr[...]
        g = conv(z, w_ref[2], b_ref[2], activation="tanh")
        dz = conv(g, w_ref[3], b_ref[3], activation="none")
        z_scr[...] = z + dt * dz

    z = z_scr[...]
    hd = conv(z, w_ref[4], b_ref[4], activation="relu")           # decoder
    z_out_ref[0] = z
    dec_out_ref[0] = conv(hd, w_ref[5], b_ref[5], activation="none")


# ---------------------------------------------------------------------------
# pallas_call wrappers
# ---------------------------------------------------------------------------
def _vmem_limit(cpad, np_tile):
    per_lane = (cpad * 4 * 2          # x input, double-buffered
                + 2 * cpad * 4 * 2    # two f32 output blocks, double-buffered
                + 16 * 4              # tap masks
                + 10 * cpad * 2      # bf16 patch scratch
                + 2 * cpad * 4)       # latent carry + live activations
    est = per_lane * np_tile * 2 + (2 << 20)
    # default scoped limit is 32 MiB; never exceed v7x's 64 MiB physical VMEM.
    return int(min(max(est, 32 << 20), 64 << 20))


def _run_train(w_stack, b_stack, x_cp, mask_tile, *, n_ts, dt, shifts, np_tile):
    cpad, np_all = x_cp.shape
    n_bt = np_all // np_tile
    kernel = functools.partial(_fused_step_kernel, n_ts=n_ts, dt=float(dt),
                               shifts=shifts)
    return pl.pallas_call(
        kernel,
        out_shape=(jax.ShapeDtypeStruct((cpad, np_all), jnp.float32),
                   jax.ShapeDtypeStruct((cpad, np_all), jnp.float32)),
        grid_spec=pltpu.PrefetchScalarGridSpec(
            num_scalar_prefetch=0,
            grid=(n_bt,),
            in_specs=[
                pl.BlockSpec((cpad, np_tile), lambda b: (0, b)),
                pl.BlockSpec(mask_tile.shape, lambda b: (0, 0)),
                pl.BlockSpec(w_stack.shape, lambda b: (0, 0, 0)),
                pl.BlockSpec(b_stack.shape, lambda b: (0, 0, 0)),
            ],
            out_specs=(
                pl.BlockSpec((cpad, np_tile), lambda b: (0, b)),
                pl.BlockSpec((cpad, np_tile), lambda b: (0, b)),
            ),
            scratch_shapes=[pltpu.VMEM((10 * cpad, np_tile), jnp.bfloat16)],
        ),
        compiler_params=pltpu.CompilerParams(
            dimension_semantics=("parallel",),            # megacore on v7x
            vmem_limit_bytes=_vmem_limit(cpad, np_tile)),
    )(x_cp, mask_tile, w_stack, b_stack)


def _run_rollout(w_stack, b_stack, x_cp, mask_tile, *, n_ts, dt, shifts, np_tile):
    cpad, np_all = x_cp.shape
    n_bt = np_all // np_tile
    kernel = functools.partial(_fused_rollout_kernel, dt=float(dt), shifts=shifts)
    return pl.pallas_call(
        kernel,
        out_shape=(jax.ShapeDtypeStruct((n_ts, cpad, np_all), jnp.float32),
                   jax.ShapeDtypeStruct((n_ts, cpad, np_all), jnp.float32)),
        grid_spec=pltpu.PrefetchScalarGridSpec(
            num_scalar_prefetch=0,
            grid=(n_bt, n_ts),                 # t innermost (carried in z_scr)
            in_specs=[
                pl.BlockSpec((cpad, np_tile), lambda b, t: (0, b)),
                pl.BlockSpec(mask_tile.shape, lambda b, t: (0, 0)),
                pl.BlockSpec(w_stack.shape, lambda b, t: (0, 0, 0)),
                pl.BlockSpec(b_stack.shape, lambda b, t: (0, 0, 0)),
            ],
            out_specs=(
                pl.BlockSpec((1, cpad, np_tile), lambda b, t: (t, 0, b)),
                pl.BlockSpec((1, cpad, np_tile), lambda b, t: (t, 0, b)),
            ),
            scratch_shapes=[pltpu.VMEM((cpad, np_tile), jnp.float32),
                            pltpu.VMEM((10 * cpad, np_tile), jnp.bfloat16)],
        ),
        compiler_params=pltpu.CompilerParams(
            dimension_semantics=("parallel", "arbitrary"),  # batch x time
            vmem_limit_bytes=_vmem_limit(cpad, np_tile)),
    )(x_cp, mask_tile, w_stack, b_stack)


# ---------------------------------------------------------------------------
# Layout glue (plain JAX): NCHW <-> CP, tap masks, tile selection.
# TODO(synk): if downstream consumers accept the channels-first-flat (CP)
# layout, skip the back-transposes in _from_cp / _from_cp_seq entirely.
# ---------------------------------------------------------------------------
def _to_cp(x_nchw, cpad):
    N, C, H, W = x_nchw.shape
    xc = jnp.transpose(x_nchw, (1, 0, 2, 3)).reshape(C, N * H * W)
    return jnp.pad(xc, ((0, cpad - C), (0, 0)))


def _from_cp(a_cp, N, H, W, C):
    cpad = a_cp.shape[0]
    a = a_cp.reshape(cpad, N, H, W)
    return jnp.transpose(a, (1, 0, 2, 3))[:, :C]


def _from_cp_seq(a_cp, N, H, W, C):
    T, cpad, _ = a_cp.shape
    a = a_cp.reshape(T, cpad, N, H, W)
    return jnp.transpose(a, (0, 2, 1, 3, 4))[:, :, :C]


def _make_tap_masks(H, W, imgs_per_tile):
    """(9, NP_tile) f32 validity masks for 'same' padding (precomputed once)."""
    pix = jnp.arange(H * W, dtype=jnp.int32)
    yy, xx = pix // W, pix % W
    rows = []
    for dy in range(3):
        for dx in range(3):
            sy, sx = dy - 1, dx - 1
            ok = ((yy + sy >= 0) & (yy + sy < H) &
                  (xx + sx >= 0) & (xx + sx < W))
            rows.append(ok.astype(jnp.float32))
    m = jnp.stack(rows, axis=0)                       # (9, H*W)
    return jnp.tile(m, (1, imgs_per_tile))            # (9, NP_tile)


def _choose_imgs_per_tile(N, hw, max_lanes=2048):
    """Whole images per tile (no halo); lane width a multiple of 128."""
    ok = [d for d in range(1, N + 1)
          if N % d == 0 and (d * hw) % 128 == 0 and d * hw <= max_lanes]
    return max(ok) if ok else N           # fall back to one full-array tile


# ---------------------------------------------------------------------------
# Deterministic parameter init + one-time packing to the kernel layout.
# ---------------------------------------------------------------------------
_LAYERS = ("e1", "e2", "f1", "f2", "d1", "d2")   # matches kernel weight indices


def _init_conv(key, cin, cout):
    kw, kb = jax.random.split(key)
    w = jax.random.normal(kw, (3, 3, cin, cout), jnp.float32) / jnp.sqrt(9.0 * cin)
    b = 0.01 * jax.random.normal(kb, (cout,), jnp.float32)
    return w, b


def init_params(key, c_in=4, hidden=8, latent=8):
    sizes = {"e1": (c_in, hidden), "e2": (hidden, latent),
             "f1": (latent, hidden), "f2": (hidden, latent),
             "d1": (latent, hidden), "d2": (hidden, c_in)}
    p = {}
    for k, name in zip(jax.random.split(key, len(_LAYERS)), _LAYERS):
        ci, co = sizes[name]
        p[name + "_w"], p[name + "_b"] = _init_conv(k, ci, co)
    return p


def pack_params(params, cpad):
    """Pre-reshape conv weights ONCE into the matmul-ready bf16
    (Cout_pad, 10*Cin_pad) layout (rows = Cout, cols = (tap, Cin), last Cin_pad
    columns zero for the alignment pad-tap), stacked over the 6 layers."""
    ws, bs = [], []
    for name in _LAYERS:
        w = params[name + "_w"]                      # (3, 3, ci, co)
        b = params[name + "_b"]                      # (co,)
        ci, co = w.shape[2], w.shape[3]
        w = jnp.pad(w, ((0, 0), (0, 0), (0, cpad - ci), (0, cpad - co)))
        wp = jnp.transpose(w, (3, 0, 1, 2)).reshape(cpad, 9 * cpad)
        wp = jnp.pad(wp, ((0, 0), (0, cpad)))        # zero pad-tap columns
        ws.append(wp.astype(jnp.bfloat16))
        bs.append(jnp.pad(b, (0, cpad - co)).reshape(cpad, 1))
    return jnp.stack(ws, axis=0), jnp.stack(bs, axis=0)


# ---------------------------------------------------------------------------
# lp_model forward (mirrors the PyTorch branching; invalid combos raise)
# ---------------------------------------------------------------------------
@functools.partial(jax.jit, static_argnames=("n_ts", "mode", "c_in", "latent", "dt"))
def _lp_forward(w_stack, b_stack, x_nchw, *, n_ts, mode, c_in, latent, dt):
    N, _, H, W = x_nchw.shape
    cpad = w_stack.shape[1]
    hw = H * W
    ipt = _choose_imgs_per_tile(N, hw)
    np_tile = ipt * hw
    x_cp = _to_cp(x_nchw.astype(jnp.float32), cpad)
    mask_tile = _make_tap_masks(H, W, ipt)
    shifts = tuple((dy - 1) * W + (dx - 1) for dy in range(3) for dx in range(3))
    if mode == "train":
        z_cp, dec_cp = _run_train(w_stack, b_stack, x_cp, mask_tile,
                                  n_ts=n_ts, dt=dt, shifts=shifts, np_tile=np_tile)
        return _from_cp(z_cp, N, H, W, latent), _from_cp(dec_cp, N, H, W, c_in)
    # mode == "pred"
    z_cp, dec_cp = _run_rollout(w_stack, b_stack, x_cp, mask_tile,
                                n_ts=n_ts, dt=dt, shifts=shifts, np_tile=np_tile)
    return _from_cp_seq(z_cp, N, H, W, latent), _from_cp_seq(dec_cp, N, H, W, c_in)


class LatentPARC:
    """Pallas-TPU mirror of the PyTorch `lp_model` composition wrapper with a
    concrete LatentPARC instantiation (conv encoder/decoder/differentiator,
    forward-Euler integrator with dt=0.1)."""
    # TODO(synk): if the injected PARC integrator is RK4 (not forward Euler),
    # add the extra differentiator evaluations inside the fused kernels.
    # TODO(synk): the differentiator ignores the time argument (f(t,z)=f(z)),
    # matching a time-invariant injected differentiator.

    def __init__(self, key, c_in=4, hidden=8, latent=8, dt=0.1):
        self.c_in, self.hidden, self.latent = c_in, hidden, latent
        self.dt = float(dt)
        self.cpad = ((max(c_in, hidden, latent) + 7) // 8) * 8
        self.raw_params = init_params(key, c_in, hidden, latent)
        # pre-reshaped, channel-padded, bf16 stacked weights (once at init)
        self.w_stack, self.b_stack = pack_params(self.raw_params, self.cpad)

    def __call__(self, x_nchw, n_ts=1, mode="train"):
        if mode == "train":
            if n_ts not in (0, 1):
                raise ValueError("mode='train' supports only n_ts in {0, 1} "
                                 "(matches the PyTorch lp_model).")
        elif mode == "pred":
            if n_ts < 1:
                raise ValueError("mode='pred' requires n_ts >= 1.")
        else:
            raise ValueError(f"unknown mode: {mode!r}")
        return _lp_forward(self.w_stack, self.b_stack, x_nchw,
                           n_ts=int(n_ts), mode=mode,
                           c_in=self.c_in, latent=self.latent, dt=self.dt)


# ---------------------------------------------------------------------------
# Pure-JAX reference (lax conv, SAME padding) for numerical validation.
# ---------------------------------------------------------------------------
def _conv_ref(x, w, b, activation):
    y = lax.conv_general_dilated(x, w, window_strides=(1, 1), padding="SAME",
                                 dimension_numbers=("NCHW", "HWIO", "NCHW"))
    y = y + b.reshape(1, -1, 1, 1)
    if activation == "relu":
        y = jnp.maximum(y, 0.0)
    elif activation == "tanh":
        y = jnp.tanh(y)
    return y


def _lp_forward_ref(p, x, n_ts, mode, dt=0.1):
    enc = lambda v: _conv_ref(_conv_ref(v, p["e1_w"], p["e1_b"], "relu"),
                              p["e2_w"], p["e2_b"], "none")
    dif = lambda v: _conv_ref(_conv_ref(v, p["f1_w"], p["f1_b"], "tanh"),
                              p["f2_w"], p["f2_b"], "none")
    dec = lambda v: _conv_ref(_conv_ref(v, p["d1_w"], p["d1_b"], "relu"),
                              p["d2_w"], p["d2_b"], "none")
    if mode == "train":
        z = enc(x)
        if n_ts == 1:
            z = z + dt * dif(z)
        return z, dec(z)
    zs, ds = [], []
    z = enc(x)
    zs.append(z); ds.append(dec(z))
    for _ in range(n_ts - 1):
        z = z + dt * dif(z)
        zs.append(z); ds.append(dec(z))
    return jnp.stack(zs, 0), jnp.stack(ds, 0)


if __name__ == "__main__":
    key = jax.random.PRNGKey(0)
    k_param, k_x = jax.random.split(key)

    B, C, H, W = 2, 4, 16, 16              # small NCHW input (PyTorch convention)
    model = LatentPARC(k_param, c_in=C, hidden=8, latent=8, dt=0.1)
    x = jax.random.normal(k_x, (B, C, H, W), jnp.float32)

    # bf16-rounded weights in the reference (kernel feeds bf16 MXU operands).
    ref_p = {k: (v.astype(jnp.bfloat16).astype(jnp.float32) if k.endswith("_w")
                 else v) for k, v in model.raw_params.items()}

    def check(a, b, name, tol=1e-1):
        err = float(jnp.max(jnp.abs(a - b)))
        assert err < tol, f"{name}: max abs err {err:.4f}"

    # train, n_ts=1: encoder -> fused Euler latent step -> decoder (one kernel)
    z, dec = model(x, n_ts=1, mode="train")
    jax.block_until_ready((z, dec))
    assert z.shape == (B, 8, H, W) and dec.shape == (B, C, H, W)
    z_r, dec_r = _lp_forward_ref(ref_p, x, 1, "train", dt=0.1)
    check(z, z_r, "train1_z"); check(dec, dec_r, "train1_dec")

    # autoencoder path (n_ts=0)
    z0, dec0 = model(x, n_ts=0, mode="train")
    jax.block_until_ready((z0, dec0))
    assert z0.shape == (B, 8, H, W) and dec0.shape == (B, C, H, W)
    z0_r, dec0_r = _lp_forward_ref(ref_p, x, 0, "train", dt=0.1)
    check(z0, z0_r, "train0_z"); check(dec0, dec0_r, "train0_dec")

    # pred rollout (latent resident in VMEM across timesteps)
    zp, decp = model(x, n_ts=3, mode="pred")
    jax.block_until_ready((zp, decp))
    assert zp.shape == (3, B, 8, H, W) and decp.shape == (3, B, C, H, W)
    zp_r, decp_r = _lp_forward_ref(ref_p, x, 3, "pred", dt=0.1)
    check(zp, zp_r, "pred_z"); check(decp, decp_r, "pred_dec")

    print("KERNEL_OK")
</pallas_src>

<mosaic_0001>
module attributes {stable_mosaic.version = 11 : i64} {
  func.func @_fused_step_kernel(%arg0: i32, %arg1: memref<8x512xf32, #tpu.memory_space<vmem>>, %arg2: memref<9x512xf32, #tpu.memory_space<vmem>>, %arg3: memref<6x8x80xbf16, #tpu.memory_space<vmem>>, %arg4: memref<6x8x1xf32, #tpu.memory_space<vmem>>, %arg5: memref<8x512xf32, #tpu.memory_space<vmem>>, %arg6: memref<8x512xf32, #tpu.memory_space<vmem>>, %arg7: memref<80x512xbf16, #tpu.memory_space<vmem>>) attributes {dimension_semantics = [#tpu.dimension_semantics<parallel>], iteration_bounds = array<i64: 1>, scalar_prefetch = 0 : i64, scratch_operands = 1 : i64, tpu.core_type = #tpu.core_type<tc>, window_params = [{transform_indices = @transform_0, window_bounds = array<i64: 8, 512>}, {pipeline_mode = #tpu.pipeline_mode<synchronous>, transform_indices = @transform_1, window_bounds = array<i64: 9, 512>}, {pipeline_mode = #tpu.pipeline_mode<synchronous>, transform_indices = @transform_2, window_bounds = array<i64: 6, 8, 80>}, {pipeline_mode = #tpu.pipeline_mode<synchronous>, transform_indices = @transform_3, window_bounds = array<i64: 6, 8, 1>}, {transform_indices = @transform_4, window_bounds = array<i64: 8, 512>}, {transform_indices = @transform_5, window_bounds = array<i64: 8, 512>}]} {
    %c0 = arith.constant 0 : index
    %c0_0 = arith.constant 0 : index
    %0 = vector.load %arg1[%c0, %c0_0] : memref<8x512xf32, #tpu.memory_space<vmem>>, vector<8x512xf32>
    %c0_1 = arith.constant 0 : index
    %c0_2 = arith.constant 0 : index
    %c0_3 = arith.constant 0 : index
    %1 = vector.load %arg3[%c0_1, %c0_2, %c0_3] : memref<6x8x80xbf16, #tpu.memory_space<vmem>>, vector<1x8x80xbf16>
    %2 = vector.shape_cast %1 : vector<1x8x80xbf16> to vector<8x80xbf16>
    %c0_4 = arith.constant 0 : index
    %c0_5 = arith.constant 0 : index
    %c0_6 = arith.constant 0 : index
    %3 = vector.load %arg4[%c0_4, %c0_5, %c0_6] : memref<6x8x1xf32, #tpu.memory_space<vmem>>, vector<1x8x1xf32>
    %4 = vector.shape_cast %3 : vector<1x8x1xf32> to vector<8x1xf32>
    %c17_i32 = arith.constant 17 : i32
    %5 = tpu.dynamic_rotate %0 by %c17_i32 dim 1 : vector<8x512xf32>, i32 -> vector<8x512xf32>
    %c0_7 = arith.constant 0 : index
    %c0_8 = arith.constant 0 : index
    %6 = vector.load %arg2[%c0_7, %c0_8] : memref<9x512xf32, #tpu.memory_space<vmem>>, vector<1x512xf32>
    %7 = vector.broadcast %6 : vector<1x512xf32> to vector<8x512xf32>
    %8 = arith.mulf %5, %7 : vector<8x512xf32>
    %c16_i32 = arith.constant 16 : i32
    %9 = tpu.dynamic_rotate %0 by %c16_i32 dim 1 : vector<8x512xf32>, i32 -> vector<8x512xf32>
    %c1 = arith.constant 1 : index
    %c0_9 = arith.constant 0 : index
    %10 = vector.load %arg2[%c1, %c0_9] : memref<9x512xf32, #tpu.memory_space<vmem>>, vector<1x512xf32>
    %11 = vector.broadcast %10 : vector<1x512xf32> to vector<8x512xf32>
    %12 = arith.mulf %9, %11 : vector<8x512xf32>
    %13 = tpu.concatenate %8, %12 in 0 : vector<8x512xf32>, vector<8x512xf32> -> vector<16x512xf32>
    %14 = arith.truncf %13 : vector<16x512xf32> to vector<16x512xbf16>
    %c0_10 = arith.constant 0 : index
    %c0_11 = arith.constant 0 : index
    %15 = vector.load %arg7[%c0_10, %c0_11] : memref<80x512xbf16, #tpu.memory_space<vmem>>, vector<16x512xbf16>
    tpu.vector_store %arg7[%c0_10, %c0_11], %14 {strides = array<i32>} : memref<80x512xbf16, #tpu.memory_space<vmem>>, vector<16x512xbf16>,
    %c15_i32 = arith.constant 15 : i32
    %16 = tpu.dynamic_rotate %0 by %c15_i32 dim 1 : vector<8x512xf32>, i32 -> vector<8x512xf32>
    %c2 = arith.constant 2 : index
    %c0_12 = arith.constant 0 : index
    %17 = vector.load %arg2[%c2, %c0_12] : memref<9x512xf32, #tpu.memory_space<vmem>>, vector<1x512xf32>
    %18 = vector.broadcast %17 : vector<1x512xf32> to vector<8x512xf32>
    %19 = arith.mulf %16, %18 : vector<8x512xf32>
    %c1_i32 = arith.constant 1 : i32
    %20 = tpu.dynamic_rotate %0 by %c1_i32 dim 1 : vector<8x512xf32>, i32 -> vector<8x512xf32>
    %c3 = arith.constant 3 : index
    %c0_13 = arith.constant 0 : index
    %21 = vector.load %arg2[%c3, %c0_13] : memref<9x512xf32, #tpu.memory_space<vmem>>, vector<1x512xf32>
    %22 = vector.broadcast %21 : vector<1x512xf32> to vector<8x512xf32>
    %23 = arith.mulf %20, %22 : vector<8x512xf32>
    %24 = tpu.concatenate %19, %23 in 0 : vector<8x512xf32>, vector<8x512xf32> -> vector<16x512xf32>
    %25 = arith.truncf %24 : vector<16x512xf32> to vector<16x512xbf16>
    %c16 = arith.constant 16 : index
    %c0_14 = arith.constant 0 : index
    %26 = vector.load %arg7[%c16, %c0_14] : memref<80x512xbf16, #tpu.memory_space<vmem>>, vector<16x512xbf16>
    tpu.vector_store %arg7[%c16, %c0_14], %25 {strides = array<i32>} : memref<80x512xbf16, #tpu.memory_space<vmem>>, vector<16x512xbf16>,
    %c511_i32 = arith.constant 511 : i32
    %27 = tpu.dynamic_rotate %0 by %c511_i32 dim 1 : vector<8x512xf32>, i32 -> vector<8x512xf32>
    %c5 = arith.constant 5 : index
    %c0_15 = arith.constant 0 : index
    %28 = vector.load %arg2[%c5, %c0_15] : memref<9x512xf32, #tpu.memory_space<vmem>>, vector<1x512xf32>
    %29 = vector.broadcast %28 : vector<1x512xf32> to vector<8x512xf32>
    %30 = arith.mulf %27, %29 : vector<8x512xf32>
    %31 = tpu.concatenate %0, %30 in 0 : vector<8x512xf32>, vector<8x512xf32> -> vector<16x512xf32>
    %32 = arith.truncf %31 : vector<16x512xf32> to vector<16x512xbf16>
    %c32 = arith.constant 32 : index
    %c0_16 = arith.constant 0 : index
    %33 = vector.load %arg7[%c32, %c0_16] : memref<80x512xbf16, #tpu.memory_space<vmem>>, vector<16x512xbf16>
    tpu.vector_store %arg7[%c32, %c0_16], %32 {strides = array<i32>} : memref<80x512xbf16, #tpu.memory_space<vmem>>, vector<16x512xbf16>,
    %c497_i32 = arith.constant 497 : i32
    %34 = tpu.dynamic_rotate %0 by %c497_i32 dim 1 : vector<8x512xf32>, i32 -> vector<8x512xf32>
    %c6 = arith.constant 6 : index
    %c0_17 = arith.constant 0 : index
    %35 = vector.load %arg2[%c6, %c0_17] : memref<9x512xf32, #tpu.memory_space<vmem>>, vector<1x512xf32>
    %36 = vector.broadcast %35 : vector<1x512xf32> to vector<8x512xf32>
    %37 = arith.mulf %34, %36 : vector<8x512xf32>
    %c496_i32 = arith.constant 496 : i32
    %38 = tpu.dynamic_rotate %0 by %c496_i32 dim 1 : vector<8x512xf32>, i32 -> vector<8x512xf32>
    %c7 = arith.constant 7 : index
    %c0_18 = arith.constant 0 : index
    %39 = vector.load %arg2[%c7, %c0_18] : memref<9x512xf32, #tpu.memory_space<vmem>>, vector<1x512xf32>
    %40 = vector.broadcast %39 : vector<1x512xf32> to vector<8x512xf32>
    %41 = arith.mulf %38, %40 : vector<8x512xf32>
    %42 = tpu.concatenate %37, %41 in 0 : vector<8x512xf32>, vector<8x512xf32> -> vector<16x512xf32>
    %43 = arith.truncf %42 : vector<16x512xf32> to vector<16x512xbf16>
    %c48 = arith.constant 48 : index
    %c0_19 = arith.constant 0 : index
    %44 = vector.load %arg7[%c48, %c0_19] : memref<80x512xbf16, #tpu.memory_space<vmem>>, vector<16x512xbf16>
    tpu.vector_store %arg7[%c48, %c0_19], %43 {strides = array<i32>} : memref<80x512xbf16, #tpu.memory_space<vmem>>, vector<16x512xbf16>,
    %c495_i32 = arith.constant 495 : i32
    %45 = tpu.dynamic_rotate %0 by %c495_i32 dim 1 : vector<8x512xf32>, i32 -> vector<8x512xf32>
    %c8 = arith.constant 8 : index
    %c0_20 = arith.constant 0 : index
    %46 = vector.load %arg2[%c8, %c0_20] : memref<9x512xf32, #tpu.memory_space<vmem>>, vector<1x512xf32>
    %47 = vector.broadcast %46 : vector<1x512xf32> to vector<8x512xf32>
    %48 = arith.mulf %45, %47 : vector<8x512xf32>
    %cst = arith.constant 0.000000e+00 : f32
    %49 = vector.broadcast %cst : f32 to vector<8x512xf32>
    %50 = tpu.concatenate %48, %49 in 0 : vector<8x512xf32>, vector<8x512xf32> -> vector<16x512xf32>
    %51 = arith.truncf %50 : vector<16x512xf32> to vector<16x512xbf16>
    %c64 = arith.constant 64 : index
    %c0_21 = arith.constant 0 : index
    %52 = vector.load %arg7[%c64, %c0_21] : memref<80x512xbf16, #tpu.memory_space<vmem>>, vector<16x512xbf16>
    tpu.vector_store %arg7[%c64, %c0_21], %51 {strides = array<i32>} : memref<80x512xbf16, #tpu.memory_space<vmem>>, vector<16x512xbf16>,
    %c0_22 = arith.constant 0 : index
    %c0_23 = arith.constant 0 : index
    %53 = vector.load %arg7[%c0_22, %c0_23] : memref<80x512xbf16, #tpu.memory_space<vmem>>, vector<80x512xbf16>
    %cst_24 = arith.constant dense<0.000000e+00> : vector<8x512xf32>
    %54 = tpu.matmul %2, %53, %cst_24 {dimension_numbers = #tpu.dot_dimension_numbers<[1], [0], [0], [1], [0, 0, 1, 1], [], []>} : vector<8x80xbf16>, vector<80x512xbf16>, vector<8x512xf32> -> vector<8x512xf32>
    %55 = vector.broadcast %4 : vector<8x1xf32> to vector<8x512xf32>
    %56 = arith.addf %54, %55 : vector<8x512xf32>
    %cst_25 = arith.constant 0.000000e+00 : f32
    %57 = vector.broadcast %cst_25 : f32 to vector<8x512xf32>
    %58 = arith.maximumf %56, %57 : vector<8x512xf32>
    %c1_26 = arith.constant 1 : index
    %c0_27 = arith.constant 0 : index
    %c0_28 = arith.constant 0 : index
    %59 = vector.load %arg3[%c1_26, %c0_27, %c0_28] : memref<6x8x80xbf16, #tpu.memory_space<vmem>>, vector<1x8x80xbf16>
    %60 = vector.shape_cast %59 : vector<1x8x80xbf16> to vector<8x80xbf16>
    %c1_29 = arith.constant 1 : index
    %c0_30 = arith.constant 0 : index
    %c0_31 = arith.constant 0 : index
    %61 = vector.load %arg4[%c1_29, %c0_30, %c0_31] : memref<6x8x1xf32, #tpu.memory_space<vmem>>, vector<1x8x1xf32>
    %62 = vector.shape_cast %61 : vector<1x8x1xf32> to vector<8x1xf32>
    %c17_i32_32 = arith.constant 17 : i32
    %63 = tpu.dynamic_rotate %58 by %c17_i32_32 dim 1 : vector<8x512xf32>, i32 -> vector<8x512xf32>
    %c0_33 = arith.constant 0 : index
    %c0_34 = arith.constant 0 : index
    %64 = vector.load %arg2[%c0_33, %c0_34] : memref<9x512xf32, #tpu.memory_space<vmem>>, vector<1x512xf32>
    %65 = vector.broadcast %64 : vector<1x512xf32> to vector<8x512xf32>
    %66 = arith.mulf %63, %65 : vector<8x512xf32>
    %c16_i32_35 = arith.constant 16 : i32
    %67 = tpu.dynamic_rotate %58 by %c16_i32_35 dim 1 : vector<8x512xf32>, i32 -> vector<8x512xf32>
    %c1_36 = arith.constant 1 : index
    %c0_37 = arith.constant 0 : index
    %68 = vector.load %arg2[%c1_36, %c0_37] : memref<9x512xf32, #tpu.memory_space<vmem>>, vector<1x512xf32>
    %69 = vector.broadcast %68 : vector<1x512xf32> to vector<8x512xf32>
    %70 = arith.mulf %67, %69 : vector<8x512xf32>
    %71 = tpu.concatenate %66, %70 in 0 : vector<8x512xf32>, vector<8x512xf32> -> vector<16x512xf32>
    %72 = arith.truncf %71 : vector<16x512xf32> to vector<16x512xbf16>
    %c0_38 = arith.constant 0 : index
    %c0_39 = arith.constant 0 : index
    %73 = vector.load %arg7[%c0_38, %c0_39] : memref<80x512xbf16, #tpu.memory_space<vmem>>, vector<16x512xbf16>
    tpu.vector_store %arg7[%c0_38, %c0_39], %72 {strides = array<i32>} : memref<80x512xbf16, #tpu.memory_space<vmem>>, vector<16x512xbf16>,
    %c15_i32_40 = arith.constant 15 : i32
    %74 = tpu.dynamic_rotate %58 by %c15_i32_40 dim 1 : vector<8x512xf32>, i32 -> vector<8x512xf32>
    %c2_41 = arith.constant 2 : index
    %c0_42 = arith.constant 0 : index
    %75 = vector.load %arg2[%c2_41, %c0_42] : memref<9x512xf32, #tpu.memory_space<vmem>>, vector<1x512xf32>
    %76 = vector.broadcast %75 : vector<1x512xf32> to vector<8x512xf32>
    %77 = arith.mulf %74, %76 : vector<8x512xf32>
    %c1_i32_43 = arith.constant 1 : i32
    %78 = tpu.dynamic_rotate %58 by %c1_i32_43 dim 1 : vector<8x512xf32>, i32 -> vector<8x512xf32>
    %c3_44 = arith.constant 3 : index
    %c0_45 = arith.constant 0 : index
    %79 = vector.load %arg2[%c3_44, %c0_45] : memref<9x512xf32, #tpu.memory_space<vmem>>, vector<1x512xf32>
    %80 = vector.broadcast %79 : vector<1x512xf32> to vector<8x512xf32>
    %81 = arith.mulf %78, %80 : vector<8x512xf32>
    %82 = tpu.concatenate %77, %81 in 0 : vector<8x512xf32>, vector<8x512xf32> -> vector<16x512xf32>
    %83 = arith.truncf %82 : vector<16x512xf32> to vector<16x512xbf16>
    %c16_46 = arith.constant 16 : index
    %c0_47 = arith.constant 0 : index
    %84 = vector.load %arg7[%c16_46, %c0_47] : memref<80x512xbf16, #tpu.memory_space<vmem>>, vector<16x512xbf16>
    tpu.vector_store %arg7[%c16_46, %c0_47], %83 {strides = array<i32>} : memref<80x512xbf16, #tpu.memory_space<vmem>>, vector<16x512xbf16>,
    %c511_i32_48 = arith.constant 511 : i32
    %85 = tpu.dynamic_rotate %58 by %c511_i32_48 dim 1 : vector<8x512xf32>, i32 -> vector<8x512xf32>
    %c5_49 = arith.constant 5 : index
    %c0_50 = arith.constant 0 : index
    %86 = vector.load %arg2[%c5_49, %c0_50] : memref<9x512xf32, #tpu.memory_space<vmem>>, vector<1x512xf32>
    %87 = vector.broadcast %86 : vector<1x512xf32> to vector<8x512xf32>
    %88 = arith.mulf %85, %87 : vector<8x512xf32>
    %89 = tpu.concatenate %58, %88 in 0 : vector<8x512xf32>, vector<8x512xf32> -> vector<16x512xf32>
    %90 = arith.truncf %89 : vector<16x512xf32> to vector<16x512xbf16>
    %c32_51 = arith.constant 32 : index
    %c0_52 = arith.constant 0 : index
    %91 = vector.load %arg7[%c32_51, %c0_52] : memref<80x512xbf16, #tpu.memory_space<vmem>>, vector<16x512xbf16>
    tpu.vector_store %arg7[%c32_51, %c0_52], %90 {strides = array<i32>} : memref<80x512xbf16, #tpu.memory_space<vmem>>, vector<16x512xbf16>,
    %c497_i32_53 = arith.constant 497 : i32
    %92 = tpu.dynamic_rotate %58 by %c497_i32_53 dim 1 : vector<8x512xf32>, i32 -> vector<8x512xf32>
    %c6_54 = arith.constant 6 : index
    %c0_55 = arith.constant 0 : index
    %93 = vector.load %arg2[%c6_54, %c0_55] : memref<9x512xf32, #tpu.memory_space<vmem>>, vector<1x512xf32>
    %94 = vector.broadcast %93 : vector<1x512xf32> to vector<8x512xf32>
    %95 = arith.mulf %92, %94 : vector<8x512xf32>
    %c496_i32_56 = arith.constant 496 : i32
    %96 = tpu.dynamic_rotate %58 by %c496_i32_56 dim 1 : vector<8x512xf32>, i32 -> vector<8x512xf32>
    %c7_57 = arith.constant 7 : index
    %c0_58 = arith.constant 0 : index
    %97 = vector.load %arg2[%c7_57, %c0_58] : memref<9x512xf32, #tpu.memory_space<vmem>>, vector<1x512xf32>
    %98 = vector.broadcast %97 : vector<1x512xf32> to vector<8x512xf32>
    %99 = arith.mulf %96, %98 : vector<8x512xf32>
    %100 = tpu.concatenate %95, %99 in 0 : vector<8x512xf32>, vector<8x512xf32> -> vector<16x512xf32>
    %101 = arith.truncf %100 : vector<16x512xf32> to vector<16x512xbf16>
    %c48_59 = arith.constant 48 : index
    %c0_60 = arith.constant 0 : index
    %102 = vector.load %arg7[%c48_59, %c0_60] : memref<80x512xbf16, #tpu.memory_space<vmem>>, vector<16x512xbf16>
    tpu.vector_store %arg7[%c48_59, %c0_60], %101 {strides = array<i32>} : memref<80x512xbf16, #tpu.memory_space<vmem>>, vector<16x512xbf16>,
    %c495_i32_61 = arith.constant 495 : i32
    %103 = tpu.dynamic_rotate %58 by %c495_i32_61 dim 1 : vector<8x512xf32>, i32 -> vector<8x512xf32>
    %c8_62 = arith.constant 8 : index
    %c0_63 = arith.constant 0 : index
    %104 = vector.load %arg2[%c8_62, %c0_63] : memref<9x512xf32, #tpu.memory_space<vmem>>, vector<1x512xf32>
    %105 = vector.broadcast %104 : vector<1x512xf32> to vector<8x512xf32>
    %106 = arith.mulf %103, %105 : vector<8x512xf32>
    %cst_64 = arith.constant 0.000000e+00 : f32
    %107 = vector.broadcast %cst_64 : f32 to vector<8x512xf32>
    %108 = tpu.concatenate %106, %107 in 0 : vector<8x512xf32>, vector<8x512xf32> -> vector<16x512xf32>
    %109 = arith.truncf %108 : vector<16x512xf32> to vector<16x512xbf16>
    %c64_65 = arith.constant 64 : index
    %c0_66 = arith.constant 0 : index
    %110 = vector.load %arg7[%c64_65, %c0_66] : memref<80x512xbf16, #tpu.memory_space<vmem>>, vector<16x512xbf16>
    tpu.vector_store %arg7[%c64_65, %c0_66], %109 {strides = array<i32>} : memref<80x512xbf16, #tpu.memory_space<vmem>>, vector<16x512xbf16>,
    %c0_67 = arith.constant 0 : index
    %c0_68 = arith.constant 0 : index
    %111 = vector.load %arg7[%c0_67, %c0_68] : memref<80x512xbf16, #tpu.memory_space<vmem>>, vector<80x512xbf16>
    %cst_69 = arith.constant dense<0.000000e+00> : vector<8x512xf32>
    %112 = tpu.matmul %60, %111, %cst_69 {dimension_numbers = #tpu.dot_dimension_numbers<[1], [0], [0], [1], [0, 0, 1, 1], [], []>} : vector<8x80xbf16>, vector<80x512xbf16>, vector<8x512xf32> -> vector<8x512xf32>
    %113 = vector.broadcast %62 : vector<8x1xf32> to vector<8x512xf32>
    %114 = arith.addf %112, %113 : vector<8x512xf32>
    %c2_70 = arith.constant 2 : index
    %c0_71 = arith.constant 0 : index
    %c0_72 = arith.constant 0 : index
    %115 = vector.load %arg3[%c2_70, %c0_71, %c0_72] : memref<6x8x80xbf16, #tpu.memory_space<vmem>>, vector<1x8x80xbf16>
    %116 = vector.shape_cast %115 : vector<1x8x80xbf16> to vector<8x80xbf16>
    %c2_73 = arith.constant 2 : index
    %c0_74 = arith.constant 0 : index
    %c0_75 = arith.constant 0 : index
    %117 = vector.load %arg4[%c2_73, %c0_74, %c0_75] : memref<6x8x1xf32, #tpu.memory_space<vmem>>, vector<1x8x1xf32>
    %118 = vector.shape_cast %117 : vector<1x8x1xf32> to vector<8x1xf32>
    %c17_i32_76 = arith.constant 17 : i32
    %119 = tpu.dynamic_rotate %114 by %c17_i32_76 dim 1 : vector<8x512xf32>, i32 -> vector<8x512xf32>
    %c0_77 = arith.constant 0 : index
    %c0_78 = arith.constant 0 : index
    %120 = vector.load %arg2[%c0_77, %c0_78] : memref<9x512xf32, #tpu.memory_space<vmem>>, vector<1x512xf32>
    %121 = vector.broadcast %120 : vector<1x512xf32> to vector<8x512xf32>
    %122 = arith.mulf %119, %121 : vector<8x512xf32>
    %c16_i32_79 = arith.constant 16 : i32
    %123 = tpu.dynamic_rotate %114 by %c16_i32_79 dim 1 : vector<8x512xf32>, i32 -> vector<8x512xf32>
    %c1_80 = arith.constant 1 : index
    %c0_81 = arith.constant 0 : index
    %124 = vector.load %arg2[%c1_80, %c0_81] : memref<9x512xf32, #tpu.memory_space<vmem>>, vector<1x512xf32>
    %125 = vector.broadcast %124 : vector<1x512xf32> to vector<8x512xf32>
    %126 = arith.mulf %123, %125 : vector<8x512xf32>
    %127 = tpu.concatenate %122, %126 in 0 : vector<8x512xf32>, vector<8x512xf32> -> vector<16x512xf32>
    %128 = arith.truncf %127 : vector<16x512xf32> to vector<16x512xbf16>
    %c0_82 = arith.constant 0 : index
    %c0_83 = arith.constant 0 : index
    %129 = vector.load %arg7[%c0_82, %c0_83] : memref<80x512xbf16, #tpu.memory_space<vmem>>, vector<16x512xbf16>
    tpu.vector_store %arg7[%c0_82, %c0_83], %128 {strides = array<i32>} : memref<80x512xbf16, #tpu.memory_space<vmem>>, vector<16x512xbf16>,
    %c15_i32_84 = arith.constant 15 : i32
    %130 = tpu.dynamic_rotate %114 by %c15_i32_84 dim 1 : vector<8x512xf32>, i32 -> vector<8x512xf32>
    %c2_85 = arith.constant 2 : index
    %c0_86 = arith.constant 0 : index
    %131 = vector.load %arg2[%c2_85, %c0_86] : memref<9x512xf32, #tpu.memory_space<vmem>>, vector<1x512xf32>
    %132 = vector.broadcast %131 : vector<1x512xf32> to vector<8x512xf32>
    %133 = arith.mulf %130, %132 : vector<8x512xf32>
    %c1_i32_87 = arith.constant 1 : i32
    %134 = tpu.dynamic_rotate %114 by %c1_i32_87 dim 1 : vector<8x512xf32>, i32 -> vector<8x512xf32>
    %c3_88 = arith.constant 3 : index
    %c0_89 = arith.constant 0 : index
    %135 = vector.load %arg2[%c3_88, %c0_89] : memref<9x512xf32, #tpu.memory_space<vmem>>, vector<1x512xf32>
    %136 = vector.broadcast %135 : vector<1x512xf32> to vector<8x512xf32>
    %137 = arith.mulf %134, %136 : vector<8x512xf32>
    %138 = tpu.concatenate %133, %137 in 0 : vector<8x512xf32>, vector<8x512xf32> -> vector<16x512xf32>
    %139 = arith.truncf %138 : vector<16x512xf32> to vector<16x512xbf16>
    %c16_90 = arith.constant 16 : index
    %c0_91 = arith.constant 0 : index
    %140 = vector.load %arg7[%c16_90, %c0_91] : memref<80x512xbf16, #tpu.memory_space<vmem>>, vector<16x512xbf16>
    tpu.vector_store %arg7[%c16_90, %c0_91], %139 {strides = array<i32>} : memref<80x512xbf16, #tpu.memory_space<vmem>>, vector<16x512xbf16>,
    %c511_i32_92 = arith.constant 511 : i32
    %141 = tpu.dynamic_rotate %114 by %c511_i32_92 dim 1 : vector<8x512xf32>, i32 -> vector<8x512xf32>
    %c5_93 = arith.constant 5 : index
    %c0_94 = arith.constant 0 : index
    %142 = vector.load %arg2[%c5_93, %c0_94] : memref<9x512xf32, #tpu.memory_space<vmem>>, vector<1x512xf32>
    %143 = vector.broadcast %142 : vector<1x512xf32> to vector<8x512xf32>
    %144 = arith.mulf %141, %143 : vector<8x512xf32>
    %145 = tpu.concatenate %114, %144 in 0 : vector<8x512xf32>, vector<8x512xf32> -> vector<16x512xf32>
    %146 = arith.truncf %145 : vector<16x512xf32> to vector<16x512xbf16>
    %c32_95 = arith.constant 32 : index
    %c0_96 = arith.constant 0 : index
    %147 = vector.load %arg7[%c32_95, %c0_96] : memref<80x512xbf16, #tpu.memory_space<vmem>>, vector<16x512xbf16>
    tpu.vector_store %arg7[%c32_95, %c0_96], %146 {strides = array<i32>} : memref<80x512xbf16, #tpu.memory_space<vmem>>, vector<16x512xbf16>,
    %c497_i32_97 = arith.constant 497 : i32
    %148 = tpu.dynamic_rotate %114 by %c497_i32_97 dim 1 : vector<8x512xf32>, i32 -> vector<8x512xf32>
    %c6_98 = arith.constant 6 : index
    %c0_99 = arith.constant 0 : index
    %149 = vector.load %arg2[%c6_98, %c0_99] : memref<9x512xf32, #tpu.memory_space<vmem>>, vector<1x512xf32>
    %150 = vector.broadcast %149 : vector<1x512xf32> to vector<8x512xf32>
    %151 = arith.mulf %148, %150 : vector<8x512xf32>
    %c496_i32_100 = arith.constant 496 : i32
    %152 = tpu.dynamic_rotate %114 by %c496_i32_100 dim 1 : vector<8x512xf32>, i32 -> vector<8x512xf32>
    %c7_101 = arith.constant 7 : index
    %c0_102 = arith.constant 0 : index
    %153 = vector.load %arg2[%c7_101, %c0_102] : memref<9x512xf32, #tpu.memory_space<vmem>>, vector<1x512xf32>
    %154 = vector.broadcast %153 : vector<1x512xf32> to vector<8x512xf32>
    %155 = arith.mulf %152, %154 : vector<8x512xf32>
    %156 = tpu.concatenate %151, %155 in 0 : vector<8x512xf32>, vector<8x512xf32> -> vector<16x512xf32>
    %157 = arith.truncf %156 : vector<16x512xf32> to vector<16x512xbf16>
    %c48_103 = arith.constant 48 : index
    %c0_104 = arith.constant 0 : index
    %158 = vector.load %arg7[%c48_103, %c0_104] : memref<80x512xbf16, #tpu.memory_space<vmem>>, vector<16x512xbf16>
    tpu.vector_store %arg7[%c48_103, %c0_104], %157 {strides = array<i32>} : memref<80x512xbf16, #tpu.memory_space<vmem>>, vector<16x512xbf16>,
    %c495_i32_105 = arith.constant 495 : i32
    %159 = tpu.dynamic_rotate %114 by %c495_i32_105 dim 1 : vector<8x512xf32>, i32 -> vector<8x512xf32>
    %c8_106 = arith.constant 8 : index
    %c0_107 = arith.constant 0 : index
    %160 = vector.load %arg2[%c8_106, %c0_107] : memref<9x512xf32, #tpu.memory_space<vmem>>, vector<1x512xf32>
    %161 = vector.broadcast %160 : vector<1x512xf32> to vector<8x512xf32>
    %162 = arith.mulf %159, %161 : vector<8x512xf32>
    %cst_108 = arith.constant 0.000000e+00 : f32
    %163 = vector.broadcast %cst_108 : f32 to vector<8x512xf32>
    %164 = tpu.concatenate %162, %163 in 0 : vector<8x512xf32>, vector<8x512xf32> -> vector<16x512xf32>
    %165 = arith.truncf %164 : vector<16x512xf32> to vector<16x512xbf16>
    %c64_109 = arith.constant 64 : index
    %c0_110 = arith.constant 0 : index
    %166 = vector.load %arg7[%c64_109, %c0_110] : memref<80x512xbf16, #tpu.memory_space<vmem>>, vector<16x512xbf16>
    tpu.vector_store %arg7[%c64_109, %c0_110], %165 {strides = array<i32>} : memref<80x512xbf16, #tpu.memory_space<vmem>>, vector<16x512xbf16>,
    %c0_111 = arith.constant 0 : index
    %c0_112 = arith.constant 0 : index
    %167 = vector.load %arg7[%c0_111, %c0_112] : memref<80x512xbf16, #tpu.memory_space<vmem>>, vector<80x512xbf16>
    %cst_113 = arith.constant dense<0.000000e+00> : vector<8x512xf32>
    %168 = tpu.matmul %116, %167, %cst_113 {dimension_numbers = #tpu.dot_dimension_numbers<[1], [0], [0], [1], [0, 0, 1, 1], [], []>} : vector<8x80xbf16>, vector<80x512xbf16>, vector<8x512xf32> -> vector<8x512xf32>
    %169 = vector.broadcast %118 : vector<8x1xf32> to vector<8x512xf32>
    %170 = arith.addf %168, %169 : vector<8x512xf32>
    %171 = math.tanh %170 : vector<8x512xf32>
    %c3_114 = arith.constant 3 : index
    %c0_115 = arith.constant 0 : index
    %c0_116 = arith.constant 0 : index
    %172 = vector.load %arg3[%c3_114, %c0_115, %c0_116] : memref<6x8x80xbf16, #tpu.memory_space<vmem>>, vector<1x8x80xbf16>
    %173 = vector.shape_cast %172 : vector<1x8x80xbf16> to vector<8x80xbf16>
    %c3_117 = arith.constant 3 : index
    %c0_118 = arith.constant 0 : index
    %c0_119 = arith.constant 0 : index
    %174 = vector.load %arg4[%c3_117, %c0_118, %c0_119] : memref<6x8x1xf32, #tpu.memory_space<vmem>>, vector<1x8x1xf32>
    %175 = vector.shape_cast %174 : vector<1x8x1xf32> to vector<8x1xf32>
    %c17_i32_120 = arith.constant 17 : i32
    %176 = tpu.dynamic_rotate %171 by %c17_i32_120 dim 1 : vector<8x512xf32>, i32 -> vector<8x512xf32>
    %c0_121 = arith.constant 0 : index
    %c0_122 = arith.constant 0 : index
    %177 = vector.load %arg2[%c0_121, %c0_122] : memref<9x512xf32, #tpu.memory_space<vmem>>, vector<1x512xf32>
    %178 = vector.broadcast %177 : vector<1x512xf32> to vector<8x512xf32>
    %179 = arith.mulf %176, %178 : vector<8x512xf32>
    %c16_i32_123 = arith.constant 16 : i32
    %180 = tpu.dynamic_rotate %171 by %c16_i32_123 dim 1 : vector<8x512xf32>, i32 -> vector<8x512xf32>
    %c1_124 = arith.constant 1 : index
    %c0_125 = arith.constant 0 : index
    %181 = vector.load %arg2[%c1_124, %c0_125] : memref<9x512xf32, #tpu.memory_space<vmem>>, vector<1x512xf32>
    %182 = vector.broadcast %181 : vector<1x512xf32> to vector<8x512xf32>
    %183 = arith.mulf %180, %182 : vector<8x512xf32>
    %184 = tpu.concatenate %179, %183 in 0 : vector<8x512xf32>, vector<8x512xf32> -> vector<16x512xf32>
    %185 = arith.truncf %184 : vector<16x512xf32> to vector<16x512xbf16>
    %c0_126 = arith.constant 0 : index
    %c0_127 = arith.constant 0 : index
    %186 = vector.load %arg7[%c0_126, %c0_127] : memref<80x512xbf16, #tpu.memory_space<vmem>>, vector<16x512xbf16>
    tpu.vector_store %arg7[%c0_126, %c0_127], %185 {strides = array<i32>} : memref<80x512xbf16, #tpu.memory_space<vmem>>, vector<16x512xbf16>,
    %c15_i32_128 = arith.constant 15 : i32
    %187 = tpu.dynamic_rotate %171 by %c15_i32_128 dim 1 : vector<8x512xf32>, i32 -> vector<8x512xf32>
    %c2_129 = arith.constant 2 : index
    %c0_130 = arith.constant 0 : index
    %188 = vector.load %arg2[%c2_129, %c0_130] : memref<9x512xf32, #tpu.memory_space<vmem>>, vector<1x512xf32>
    %189 = vector.broadcast %188 : vector<1x512xf32> to vector<8x512xf32>
    %190 = arith.mulf %187, %189 : vector<8x512xf32>
    %c1_i32_131 = arith.constant 1 : i32
    %191 = tpu.dynamic_rotate %171 by %c1_i32_131 dim 1 : vector<8x512xf32>, i32 -> vector<8x512xf32>
    %c3_132 = arith.constant 3 : index
    %c0_133 = arith.constant 0 : index
    %192 = vector.load %arg2[%c3_132, %c0_133] : memref<9x512xf32, #tpu.memory_space<vmem>>, vector<1x512xf32>
    %193 = vector.broadcast %192 : vector<1x512xf32> to vector<8x512xf32>
    %194 = arith.mulf %191, %193 : vector<8x512xf32>
    %195 = tpu.concatenate %190, %194 in 0 : vector<8x512xf32>, vector<8x512xf32> -> vector<16x512xf32>
    %196 = arith.truncf %195 : vector<16x512xf32> to vector<16x512xbf16>
    %c16_134 = arith.constant 16 : index
    %c0_135 = arith.constant 0 : index
    %197 = vector.load %arg7[%c16_134, %c0_135] : memref<80x512xbf16, #tpu.memory_space<vmem>>, vector<16x512xbf16>
    tpu.vector_store %arg7[%c16_134, %c0_135], %196 {strides = array<i32>} : memref<80x512xbf16, #tpu.memory_space<vmem>>, vector<16x512xbf16>,
    %c511_i32_136 = arith.constant 511 : i32
    %198 = tpu.dynamic_rotate %171 by %c511_i32_136 dim 1 : vector<8x512xf32>, i32 -> vector<8x512xf32>
    %c5_137 = arith.constant 5 : index
    %c0_138 = arith.constant 0 : index
    %199 = vector.load %arg2[%c5_137, %c0_138] : memref<9x512xf32, #tpu.memory_space<vmem>>, vector<1x512xf32>
    %200 = vector.broadcast %199 : vector<1x512xf32> to vector<8x512xf32>
    %201 = arith.mulf %198, %200 : vector<8x512xf32>
    %202 = tpu.concatenate %171, %201 in 0 : vector<8x512xf32>, vector<8x512xf32> -> vector<16x512xf32>
    %203 = arith.truncf %202 : vector<16x512xf32> to vector<16x512xbf16>
    %c32_139 = arith.constant 32 : index
    %c0_140 = arith.constant 0 : index
    %204 = vector.load %arg7[%c32_139, %c0_140] : memref<80x512xbf16, #tpu.memory_space<vmem>>, vector<16x512xbf16>
    tpu.vector_store %arg7[%c32_139, %c0_140], %203 {strides = array<i32>} : memref<80x512xbf16, #tpu.memory_space<vmem>>, vector<16x512xbf16>,
    %c497_i32_141 = arith.constant 497 : i32
    %205 = tpu.dynamic_rotate %171 by %c497_i32_141 dim 1 : vector<8x512xf32>, i32 -> vector<8x512xf32>
    %c6_142 = arith.constant 6 : index
    %c0_143 = arith.constant 0 : index
    %206 = vector.load %arg2[%c6_142, %c0_143] : memref<9x512xf32, #tpu.memory_space<vmem>>, vector<1x512xf32>
    %207 = vector.broadcast %206 : vector<1x512xf32> to vector<8x512xf32>
    %208 = arith.mulf %205, %207 : vector<8x512xf32>
    %c496_i32_144 = arith.constant 496 : i32
    %209 = tpu.dynamic_rotate %171 by %c496_i32_144 dim 1 : vector<8x512xf32>, i32 -> vector<8x512xf32>
    %c7_145 = arith.constant 7 : index
    %c0_146 = arith.constant 0 : index
    %210 = vector.load %arg2[%c7_145, %c0_146] : memref<9x512xf32, #tpu.memory_space<vmem>>, vector<1x512xf32>
    %211 = vector.broadcast %210 : vector<1x512xf32> to vector<8x512xf32>
    %212 = arith.mulf %209, %211 : vector<8x512xf32>
    %213 = tpu.concatenate %208, %212 in 0 : vector<8x512xf32>, vector<8x512xf32> -> vector<16x512xf32>
    %214 = arith.truncf %213 : vector<16x512xf32> to vector<16x512xbf16>
    %c48_147 = arith.constant 48 : index
    %c0_148 = arith.constant 0 : index
    %215 = vector.load %arg7[%c48_147, %c0_148] : memref<80x512xbf16, #tpu.memory_space<vmem>>, vector<16x512xbf16>
    tpu.vector_store %arg7[%c48_147, %c0_148], %214 {strides = array<i32>} : memref<80x512xbf16, #tpu.memory_space<vmem>>, vector<16x512xbf16>,
    %c495_i32_149 = arith.constant 495 : i32
    %216 = tpu.dynamic_rotate %171 by %c495_i32_149 dim 1 : vector<8x512xf32>, i32 -> vector<8x512xf32>
    %c8_150 = arith.constant 8 : index
    %c0_151 = arith.constant 0 : index
    %217 = vector.load %arg2[%c8_150, %c0_151] : memref<9x512xf32, #tpu.memory_space<vmem>>, vector<1x512xf32>
    %218 = vector.broadcast %217 : vector<1x512xf32> to vector<8x512xf32>
    %219 = arith.mulf %216, %218 : vector<8x512xf32>
    %cst_152 = arith.constant 0.000000e+00 : f32
    %220 = vector.broadcast %cst_152 : f32 to vector<8x512xf32>
    %221 = tpu.concatenate %219, %220 in 0 : vector<8x512xf32>, vector<8x512xf32> -> vector<16x512xf32>
    %222 = arith.truncf %221 : vector<16x512xf32> to vector<16x512xbf16>
    %c64_153 = arith.constant 64 : index
    %c0_154 = arith.constant 0 : index
    %223 = vector.load %arg7[%c64_153, %c0_154] : memref<80x512xbf16, #tpu.memory_space<vmem>>, vector<16x512xbf16>
    tpu.vector_store %arg7[%c64_153, %c0_154], %222 {strides = array<i32>} : memref<80x512xbf16, #tpu.memory_space<vmem>>, vector<16x512xbf16>,
    %c0_155 = arith.constant 0 : index
    %c0_156 = arith.constant 0 : index
    %224 = vector.load %arg7[%c0_155, %c0_156] : memref<80x512xbf16, #tpu.memory_space<vmem>>, vector<80x512xbf16>
    %cst_157 = arith.constant dense<0.000000e+00> : vector<8x512xf32>
    %225 = tpu.matmul %173, %224, %cst_157 {dimension_numbers = #tpu.dot_dimension_numbers<[1], [0], [0], [1], [0, 0, 1, 1], [], []>} : vector<8x80xbf16>, vector<80x512xbf16>, vector<8x512xf32> -> vector<8x512xf32>
    %226 = vector.broadcast %175 : vector<8x1xf32> to vector<8x512xf32>
    %227 = arith.addf %225, %226 : vector<8x512xf32>
    %cst_158 = arith.constant 1.000000e-01 : f32
    %228 = vector.broadcast %cst_158 : f32 to vector<8x512xf32>
    %229 = arith.mulf %228, %227 : vector<8x512xf32>
    %230 = arith.addf %114, %229 : vector<8x512xf32>
    %c4 = arith.constant 4 : index
    %c0_159 = arith.constant 0 : index
    %c0_160 = arith.constant 0 : index
    %231 = vector.load %arg3[%c4, %c0_159, %c0_160] : memref<6x8x80xbf16, #tpu.memory_space<vmem>>, vector<1x8x80xbf16>
    %232 = vector.shape_cast %231 : vector<1x8x80xbf16> to vector<8x80xbf16>
    %c4_161 = arith.constant 4 : index
    %c0_162 = arith.constant 0 : index
    %c0_163 = arith.constant 0 : index
    %233 = vector.load %arg4[%c4_161, %c0_162, %c0_163] : memref<6x8x1xf32, #tpu.memory_space<vmem>>, vector<1x8x1xf32>
    %234 = vector.shape_cast %233 : vector<1x8x1xf32> to vector<8x1xf32>
    %c17_i32_164 = arith.constant 17 : i32
    %235 = tpu.dynamic_rotate %230 by %c17_i32_164 dim 1 : vector<8x512xf32>, i32 -> vector<8x512xf32>
    %c0_165 = arith.constant 0 : index
    %c0_166 = arith.constant 0 : index
    %236 = vector.load %arg2[%c0_165, %c0_166] : memref<9x512xf32, #tpu.memory_space<vmem>>, vector<1x512xf32>
    %237 = vector.broadcast %236 : vector<1x512xf32> to vector<8x512xf32>
    %238 = arith.mulf %235, %237 : vector<8x512xf32>
    %c16_i32_167 = arith.constant 16 : i32
    %239 = tpu.dynamic_rotate %230 by %c16_i32_167 dim 1 : vector<8x512xf32>, i32 -> vector<8x512xf32>
    %c1_168 = arith.constant 1 : index
    %c0_169 = arith.constant 0 : index
    %240 = vector.load %arg2[%c1_168, %c0_169] : memref<9x512xf32, #tpu.memory_space<vmem>>, vector<1x512xf32>
    %241 = vector.broadcast %240 : vector<1x512xf32> to vector<8x512xf32>
    %242 = arith.mulf %239, %241 : vector<8x512xf32>
    %243 = tpu.concatenate %238, %242 in 0 : vector<8x512xf32>, vector<8x512xf32> -> vector<16x512xf32>
    %244 = arith.truncf %243 : vector<16x512xf32> to vector<16x512xbf16>
    %c0_170 = arith.constant 0 : index
    %c0_171 = arith.constant 0 : index
    %245 = vector.load %arg7[%c0_170, %c0_171] : memref<80x512xbf16, #tpu.memory_space<vmem>>, vector<16x512xbf16>
    tpu.vector_store %arg7[%c0_170, %c0_171], %244 {strides = array<i32>} : memref<80x512xbf16, #tpu.memory_space<vmem>>, vector<16x512xbf16>,
    %c15_i32_172 = arith.constant 15 : i32
    %246 = tpu.dynamic_rotate %230 by %c15_i32_172 dim 1 : vector<8x512xf32>, i32 -> vector<8x512xf32>
    %c2_173 = arith.constant 2 : index
    %c0_174 = arith.constant 0 : index
    %247 = vector.load %arg2[%c2_173, %c0_174] : memref<9x512xf32, #tpu.memory_space<vmem>>, vector<1x512xf32>
    %248 = vector.broadcast %247 : vector<1x512xf32> to vector<8x512xf32>
    %249 = arith.mulf %246, %248 : vector<8x512xf32>
    %c1_i32_175 = arith.constant 1 : i32
    %250 = tpu.dynamic_rotate %230 by %c1_i32_175 dim 1 : vector<8x512xf32>, i32 -> vector<8x512xf32>
    %c3_176 = arith.constant 3 : index
    %c0_177 = arith.constant 0 : index
    %251 = vector.load %arg2[%c3_176, %c0_177] : memref<9x512xf32, #tpu.memory_space<vmem>>, vector<1x512xf32>
    %252 = vector.broadcast %251 : vector<1x512xf32> to vector<8x512xf32>
    %253 = arith.mulf %250, %252 : vector<8x512xf32>
    %254 = tpu.concatenate %249, %253 in 0 : vector<8x512xf32>, vector<8x512xf32> -> vector<16x512xf32>
    %255 = arith.truncf %254 : vector<16x512xf32> to vector<16x512xbf16>
    %c16_178 = arith.constant 16 : index
    %c0_179 = arith.constant 0 : index
    %256 = vector.load %arg7[%c16_178, %c0_179] : memref<80x512xbf16, #tpu.memory_space<vmem>>, vector<16x512xbf16>
    tpu.vector_store %arg7[%c16_178, %c0_179], %255 {strides = array<i32>} : memref<80x512xbf16, #tpu.memory_space<vmem>>, vector<16x512xbf16>,
    %c511_i32_180 = arith.constant 511 : i32
    %257 = tpu.dynamic_rotate %230 by %c511_i32_180 dim 1 : vector<8x512xf32>, i32 -> vector<8x512xf32>
    %c5_181 = arith.constant 5 : index
    %c0_182 = arith.constant 0 : index
    %258 = vector.load %arg2[%c5_181, %c0_182] : memref<9x512xf32, #tpu.memory_space<vmem>>, vector<1x512xf32>
    %259 = vector.broadcast %258 : vector<1x512xf32> to vector<8x512xf32>
    %260 = arith.mulf %257, %259 : vector<8x512xf32>
    %261 = tpu.concatenate %230, %260 in 0 : vector<8x512xf32>, vector<8x512xf32> -> vector<16x512xf32>
    %262 = arith.truncf %261 : vector<16x512xf32> to vector<16x512xbf16>
    %c32_183 = arith.constant 32 : index
    %c0_184 = arith.constant 0 : index
    %263 = vector.load %arg7[%c32_183, %c0_184] : memref<80x512xbf16, #tpu.memory_space<vmem>>, vector<16x512xbf16>
    tpu.vector_store %arg7[%c32_183, %c0_184], %262 {strides = array<i32>} : memref<80x512xbf16, #tpu.memory_space<vmem>>, vector<16x512xbf16>,
    %c497_i32_185 = arith.constant 497 : i32
    %264 = tpu.dynamic_rotate %230 by %c497_i32_185 dim 1 : vector<8x512xf32>, i32 -> vector<8x512xf32>
    %c6_186 = arith.constant 6 : index
    %c0_187 = arith.constant 0 : index
    %265 = vector.load %arg2[%c6_186, %c0_187] : memref<9x512xf32, #tpu.memory_space<vmem>>, vector<1x512xf32>
    %266 = vector.broadcast %265 : vector<1x512xf32> to vector<8x512xf32>
    %267 = arith.mulf %264, %266 : vector<8x512xf32>
    %c496_i32_188 = arith.constant 496 : i32
    %268 = tpu.dynamic_rotate %230 by %c496_i32_188 dim 1 : vector<8x512xf32>, i32 -> vector<8x512xf32>
    %c7_189 = arith.constant 7 : index
    %c0_190 = arith.constant 0 : index
    %269 = vector.load %arg2[%c7_189, %c0_190] : memref<9x512xf32, #tpu.memory_space<vmem>>, vector<1x512xf32>
    %270 = vector.broadcast %269 : vector<1x512xf32> to vector<8x512xf32>
    %271 = arith.mulf %268, %270 : vector<8x512xf32>
    %272 = tpu.concatenate %267, %271 in 0 : vector<8x512xf32>, vector<8x512xf32> -> vector<16x512xf32>
    %273 = arith.truncf %272 : vector<16x512xf32> to vector<16x512xbf16>
    %c48_191 = arith.constant 48 : index
    %c0_192 = arith.constant 0 : index
    %274 = vector.load %arg7[%c48_191, %c0_192] : memref<80x512xbf16, #tpu.memory_space<vmem>>, vector<16x512xbf16>
    tpu.vector_store %arg7[%c48_191, %c0_192], %273 {strides = array<i32>} : memref<80x512xbf16, #tpu.memory_space<vmem>>, vector<16x512xbf16>,
    %c495_i32_193 = arith.constant 495 : i32
    %275 = tpu.dynamic_rotate %230 by %c495_i32_193 dim 1 : vector<8x512xf32>, i32 -> vector<8x512xf32>
    %c8_194 = arith.constant 8 : index
    %c0_195 = arith.constant 0 : index
    %276 = vector.load %arg2[%c8_194, %c0_195] : memref<9x512xf32, #tpu.memory_space<vmem>>, vector<1x512xf32>
    %277 = vector.broadcast %276 : vector<1x512xf32> to vector<8x512xf32>
    %278 = arith.mulf %275, %277 : vector<8x512xf32>
    %cst_196 = arith.constant 0.000000e+00 : f32
    %279 = vector.broadcast %cst_196 : f32 to vector<8x512xf32>
    %280 = tpu.concatenate %278, %279 in 0 : vector<8x512xf32>, vector<8x512xf32> -> vector<16x512xf32>
    %281 = arith.truncf %280 : vector<16x512xf32> to vector<16x512xbf16>
    %c64_197 = arith.constant 64 : index
    %c0_198 = arith.constant 0 : index
    %282 = vector.load %arg7[%c64_197, %c0_198] : memref<80x512xbf16, #tpu.memory_space<vmem>>, vector<16x512xbf16>
    tpu.vector_store %arg7[%c64_197, %c0_198], %281 {strides = array<i32>} : memref<80x512xbf16, #tpu.memory_space<vmem>>, vector<16x512xbf16>,
    %c0_199 = arith.constant 0 : index
    %c0_200 = arith.constant 0 : index
    %283 = vector.load %arg7[%c0_199, %c0_200] : memref<80x512xbf16, #tpu.memory_space<vmem>>, vector<80x512xbf16>
    %cst_201 = arith.constant dense<0.000000e+00> : vector<8x512xf32>
    %284 = tpu.matmul %232, %283, %cst_201 {dimension_numbers = #tpu.dot_dimension_numbers<[1], [0], [0], [1], [0, 0, 1, 1], [], []>} : vector<8x80xbf16>, vector<80x512xbf16>, vector<8x512xf32> -> vector<8x512xf32>
    %285 = vector.broadcast %234 : vector<8x1xf32> to vector<8x512xf32>
    %286 = arith.addf %284, %285 : vector<8x512xf32>
    %cst_202 = arith.constant 0.000000e+00 : f32
    %287 = vector.broadcast %cst_202 : f32 to vector<8x512xf32>
    %288 = arith.maximumf %286, %287 : vector<8x512xf32>
    %c0_203 = arith.constant 0 : index
    %c0_204 = arith.constant 0 : index
    %289 = vector.load %arg5[%c0_203, %c0_204] : memref<8x512xf32, #tpu.memory_space<vmem>>, vector<8x512xf32>
    tpu.vector_store %arg5[%c0_203, %c0_204], %230 {strides = array<i32>} : memref<8x512xf32, #tpu.memory_space<vmem>>, vector<8x512xf32>,
    %c5_205 = arith.constant 5 : index
    %c0_206 = arith.constant 0 : index
    %c0_207 = arith.constant 0 : index
    %290 = vector.load %arg3[%c5_205, %c0_206, %c0_207] : memref<6x8x80xbf16, #tpu.memory_space<vmem>>, vector<1x8x80xbf16>
    %291 = vector.shape_cast %290 : vector<1x8x80xbf16> to vector<8x80xbf16>
    %c5_208 = arith.constant 5 : index
    %c0_209 = arith.constant 0 : index
    %c0_210 = arith.constant 0 : index
    %292 = vector.load %arg4[%c5_208, %c0_209, %c0_210] : memref<6x8x1xf32, #tpu.memory_space<vmem>>, vector<1x8x1xf32>
    %293 = vector.shape_cast %292 : vector<1x8x1xf32> to vector<8x1xf32>
    %c17_i32_211 = arith.constant 17 : i32
    %294 = tpu.dynamic_rotate %288 by %c17_i32_211 dim 1 : vector<8x512xf32>, i32 -> vector<8x512xf32>
    %c0_212 = arith.constant 0 : index
    %c0_213 = arith.constant 0 : index
    %295 = vector.load %arg2[%c0_212, %c0_213] : memref<9x512xf32, #tpu.memory_space<vmem>>, vector<1x512xf32>
    %296 = vector.broadcast %295 : vector<1x512xf32> to vector<8x512xf32>
    %297 = arith.mulf %294, %296 : vector<8x512xf32>
    %c16_i32_214 = arith.constant 16 : i32
    %298 = tpu.dynamic_rotate %288 by %c16_i32_214 dim 1 : vector<8x512xf32>, i32 -> vector<8x512xf32>
    %c1_215 = arith.constant 1 : index
    %c0_216 = arith.constant 0 : index
    %299 = vector.load %arg2[%c1_215, %c0_216] : memref<9x512xf32, #tpu.memory_space<vmem>>, vector<1x512xf32>
    %300 = vector.broadcast %299 : vector<1x512xf32> to vector<8x512xf32>
    %301 = arith.mulf %298, %300 : vector<8x512xf32>
    %302 = tpu.concatenate %297, %301 in 0 : vector<8x512xf32>, vector<8x512xf32> -> vector<16x512xf32>
    %303 = arith.truncf %302 : vector<16x512xf32> to vector<16x512xbf16>
    %c0_217 = arith.constant 0 : index
    %c0_218 = arith.constant 0 : index
    %304 = vector.load %arg7[%c0_217, %c0_218] : memref<80x512xbf16, #tpu.memory_space<vmem>>, vector<16x512xbf16>
    tpu.vector_store %arg7[%c0_217, %c0_218], %303 {strides = array<i32>} : memref<80x512xbf16, #tpu.memory_space<vmem>>, vector<16x512xbf16>,
    %c15_i32_219 = arith.constant 15 : i32
    %305 = tpu.dynamic_rotate %288 by %c15_i32_219 dim 1 : vector<8x512xf32>, i32 -> vector<8x512xf32>
    %c2_220 = arith.constant 2 : index
    %c0_221 = arith.constant 0 : index
    %306 = vector.load %arg2[%c2_220, %c0_221] : memref<9x512xf32, #tpu.memory_space<vmem>>, vector<1x512xf32>
    %307 = vector.broadcast %306 : vector<1x512xf32> to vector<8x512xf32>
    %308 = arith.mulf %305, %307 : vector<8x512xf32>
    %c1_i32_222 = arith.constant 1 : i32
    %309 = tpu.dynamic_rotate %288 by %c1_i32_222 dim 1 : vector<8x512xf32>, i32 -> vector<8x512xf32>
    %c3_223 = arith.constant 3 : index
    %c0_224 = arith.constant 0 : index
    %310 = vector.load %arg2[%c3_223, %c0_224] : memref<9x512xf32, #tpu.memory_space<vmem>>, vector<1x512xf32>
    %311 = vector.broadcast %310 : vector<1x512xf32> to vector<8x512xf32>
    %312 = arith.mulf %309, %311 : vector<8x512xf32>
    %313 = tpu.concatenate %308, %312 in 0 : vector<8x512xf32>, vector<8x512xf32> -> vector<16x512xf32>
    %314 = arith.truncf %313 : vector<16x512xf32> to vector<16x512xbf16>
    %c16_225 = arith.constant 16 : index
    %c0_226 = arith.constant 0 : index
    %315 = vector.load %arg7[%c16_225, %c0_226] : memref<80x512xbf16, #tpu.memory_space<vmem>>, vector<16x512xbf16>
    tpu.vector_store %arg7[%c16_225, %c0_226], %314 {strides = array<i32>} : memref<80x512xbf16, #tpu.memory_space<vmem>>, vector<16x512xbf16>,
    %c511_i32_227 = arith.constant 511 : i32
    %316 = tpu.dynamic_rotate %288 by %c511_i32_227 dim 1 : vector<8x512xf32>, i32 -> vector<8x512xf32>
    %c5_228 = arith.constant 5 : index
    %c0_229 = arith.constant 0 : index
    %317 = vector.load %arg2[%c5_228, %c0_229] : memref<9x512xf32, #tpu.memory_space<vmem>>, vector<1x512xf32>
    %318 = vector.broadcast %317 : vector<1x512xf32> to vector<8x512xf32>
    %319 = arith.mulf %316, %318 : vector<8x512xf32>
    %320 = tpu.concatenate %288, %319 in 0 : vector<8x512xf32>, vector<8x512xf32> -> vector<16x512xf32>
    %321 = arith.truncf %320 : vector<16x512xf32> to vector<16x512xbf16>
    %c32_230 = arith.constant 32 : index
    %c0_231 = arith.constant 0 : index
    %322 = vector.load %arg7[%c32_230, %c0_231] : memref<80x512xbf16, #tpu.memory_space<vmem>>, vector<16x512xbf16>
    tpu.vector_store %arg7[%c32_230, %c0_231], %321 {strides = array<i32>} : memref<80x512xbf16, #tpu.memory_space<vmem>>, vector<16x512xbf16>,
    %c497_i32_232 = arith.constant 497 : i32
    %323 = tpu.dynamic_rotate %288 by %c497_i32_232 dim 1 : vector<8x512xf32>, i32 -> vector<8x512xf32>
    %c6_233 = arith.constant 6 : index
    %c0_234 = arith.constant 0 : index
    %324 = vector.load %arg2[%c6_233, %c0_234] : memref<9x512xf32, #tpu.memory_space<vmem>>, vector<1x512xf32>
    %325 = vector.broadcast %324 : vector<1x512xf32> to vector<8x512xf32>
    %326 = arith.mulf %323, %325 : vector<8x512xf32>
    %c496_i32_235 = arith.constant 496 : i32
    %327 = tpu.dynamic_rotate %288 by %c496_i32_235 dim 1 : vector<8x512xf32>, i32 -> vector<8x512xf32>
    %c7_236 = arith.constant 7 : index
    %c0_237 = arith.constant 0 : index
    %328 = vector.load %arg2[%c7_236, %c0_237] : memref<9x512xf32, #tpu.memory_space<vmem>>, vector<1x512xf32>
    %329 = vector.broadcast %328 : vector<1x512xf32> to vector<8x512xf32>
    %330 = arith.mulf %327, %329 : vector<8x512xf32>
    %331 = tpu.concatenate %326, %330 in 0 : vector<8x512xf32>, vector<8x512xf32> -> vector<16x512xf32>
    %332 = arith.truncf %331 : vector<16x512xf32> to vector<16x512xbf16>
    %c48_238 = arith.constant 48 : index
    %c0_239 = arith.constant 0 : index
    %333 = vector.load %arg7[%c48_238, %c0_239] : memref<80x512xbf16, #tpu.memory_space<vmem>>, vector<16x512xbf16>
    tpu.vector_store %arg7[%c48_238, %c0_239], %332 {strides = array<i32>} : memref<80x512xbf16, #tpu.memory_space<vmem>>, vector<16x512xbf16>,
    %c495_i32_240 = arith.constant 495 : i32
    %334 = tpu.dynamic_rotate %288 by %c495_i32_240 dim 1 : vector<8x512xf32>, i32 -> vector<8x512xf32>
    %c8_241 = arith.constant 8 : index
    %c0_242 = arith.constant 0 : index
    %335 = vector.load %arg2[%c8_241, %c0_242] : memref<9x512xf32, #tpu.memory_space<vmem>>, vector<1x512xf32>
    %336 = vector.broadcast %335 : vector<1x512xf32> to vector<8x512xf32>
    %337 = arith.mulf %334, %336 : vector<8x512xf32>
    %cst_243 = arith.constant 0.000000e+00 : f32
    %338 = vector.broadcast %cst_243 : f32 to vector<8x512xf32>
    %339 = tpu.concatenate %337, %338 in 0 : vector<8x512xf32>, vector<8x512xf32> -> vector<16x512xf32>
    %340 = arith.truncf %339 : vector<16x512xf32> to vector<16x512xbf16>
    %c64_244 = arith.constant 64 : index
    %c0_245 = arith.constant 0 : index
    %341 = vector.load %arg7[%c64_244, %c0_245] : memref<80x512xbf16, #tpu.memory_space<vmem>>, vector<16x512xbf16>
    tpu.vector_store %arg7[%c64_244, %c0_245], %340 {strides = array<i32>} : memref<80x512xbf16, #tpu.memory_space<vmem>>, vector<16x512xbf16>,
    %c0_246 = arith.constant 0 : index
    %c0_247 = arith.constant 0 : index
    %342 = vector.load %arg7[%c0_246, %c0_247] : memref<80x512xbf16, #tpu.memory_space<vmem>>, vector<80x512xbf16>
    %cst_248 = arith.constant dense<0.000000e+00> : vector<8x512xf32>
    %343 = tpu.matmul %291, %342, %cst_248 {dimension_numbers = #tpu.dot_dimension_numbers<[1], [0], [0], [1], [0, 0, 1, 1], [], []>} : vector<8x80xbf16>, vector<80x512xbf16>, vector<8x512xf32> -> vector<8x512xf32>
    %344 = vector.broadcast %293 : vector<8x1xf32> to vector<8x512xf32>
    %345 = arith.addf %343, %344 : vector<8x512xf32>
    %c0_249 = arith.constant 0 : index
    %c0_250 = arith.constant 0 : index
    %346 = vector.load %arg6[%c0_249, %c0_250] : memref<8x512xf32, #tpu.memory_space<vmem>>, vector<8x512xf32>
    tpu.vector_store %arg6[%c0_249, %c0_250], %345 {strides = array<i32>} : memref<8x512xf32, #tpu.memory_space<vmem>>, vector<8x512xf32>,
    return
  }
  func.func @transform_0(%arg0: i32) -> (i32, i32) {
    %c0_i32 = arith.constant 0 : i32
    %c0_i32_0 = arith.constant 0 : i32
    return %c0_i32, %arg0 : i32, i32
  }
  func.func @transform_1(%arg0: i32) -> (i32, i32) {
    %c0_i32 = arith.constant 0 : i32
    %c0_i32_0 = arith.constant 0 : i32
    %c0_i32_1 = arith.constant 0 : i32
    return %c0_i32, %c0_i32_0 : i32, i32
  }
  func.func @transform_2(%arg0: i32) -> (i32, i32, i32) {
    %c0_i32 = arith.constant 0 : i32
    %c0_i32_0 = arith.constant 0 : i32
    %c0_i32_1 = arith.constant 0 : i32
    %c0_i32_2 = arith.constant 0 : i32
    return %c0_i32, %c0_i32_0, %c0_i32_1 : i32, i32, i32
  }
  func.func @transform_3(%arg0: i32) -> (i32, i32, i32) {
    %c0_i32 = arith.constant 0 : i32
    %c0_i32_0 = arith.constant 0 : i32
    %c0_i32_1 = arith.constant 0 : i32
    %c0_i32_2 = arith.constant 0 : i32
    return %c0_i32, %c0_i32_0, %c0_i32_1 : i32, i32, i32
  }
  func.func @transform_4(%arg0: i32) -> (i32, i32) {
    %c0_i32 = arith.constant 0 : i32
    %c0_i32_0 = arith.constant 0 : i32
    return %c0_i32, %arg0 : i32, i32
  }
  func.func @transform_5(%arg0: i32) -> (i32, i32) {
    %c0_i32 = arith.constant 0 : i32
    %c0_i32_0 = arith.constant 0 : i32
    return %c0_i32, %arg0 : i32, i32
  }
}

</mosaic_0001>

<llo_original>
// kernel: _lp_forward.1
$region0: #{_lp_forward.1}
  #allocation0 [shape = 'u32[]', space=smem, size = 0x4, offset = 0x4, fixed_abs, tag = 'smem constant byte address 0x4 - core index']
  #allocation1 [shape = 'u32[144,128]{1,0:T(1,128)}', space=vmem, size = 0x12000, scoped, tag = 'internal scratch']
  #allocation2 [shape = 'bf16[80,512]{1,0:T(8,128)(2,1)}', space=vmem, size = 0x14000, scoped, tag = 'scratch operand']
  %s0 = inlined_call_operand.vmem [shape: f32[8,512], index: 0, kind: input, shape index: {}]
  %s1 = inlined_call_operand.vmem [shape: f32[9,512], index: 1, kind: input, shape index: {}]
  %s2 = inlined_call_operand.vmem [shape: bf16[6,8,80], index: 2, kind: input, shape index: {}]
  %s3 = inlined_call_operand.vmem [shape: f32[6,8,1], index: 3, kind: input, shape index: {}]
  %s4 = inlined_call_operand.vmem [shape: f32[8,512], index: 4, kind: output, shape index: {0}]
  %s5 = inlined_call_operand.vmem [shape: f32[8,512], index: 5, kind: output, shape index: {1}]
  %6 = xla_tuple %s4, %s5
  %s7 = sld [smem:[#allocation0]]
  $region34: #{_lp_forward.1} parent=0
    _
  %s9 = ssub.s32 1, %s7
  %s10 = scalar_select 0, %s9, %s7
  // Predicated region
  $region2: #{_lp_forward.1} parent=0 // pred_check
    _
  $region3: #{_lp_forward.1} parent=0 // pred_check_branch
    %12 = sbr.rel (0) target = $region5
  $region4: #{_lp_forward.1} parent=0 // pred_region
    _
  $region5: #{_lp_forward.1} parent=0 // pred_fallthru
    _
  // Predicated region
  $region6: #{_lp_forward.1} parent=0 // pred_check
    _
  $region7: #{_lp_forward.1} parent=0 // pred_check_branch
    %14 = sbr.rel (0) target = $region9
  $region8: #{_lp_forward.1} parent=0 // pred_region
    _
  $region9: #{_lp_forward.1} parent=0 // pred_fallthru
    _
  // Predicated region
  $region10: #{_lp_forward.1} parent=0 // pred_check
    _
  $region11: #{_lp_forward.1} parent=0 // pred_check_branch
    %16 = sbr.rel (0) target = $region13
  $region12: #{_lp_forward.1} parent=0 // pred_region
    _
  $region13: #{_lp_forward.1} parent=0 // pred_fallthru
    _
  // Predicated region
  $region14: #{_lp_forward.1} parent=0 // pred_check
    _
  $region15: #{_lp_forward.1} parent=0 // pred_check_branch
    %18 = sbr.rel (0) target = $region17
  $region16: #{_lp_forward.1} parent=0 // pred_region
    _
  $region17: #{_lp_forward.1} parent=0 // pred_fallthru
    _
  %v20 = vld [vmem:[%s0] sm:$0xff]
  %v21 = vld [vmem:[%s0 + $0x8] sm:$0xff]
  %v22 = vld [vmem:[%s0 + $0x10] sm:$0xff]
  %v23 = vld [vmem:[%s0 + $0x18] sm:$0xff]
  %v24 = vld [vmem:[%s2] sm:$0xf]
  %v25 = vld [vmem:[%s3] sm:$0xff]
  %26 = vrot.lane.b32.xlu0 %v20, 17
  %v27 = vpop.permute.xlu0 %26
  %28 = vrot.lane.b32.xlu0 %v21, 17
  %v29 = vpop.permute.xlu0 %28
  %30 = vrot.lane.b32.xlu0 %v22, 17
  %v31 = vpop.permute.xlu0 %30
  %32 = vrot.lane.b32.xlu0 %v23, 17
  %v33 = vpop.permute.xlu0 %32
  %v34 = vlaneseq
  %v35 = vand.u32 %v34, 127
  %vm36 = vcmp.lt.s32.totalorder %v35, 17
  %v37 = vsel %vm36, %v31, %v33
  %v38 = vsel %vm36, %v29, %v31
  %v39 = vsel %vm36, %v27, %v29
  %v40 = vsel %vm36, %v33, %v27
  %v41 = vld [vmem:[%s1] ss:$8 sm:$0xf]
  %v43 = vlaneseq
  %v44 = vshrl.u32 %v43, 7
  %v45 = vsub.s32 0, %v44
  %v46 = vrot.slane %v41, %v45
  %v47 = vlaneseq
  %v48 = vshrl.u32 %v47, 7
  %v49 = vsub.s32 1, %v48
  %v50 = vrot.slane %v41, %v49
  %v51 = vlaneseq
  %v52 = vshrl.u32 %v51, 7
  %v53 = vsub.s32 2, %v52
  %v54 = vrot.slane %v41, %v53
  %v55 = vlaneseq
  %v56 = vshrl.u32 %v55, 7
  %v57 = vsub.s32 3, %v56
  %v58 = vrot.slane %v41, %v57
  %v63 = vmul.f32 %v40, %v46
  %v64 = vmul.f32 %v39, %v50
  %v65 = vmul.f32 %v38, %v54
  %v66 = vmul.f32 %v37, %v58
  %67 = vrot.lane.b32.xlu0 %v20, 16
  %v68 = vpop.permute.xlu0 %67
  %69 = vrot.lane.b32.xlu0 %v21, 16
  %v70 = vpop.permute.xlu0 %69
  %71 = vrot.lane.b32.xlu0 %v22, 16
  %v72 = vpop.permute.xlu0 %71
  %73 = vrot.lane.b32.xlu0 %v23, 16
  %v74 = vpop.permute.xlu0 %73
  %vm75 = vcmp.lt.s32.totalorder %v35, 16
  %v76 = vsel %vm75, %v72, %v74
  %v77 = vsel %vm75, %v70, %v72
  %v78 = vsel %vm75, %v68, %v70
  %v79 = vsel %vm75, %v74, %v68
  %s80 = scalar_lea.vmem %s1, 1
  %v81 = vld [vmem:[%s80] ss:$8 sm:$0xf]
  %v83 = vlaneseq
  %v84 = vshrl.u32 %v83, 7
  %v85 = vsub.s32 0, %v84
  %v86 = vrot.slane %v81, %v85
  %v87 = vlaneseq
  %v88 = vshrl.u32 %v87, 7
  %v89 = vsub.s32 1, %v88
  %v90 = vrot.slane %v81, %v89
  %v91 = vlaneseq
  %v92 = vshrl.u32 %v91, 7
  %v93 = vsub.s32 2, %v92
  %v94 = vrot.slane %v81, %v93
  %v95 = vlaneseq
  %v96 = vshrl.u32 %v95, 7
  %v97 = vsub.s32 3, %v96
  %v98 = vrot.slane %v81, %v97
  %v103 = vmul.f32 %v79, %v86
  %v104 = vmul.f32 %v78, %v90
  %v105 = vmul.f32 %v77, %v94
  %v106 = vmul.f32 %v76, %v98
  %v107 = vpack.c.bf16 %v103, %v63
  %v108 = vpack.c.bf16 %v104, %v64
  %v109 = vpack.c.bf16 %v105, %v65
  %v110 = vpack.c.bf16 %v106, %v66
  %v115 = vunpack.c.l.b16 %v107
  %v116 = vunpack.c.l.b16 %v108
  %v117 = vunpack.c.l.b16 %v109
  %v118 = vunpack.c.l.b16 %v110
  %v119 = vunpack.c.h.b16 %v107
  %v120 = vunpack.c.h.b16 %v108
  %v121 = vunpack.c.h.b16 %v109
  %v122 = vunpack.c.h.b16 %v110
  %v123 = vpack.c.b16 %v116, %v115
  %v124 = vpack.c.b16 %v118, %v117
  %v125 = vpack.c.b16 %v120, %v119
  %v126 = vpack.c.b16 %v122, %v121
  %131 = vst [vmem:[#allocation2] sm:$0xff] %v123
  %132 = vst [vmem:[#allocation2 + $0x8] sm:$0xff] %v124
  %133 = vst [vmem:[#allocation2 + $0x10] sm:$0xff] %v125
  %134 = vst [vmem:[#allocation2 + $0x18] sm:$0xff] %v126
  %135 = vrot.lane.b32.xlu0 %v20, 15
  %v136 = vpop.permute.xlu0 %135
  %137 = vrot.lane.b32.xlu0 %v21, 15
  %v138 = vpop.permute.xlu0 %137
  %139 = vrot.lane.b32.xlu0 %v22, 15
  %v140 = vpop.permute.xlu0 %139
  %141 = vrot.lane.b32.xlu0 %v23, 15
  %v142 = vpop.permute.xlu0 %141
  %vm143 = vcmp.lt.s32.totalorder %v35, 15
  %v144 = vsel %vm143, %v140, %v142
  %v145 = vsel %vm143, %v138, %v140
  %v146 = vsel %vm143, %v136, %v138
  %v147 = vsel %vm143, %v142, %v136
  %s148 = scalar_lea.vmem %s1, 2
  %v149 = vld [vmem:[%s148] ss:$8 sm:$0xf]
  %v151 = vlaneseq
  %v152 = vshrl.u32 %v151, 7
  %v153 = vsub.s32 0, %v152
  %v154 = vrot.slane %v149, %v153
  %v155 = vlaneseq
  %v156 = vshrl.u32 %v155, 7
  %v157 = vsub.s32 1, %v156
  %v158 = vrot.slane %v149, %v157
  %v159 = vlaneseq
  %v160 = vshrl.u32 %v159, 7
  %v161 = vsub.s32 2, %v160
  %v162 = vrot.slane %v149, %v161
  %v163 = vlaneseq
  %v164 = vshrl.u32 %v163, 7
  %v165 = vsub.s32 3, %v164
  %v166 = vrot.slane %v149, %v165
  %v171 = vmul.f32 %v147, %v154
  %v172 = vmul.f32 %v146, %v158
  %v173 = vmul.f32 %v145, %v162
  %v174 = vmul.f32 %v144, %v166
  %175 = vrot.lane.b32.xlu0 %v20, 1
  %v176 = vpop.permute.xlu0 %175
  %177 = vrot.lane.b32.xlu0 %v21, 1
  %v178 = vpop.permute.xlu0 %177
  %179 = vrot.lane.b32.xlu0 %v22, 1
  %v180 = vpop.permute.xlu0 %179
  %181 = vrot.lane.b32.xlu0 %v23, 1
  %v182 = vpop.permute.xlu0 %181
  %vm183 = vcmp.lt.s32.totalorder %v35, 1
  %v184 = vsel %vm183, %v180, %v182
  %v185 = vsel %vm183, %v178, %v180
  %v186 = vsel %vm183, %v176, %v178
  %v187 = vsel %vm183, %v182, %v176
  %s188 = scalar_lea.vmem %s1, 3
  %v189 = vld [vmem:[%s188] ss:$8 sm:$0xf]
  %v191 = vlaneseq
  %v192 = vshrl.u32 %v191, 7
  %v193 = vsub.s32 0, %v192
  %v194 = vrot.slane %v189, %v193
  %v195 = vlaneseq
  %v196 = vshrl.u32 %v195, 7
  %v197 = vsub.s32 1, %v196
  %v198 = vrot.slane %v189, %v197
  %v199 = vlaneseq
  %v200 = vshrl.u32 %v199, 7
  %v201 = vsub.s32 2, %v200
  %v202 = vrot.slane %v189, %v201
  %v203 = vlaneseq
  %v204 = vshrl.u32 %v203, 7
  %v205 = vsub.s32 3, %v204
  %v206 = vrot.slane %v189, %v205
  %v211 = vmul.f32 %v187, %v194
  %v212 = vmul.f32 %v186, %v198
  %v213 = vmul.f32 %v185, %v202
  %v214 = vmul.f32 %v184, %v206
  %v215 = vpack.c.bf16 %v211, %v171
  %v216 = vpack.c.bf16 %v212, %v172
  %v217 = vpack.c.bf16 %v213, %v173
  %v218 = vpack.c.bf16 %v214, %v174
  %v223 = vunpack.c.l.b16 %v215
  %v224 = vunpack.c.l.b16 %v216
  %v225 = vunpack.c.l.b16 %v217
  %v226 = vunpack.c.l.b16 %v218
  %v227 = vunpack.c.h.b16 %v215
  %v228 = vunpack.c.h.b16 %v216
  %v229 = vunpack.c.h.b16 %v217
  %v230 = vunpack.c.h.b16 %v218
  %v231 = vpack.c.b16 %v224, %v223
  %v232 = vpack.c.b16 %v226, %v225
  %v233 = vpack.c.b16 %v228, %v227
  %v234 = vpack.c.b16 %v230, %v229
  %239 = vst [vmem:[#allocation2 + $0x20] sm:$0xff] %v231
  %240 = vst [vmem:[#allocation2 + $0x28] sm:$0xff] %v232
  %241 = vst [vmem:[#allocation2 + $0x30] sm:$0xff] %v233
  %242 = vst [vmem:[#allocation2 + $0x38] sm:$0xff] %v234
  %243 = vrot.lane.b32.xlu0 %v20, 127
  %v244 = vpop.permute.xlu0 %243
  %245 = vrot.lane.b32.xlu0 %v21, 127
  %v246 = vpop.permute.xlu0 %245
  %247 = vrot.lane.b32.xlu0 %v22, 127
  %v248 = vpop.permute.xlu0 %247
  %249 = vrot.lane.b32.xlu0 %v23, 127
  %v250 = vpop.permute.xlu0 %249
  %vm251 = vcmp.lt.s32.totalorder %v35, 127
  %v252 = vsel %vm251, %v248, %v250
  %v253 = vsel %vm251, %v246, %v248
  %v254 = vsel %vm251, %v244, %v246
  %v255 = vsel %vm251, %v250, %v244
  %s256 = scalar_lea.vmem %s1, 5
  %v257 = vld [vmem:[%s256] ss:$8 sm:$0xf]
  %v259 = vlaneseq
  %v260 = vshrl.u32 %v259, 7
  %v261 = vsub.s32 0, %v260
  %v262 = vrot.slane %v257, %v261
  %v263 = vlaneseq
  %v264 = vshrl.u32 %v263, 7
  %v265 = vsub.s32 1, %v264
  %v266 = vrot.slane %v257, %v265
  %v267 = vlaneseq
  %v268 = vshrl.u32 %v267, 7
  %v269 = vsub.s32 2, %v268
  %v270 = vrot.slane %v257, %v269
  %v271 = vlaneseq
  %v272 = vshrl.u32 %v271, 7
  %v273 = vsub.s32 3, %v272
  %v274 = vrot.slane %v257, %v273
  %v279 = vmul.f32 %v254, %v262
  %v280 = vmul.f32 %v253, %v266
  %v281 = vmul.f32 %v252, %v270
  %v282 = vmul.f32 %v255, %v274
  %v283 = vpack.c.bf16 %v279, %v20
  %v284 = vpack.c.bf16 %v280, %v21
  %v285 = vpack.c.bf16 %v281, %v22
  %v286 = vpack.c.bf16 %v282, %v23
  %v291 = vunpack.c.l.b16 %v283
  %v292 = vunpack.c.l.b16 %v284
  %v293 = vunpack.c.l.b16 %v285
  %v294 = vunpack.c.l.b16 %v286
  %v295 = vunpack.c.h.b16 %v283
  %v296 = vunpack.c.h.b16 %v284
  %v297 = vunpack.c.h.b16 %v285
  %v298 = vunpack.c.h.b16 %v286
  %v299 = vpack.c.b16 %v292, %v291
  %v300 = vpack.c.b16 %v294, %v293
  %v301 = vpack.c.b16 %v296, %v295
  %v302 = vpack.c.b16 %v298, %v297
  %307 = vst [vmem:[#allocation2 + $0x40] sm:$0xff] %v299
  %308 = vst [vmem:[#allocation2 + $0x48] sm:$0xff] %v300
  %309 = vst [vmem:[#allocation2 + $0x50] sm:$0xff] %v301
  %310 = vst [vmem:[#allocation2 + $0x58] sm:$0xff] %v302
  %311 = vrot.lane.b32.xlu0 %v20, 113
  %v312 = vpop.permute.xlu0 %311
  %313 = vrot.lane.b32.xlu0 %v21, 113
  %v314 = vpop.permute.xlu0 %313
  %315 = vrot.lane.b32.xlu0 %v22, 113
  %v316 = vpop.permute.xlu0 %315
  %317 = vrot.lane.b32.xlu0 %v23, 113
  %v318 = vpop.permute.xlu0 %317
  %vm319 = vcmp.lt.s32.totalorder %v35, 113
  %v320 = vsel %vm319, %v316, %v318
  %v321 = vsel %vm319, %v314, %v316
  %v322 = vsel %vm319, %v312, %v314
  %v323 = vsel %vm319, %v318, %v312
  %s324 = scalar_lea.vmem %s1, 6
  %v325 = vld [vmem:[%s324] ss:$8 sm:$0xf]
  %v327 = vlaneseq
  %v328 = vshrl.u32 %v327, 7
  %v329 = vsub.s32 0, %v328
  %v330 = vrot.slane %v325, %v329
  %v331 = vlaneseq
  %v332 = vshrl.u32 %v331, 7
  %v333 = vsub.s32 1, %v332
  %v334 = vrot.slane %v325, %v333
  %v335 = vlaneseq
  %v336 = vshrl.u32 %v335, 7
  %v337 = vsub.s32 2, %v336
  %v338 = vrot.slane %v325, %v337
  %v339 = vlaneseq
  %v340 = vshrl.u32 %v339, 7
  %v341 = vsub.s32 3, %v340
  %v342 = vrot.slane %v325, %v341
  %v347 = vmul.f32 %v322, %v330
  %v348 = vmul.f32 %v321, %v334
  %v349 = vmul.f32 %v320, %v338
  %v350 = vmul.f32 %v323, %v342
  %351 = vrot.lane.b32.xlu0 %v20, 112
  %v352 = vpop.permute.xlu0 %351
  %353 = vrot.lane.b32.xlu0 %v21, 112
  %v354 = vpop.permute.xlu0 %353
  %355 = vrot.lane.b32.xlu0 %v22, 112
  %v356 = vpop.permute.xlu0 %355
  %357 = vrot.lane.b32.xlu0 %v23, 112
  %v358 = vpop.permute.xlu0 %357
  %vm359 = vcmp.lt.s32.totalorder %v35, 112
  %v360 = vsel %vm359, %v356, %v358
  %v361 = vsel %vm359, %v354, %v356
  %v362 = vsel %vm359, %v352, %v354
  %v363 = vsel %vm359, %v358, %v352
  %s364 = scalar_lea.vmem %s1, 7
  %v365 = vld [vmem:[%s364] ss:$8 sm:$0xf]
  %v367 = vlaneseq
  %v368 = vshrl.u32 %v367, 7
  %v369 = vsub.s32 0, %v368
  %v370 = vrot.slane %v365, %v369
  %v371 = vlaneseq
  %v372 = vshrl.u32 %v371, 7
  %v373 = vsub.s32 1, %v372
  %v374 = vrot.slane %v365, %v373
  %v375 = vlaneseq
  %v376 = vshrl.u32 %v375, 7
  %v377 = vsub.s32 2, %v376
  %v378 = vrot.slane %v365, %v377
  %v379 = vlaneseq
  %v380 = vshrl.u32 %v379, 7
  %v381 = vsub.s32 3, %v380
  %v382 = vrot.slane %v365, %v381
  %v387 = vmul.f32 %v362, %v370
  %v388 = vmul.f32 %v361, %v374
  %v389 = vmul.f32 %v360, %v378
  %v390 = vmul.f32 %v363, %v382
  %v391 = vpack.c.bf16 %v387, %v347
  %v392 = vpack.c.bf16 %v388, %v348
  %v393 = vpack.c.bf16 %v389, %v349
  %v394 = vpack.c.bf16 %v390, %v350
  %v399 = vunpack.c.l.b16 %v391
  %v400 = vunpack.c.l.b16 %v392
  %v401 = vunpack.c.l.b16 %v393
  %v402 = vunpack.c.l.b16 %v394
  %v403 = vunpack.c.h.b16 %v391
  %v404 = vunpack.c.h.b16 %v392
  %v405 = vunpack.c.h.b16 %v393
  %v406 = vunpack.c.h.b16 %v394
  %v407 = vpack.c.b16 %v400, %v399
  %v408 = vpack.c.b16 %v402, %v401
  %v409 = vpack.c.b16 %v404, %v403
  %v410 = vpack.c.b16 %v406, %v405
  %415 = vst [vmem:[#allocation2 + $0x60] sm:$0xff] %v407
  %416 = vst [vmem:[#allocation2 + $0x68] sm:$0xff] %v408
  %417 = vst [vmem:[#allocation2 + $0x70] sm:$0xff] %v409
  %418 = vst [vmem:[#allocation2 + $0x78] sm:$0xff] %v410
  %419 = vrot.lane.b32.xlu0 %v20, 111
  %v420 = vpop.permute.xlu0 %419
  %421 = vrot.lane.b32.xlu0 %v21, 111
  %v422 = vpop.permute.xlu0 %421
  %423 = vrot.lane.b32.xlu0 %v22, 111
  %v424 = vpop.permute.xlu0 %423
  %425 = vrot.lane.b32.xlu0 %v23, 111
  %v426 = vpop.permute.xlu0 %425
  %vm427 = vcmp.lt.s32.totalorder %v35, 111
  %v428 = vsel %vm427, %v424, %v426
  %v429 = vsel %vm427, %v422, %v424
  %v430 = vsel %vm427, %v420, %v422
  %v431 = vsel %vm427, %v426, %v420
  %s432 = scalar_lea.vmem %s1, 32
  %v433 = vld [vmem:[%s432] ss:$8 sm:$0xf]
  %v435 = vlaneseq
  %v436 = vshrl.u32 %v435, 7
  %v437 = vsub.s32 0, %v436
  %v438 = vrot.slane %v433, %v437
  %v439 = vlaneseq
  %v440 = vshrl.u32 %v439, 7
  %v441 = vsub.s32 1, %v440
  %v442 = vrot.slane %v433, %v441
  %v443 = vlaneseq
  %v444 = vshrl.u32 %v443, 7
  %v445 = vsub.s32 2, %v444
  %v446 = vrot.slane %v433, %v445
  %v447 = vlaneseq
  %v448 = vshrl.u32 %v447, 7
  %v449 = vsub.s32 3, %v448
  %v450 = vrot.slane %v433, %v449
  %v455 = vmul.f32 %v430, %v438
  %v456 = vmul.f32 %v429, %v442
  %v457 = vmul.f32 %v428, %v446
  %v458 = vmul.f32 %v431, %v450
  %v459 = vpack.c.bf16 0.0, %v455
  %v460 = vpack.c.bf16 0.0, %v456
  %v461 = vpack.c.bf16 0.0, %v457
  %v462 = vpack.c.bf16 0.0, %v458
  %v467 = vunpack.c.l.b16 %v459
  %v468 = vunpack.c.l.b16 %v460
  %v469 = vunpack.c.l.b16 %v461
  %v470 = vunpack.c.l.b16 %v462
  %v471 = vunpack.c.h.b16 %v459
  %v472 = vunpack.c.h.b16 %v460
  %v473 = vunpack.c.h.b16 %v461
  %v474 = vunpack.c.h.b16 %v462
  %v475 = vpack.c.b16 %v468, %v467
  %v476 = vpack.c.b16 %v470, %v469
  %v477 = vpack.c.b16 %v472, %v471
  %v478 = vpack.c.b16 %v474, %v473
  %483 = vst [vmem:[#allocation2 + $0x80] sm:$0xff] %v475
  %484 = vst [vmem:[#allocation2 + $0x88] sm:$0xff] %v476
  %485 = vst [vmem:[#allocation2 + $0x90] sm:$0xff] %v477
  %486 = vst [vmem:[#allocation2 + $0x98] sm:$0xff] %v478
  %v487 = vld [vmem:[#allocation2] sm:$0xff]
  %v488 = vld [vmem:[#allocation2 + $0x8] sm:$0xff]
  %v489 = vld [vmem:[#allocation2 + $0x10] sm:$0xff]
  %v490 = vld [vmem:[#allocation2 + $0x18] sm:$0xff]
  %v491 = vld [vmem:[#allocation2 + $0x20] sm:$0xff]
  %v492 = vld [vmem:[#allocation2 + $0x28] sm:$0xff]
  %v493 = vld [vmem:[#allocation2 + $0x30] sm:$0xff]
  %v494 = vld [vmem:[#allocation2 + $0x38] sm:$0xff]
  %v495 = vld [vmem:[#allocation2 + $0x40] sm:$0xff]
  %v496 = vld [vmem:[#allocation2 + $0x48] sm:$0xff]
  %v497 = vld [vmem:[#allocation2 + $0x50] sm:$0xff]
  %v498 = vld [vmem:[#allocation2 + $0x58] sm:$0xff]
  %v499 = vld [vmem:[#allocation2 + $0x60] sm:$0xff]
  %v500 = vld [vmem:[#allocation2 + $0x68] sm:$0xff]
  %v501 = vld [vmem:[#allocation2 + $0x70] sm:$0xff]
  %v502 = vld [vmem:[#allocation2 + $0x78] sm:$0xff]
  %v503 = vld [vmem:[#allocation2 + $0x80] sm:$0xff]
  %v504 = vld [vmem:[#allocation2 + $0x88] sm:$0xff]
  %v505 = vld [vmem:[#allocation2 + $0x90] sm:$0xff]
  %v506 = vld [vmem:[#allocation2 + $0x98] sm:$0xff]
  %508 = vset.pattern.permute.xlu0 0
  %509 = vperm.xlu0 %508, %v25
  %v510 = vpop.permute.xlu0 %509
  %v532 = vunpack.c.l.b16 %v487
  %v533 = vunpack.c.h.b16 %v487
  %v534 = vunpack.c.l.b16 %v488
  %v535 = vunpack.c.h.b16 %v488
  %v536 = vunpack.c.l.b16 %v489
  %v537 = vunpack.c.h.b16 %v489
  %v538 = vunpack.c.l.b16 %v490
  %v539 = vunpack.c.h.b16 %v490
  %v540 = vunpack.c.l.b16 %v491
  %v541 = vunpack.c.h.b16 %v491
  %v542 = vunpack.c.l.b16 %v492
  %v543 = vunpack.c.h.b16 %v492
  %v544 = vunpack.c.l.b16 %v493
  %v545 = vunpack.c.h.b16 %v493
  %v546 = vunpack.c.l.b16 %v494
  %v547 = vunpack.c.h.b16 %v494
  %v548 = vunpack.c.l.b16 %v495
  %v549 = vunpack.c.h.b16 %v495
  %v550 = vunpack.c.l.b16 %v496
  %v551 = vunpack.c.h.b16 %v496
  %v552 = vunpack.c.l.b16 %v497
  %v553 = vunpack.c.h.b16 %v497
  %v554 = vunpack.c.l.b16 %v498
  %v555 = vunpack.c.h.b16 %v498
  %v556 = vunpack.c.l.b16 %v499
  %v557 = vunpack.c.h.b16 %v499
  %v558 = vunpack.c.l.b16 %v500
  %v559 = vunpack.c.h.b16 %v500
  %v560 = vunpack.c.l.b16 %v501
  %v561 = vunpack.c.h.b16 %v501
  %v562 = vunpack.c.l.b16 %v502
  %v563 = vunpack.c.h.b16 %v502
  %v564 = vunpack.c.l.b16 %v503
  %v565 = vunpack.c.h.b16 %v503
  %v566 = vunpack.c.l.b16 %v504
  %v567 = vunpack.c.h.b16 %v504
  %v568 = vunpack.c.l.b16 %v505
  %v569 = vunpack.c.h.b16 %v505
  %v570 = vunpack.c.l.b16 %v506
  %v571 = vunpack.c.h.b16 %v506
  %v572 = vpack.c.b16 %v536, %v532
  %v573 = vpack.c.b16 %v537, %v533
  %v574 = vpack.c.b16 %v538, %v534
  %v575 = vpack.c.b16 %v539, %v535
  %v576 = vpack.c.b16 %v544, %v540
  %v577 = vpack.c.b16 %v545, %v541
  %v578 = vpack.c.b16 %v546, %v542
  %v579 = vpack.c.b16 %v547, %v543
  %v580 = vpack.c.b16 %v552, %v548
  %v581 = vpack.c.b16 %v553, %v549
  %v582 = vpack.c.b16 %v554, %v550
  %v583 = vpack.c.b16 %v555, %v551
  %v584 = vpack.c.b16 %v560, %v556
  %v585 = vpack.c.b16 %v561, %v557
  %v586 = vpack.c.b16 %v562, %v558
  %v587 = vpack.c.b16 %v563, %v559
  %v588 = vpack.c.b16 %v568, %v564
  %v589 = vpack.c.b16 %v569, %v565
  %v590 = vpack.c.b16 %v570, %v566
  %v591 = vpack.c.b16 %v571, %v567
  %vm612 = vcmask 654336
  %v614 = vsel %vm612, %v24, 0
  %616 = vmatprep.subr.bf16.mxu0 0
  %617 = vmatpush1.bf16.msra.mxu0 0
  %618 = vmatprep.subr.bf16.mxu0 0
  %619 = vmatpush1.bf16.msra.mxu0 0
  %620 = vmatprep.subr.bf16.mxu0 0
  %621 = vmatpush1.bf16.msra.mxu0 0
  %622 = vmatprep.subr.bf16.mxu0 %v589
  %623 = vmatpush1.bf16.msra.mxu0 %v588
  %624 = vmatprep.subr.bf16.mxu0 %v585
  %625 = vmatpush1.bf16.msra.mxu0 %v584
  %626 = vmatprep.subr.bf16.mxu0 %v581
  %627 = vmatpush1.bf16.msra.mxu0 %v580
  %628 = vmatprep.subr.bf16.mxu0 %v577
  %629 = vmatpush1.bf16.msra.mxu0 %v576
  %630 = vmatprep.subr.bf16.mxu0 %v573
  %631 = vmatpush1.bf16.msra.mxu0 %v572
  %632 = vmatprep.subr.bf16.mxu0 0
  %633 = vmatpush2.bf16.msra.mxu0 0
  %634 = vmatprep.subr.bf16.mxu0 0
  %635 = vmatpush2.bf16.msra.mxu0 0
  %636 = vmatprep.subr.bf16.mxu0 0
  %637 = vmatpush2.bf16.msra.mxu0 0
  %638 = vmatprep.subr.bf16.mxu0 0
  %639 = vmatpush2.bf16.msra.mxu0 0
  %640 = vmatprep.subr.bf16.mxu0 0
  %641 = vmatpush2.bf16.msra.mxu0 0
  %642 = vmatprep.subr.bf16.mxu0 0
  %643 = vmatpush2.bf16.msra.mxu0 0
  %644 = vmatprep.subr.bf16.mxu0 0
  %645 = vmatpush2.bf16.msra.mxu0 0
  %646 = vmatprep.subr.bf16.mxu0 0
  %647 = vmatpush2.bf16.msra.mxu0 0
  %648 = vmatprep.mubr.bf16.mxu0 0
  %649 = vmatmul.mubr.bf16.gmra.mxu0 %v614
  %v650 = vpop.f32.mrf.mxu0
  %v651 = vadd.f32 %v510, %v650
  %v652 = vpop.f32.mrf.mxu0
  %v653 = vadd.f32 %v510, %v652
  %v654 = vpop.f32.mrf.mxu0
  %v655 = vpop.f32.mrf.mxu0
  %656 = vdwg.mxu0
  %657 = vmatprep.subr.bf16.mxu0 0
  %658 = vmatpush1.bf16.msra.mxu0 0
  %659 = vmatprep.subr.bf16.mxu0 0
  %660 = vmatpush1.bf16.msra.mxu0 0
  %661 = vmatprep.subr.bf16.mxu0 0
  %662 = vmatpush1.bf16.msra.mxu0 0
  %663 = vmatprep.subr.bf16.mxu0 %v591
  %664 = vmatpush1.bf16.msra.mxu0 %v590
  %665 = vmatprep.subr.bf16.mxu0 %v587
  %666 = vmatpush1.bf16.msra.mxu0 %v586
  %667 = vmatprep.subr.bf16.mxu0 %v583
  %668 = vmatpush1.bf16.msra.mxu0 %v582
  %669 = vmatprep.subr.bf16.mxu0 %v579
  %670 = vmatpush1.bf16.msra.mxu0 %v578
  %671 = vmatprep.subr.bf16.mxu0 %v575
  %672 = vmatpush1.bf16.msra.mxu0 %v574
  %673 = vmatprep.subr.bf16.mxu0 0
  %674 = vmatpush2.bf16.msra.mxu0 0
  %675 = vmatprep.subr.bf16.mxu0 0
  %676 = vmatpush2.bf16.msra.mxu0 0
  %677 = vmatprep.subr.bf16.mxu0 0
  %678 = vmatpush2.bf16.msra.mxu0 0
  %679 = vmatprep.subr.bf16.mxu0 0
  %680 = vmatpush2.bf16.msra.mxu0 0
  %681 = vmatprep.subr.bf16.mxu0 0
  %682 = vmatpush2.bf16.msra.mxu0 0
  %683 = vmatprep.subr.bf16.mxu0 0
  %684 = vmatpush2.bf16.msra.mxu0 0
  %685 = vmatprep.subr.bf16.mxu0 0
  %686 = vmatpush2.bf16.msra.mxu0 0
  %687 = vmatprep.subr.bf16.mxu0 0
  %688 = vmatpush2.bf16.msra.mxu0 0
  %689 = vmatprep.mubr.bf16.mxu0 0
  %690 = vmatmul.mubr.bf16.gmra.mxu0 %v614
  %v691 = vpop.f32.mrf.mxu0
  %v692 = vadd.f32 %v510, %v691
  %v693 = vpop.f32.mrf.mxu0
  %v694 = vadd.f32 %v510, %v693
  %v695 = vpop.f32.mrf.mxu0
  %v696 = vpop.f32.mrf.mxu0
  %697 = vdwg.mxu0
  %v698 = vmax.f32 %v651, 0.0
  %v699 = vmax.f32 %v653, 0.0
  %v700 = vmax.f32 %v692, 0.0
  %v701 = vmax.f32 %v694, 0.0
  %s702 = scalar_lea.vmem %s2, 4
  %v703 = vld [vmem:[%s702] sm:$0xf]
  %s704 = scalar_lea.vmem %s3, 8
  %v705 = vld [vmem:[%s704] sm:$0xff]
  %706 = vrot.lane.b32.xlu0 %v698, 17
  %v707 = vpop.permute.xlu0 %706
  %708 = vrot.lane.b32.xlu0 %v699, 17
  %v709 = vpop.permute.xlu0 %708
  %710 = vrot.lane.b32.xlu0 %v700, 17
  %v711 = vpop.permute.xlu0 %710
  %712 = vrot.lane.b32.xlu0 %v701, 17
  %v713 = vpop.permute.xlu0 %712
  %v714 = vsel %vm36, %v711, %v713
  %v715 = vsel %vm36, %v709, %v711
  %v716 = vsel %vm36, %v707, %v709
  %v717 = vsel %vm36, %v713, %v707
  %v718 = vld [vmem:[%s1] ss:$8 sm:$0xf]
  %v720 = vlaneseq
  %v721 = vshrl.u32 %v720, 7
  %v722 = vsub.s32 0, %v721
  %v723 = vrot.slane %v718, %v722
  %v724 = vlaneseq
  %v725 = vshrl.u32 %v724, 7
  %v726 = vsub.s32 1, %v725
  %v727 = vrot.slane %v718, %v726
  %v728 = vlaneseq
  %v729 = vshrl.u32 %v728, 7
  %v730 = vsub.s32 2, %v729
  %v731 = vrot.slane %v718, %v730
  %v732 = vlaneseq
  %v733 = vshrl.u32 %v732, 7
  %v734 = vsub.s32 3, %v733
  %v735 = vrot.slane %v718, %v734
  %v740 = vmul.f32 %v717, %v723
  %v741 = vmul.f32 %v716, %v727
  %v742 = vmul.f32 %v715, %v731
  %v743 = vmul.f32 %v714, %v735
  %744 = vrot.lane.b32.xlu0 %v698, 16
  %v745 = vpop.permute.xlu0 %744
  %746 = vrot.lane.b32.xlu0 %v699, 16
  %v747 = vpop.permute.xlu0 %746
  %748 = vrot.lane.b32.xlu0 %v700, 16
  %v749 = vpop.permute.xlu0 %748
  %750 = vrot.lane.b32.xlu0 %v701, 16
  %v751 = vpop.permute.xlu0 %750
  %v752 = vsel %vm75, %v749, %v751
  %v753 = vsel %vm75, %v747, %v749
  %v754 = vsel %vm75, %v745, %v747
  %v755 = vsel %vm75, %v751, %v745
  %v756 = vld [vmem:[%s80] ss:$8 sm:$0xf]
  %v758 = vlaneseq
  %v759 = vshrl.u32 %v758, 7
  %v760 = vsub.s32 0, %v759
  %v761 = vrot.slane %v756, %v760
  %v762 = vlaneseq
  %v763 = vshrl.u32 %v762, 7
  %v764 = vsub.s32 1, %v763
  %v765 = vrot.slane %v756, %v764
  %v766 = vlaneseq
  %v767 = vshrl.u32 %v766, 7
  %v768 = vsub.s32 2, %v767
  %v769 = vrot.slane %v756, %v768
  %v770 = vlaneseq
  %v771 = vshrl.u32 %v770, 7
  %v772 = vsub.s32 3, %v771
  %v773 = vrot.slane %v756, %v772
  %v778 = vmul.f32 %v755, %v761
  %v779 = vmul.f32 %v754, %v765
  %v780 = vmul.f32 %v753, %v769
  %v781 = vmul.f32 %v752, %v773
  %v782 = vpack.c.bf16 %v778, %v740
  %v783 = vpack.c.bf16 %v779, %v741
  %v784 = vpack.c.bf16 %v780, %v742
  %v785 = vpack.c.bf16 %v781, %v743
  %v790 = vunpack.c.l.b16 %v782
  %v791 = vunpack.c.l.b16 %v783
  %v792 = vunpack.c.l.b16 %v784
  %v793 = vunpack.c.l.b16 %v785
  %v794 = vunpack.c.h.b16 %v782
  %v795 = vunpack.c.h.b16 %v783
  %v796 = vunpack.c.h.b16 %v784
  %v797 = vunpack.c.h.b16 %v785
  %v798 = vpack.c.b16 %v791, %v790
  %v799 = vpack.c.b16 %v793, %v792
  %v800 = vpack.c.b16 %v795, %v794
  %v801 = vpack.c.b16 %v797, %v796
  %806 = vst [vmem:[#allocation2] sm:$0xff] %v798
  %807 = vst [vmem:[#allocation2 + $0x8] sm:$0xff] %v799
  %808 = vst [vmem:[#allocation2 + $0x10] sm:$0xff] %v800
  %809 = vst [vmem:[#allocation2 + $0x18] sm:$0xff] %v801
  %810 = vrot.lane.b32.xlu0 %v698, 15
  %v811 = vpop.permute.xlu0 %810
  %812 = vrot.lane.b32.xlu0 %v699, 15
  %v813 = vpop.permute.xlu0 %812
  %814 = vrot.lane.b32.xlu0 %v700, 15
  %v815 = vpop.permute.xlu0 %814
  %816 = vrot.lane.b32.xlu0 %v701, 15
  %v817 = vpop.permute.xlu0 %816
  %v818 = vsel %vm143, %v815, %v817
  %v819 = vsel %vm143, %v813, %v815
  %v820 = vsel %vm143, %v811, %v813
  %v821 = vsel %vm143, %v817, %v811
  %v822 = vld [vmem:[%s148] ss:$8 sm:$0xf]
  %v824 = vlaneseq
  %v825 = vshrl.u32 %v824, 7
  %v826 = vsub.s32 0, %v825
  %v827 = vrot.slane %v822, %v826
  %v828 = vlaneseq
  %v829 = vshrl.u32 %v828, 7
  %v830 = vsub.s32 1, %v829
  %v831 = vrot.slane %v822, %v830
  %v832 = vlaneseq
  %v833 = vshrl.u32 %v832, 7
  %v834 = vsub.s32 2, %v833
  %v835 = vrot.slane %v822, %v834
  %v836 = vlaneseq
  %v837 = vshrl.u32 %v836, 7
  %v838 = vsub.s32 3, %v837
  %v839 = vrot.slane %v822, %v838
  %v844 = vmul.f32 %v821, %v827
  %v845 = vmul.f32 %v820, %v831
  %v846 = vmul.f32 %v819, %v835
  %v847 = vmul.f32 %v818, %v839
  %848 = vrot.lane.b32.xlu0 %v698, 1
  %v849 = vpop.permute.xlu0 %848
  %850 = vrot.lane.b32.xlu0 %v699, 1
  %v851 = vpop.permute.xlu0 %850
  %852 = vrot.lane.b32.xlu0 %v700, 1
  %v853 = vpop.permute.xlu0 %852
  %854 = vrot.lane.b32.xlu0 %v701, 1
  %v855 = vpop.permute.xlu0 %854
  %v856 = vsel %vm183, %v853, %v855
  %v857 = vsel %vm183, %v851, %v853
  %v858 = vsel %vm183, %v849, %v851
  %v859 = vsel %vm183, %v855, %v849
  %v860 = vld [vmem:[%s188] ss:$8 sm:$0xf]
  %v862 = vlaneseq
  %v863 = vshrl.u32 %v862, 7
  %v864 = vsub.s32 0, %v863
  %v865 = vrot.slane %v860, %v864
  %v866 = vlaneseq
  %v867 = vshrl.u32 %v866, 7
  %v868 = vsub.s32 1, %v867
  %v869 = vrot.slane %v860, %v868
  %v870 = vlaneseq
  %v871 = vshrl.u32 %v870, 7
  %v872 = vsub.s32 2, %v871
  %v873 = vrot.slane %v860, %v872
  %v874 = vlaneseq
  %v875 = vshrl.u32 %v874, 7
  %v876 = vsub.s32 3, %v875
  %v877 = vrot.slane %v860, %v876
  %v882 = vmul.f32 %v859, %v865
  %v883 = vmul.f32 %v858, %v869
  %v884 = vmul.f32 %v857, %v873
  %v885 = vmul.f32 %v856, %v877
  %v886 = vpack.c.bf16 %v882, %v844
  %v887 = vpack.c.bf16 %v883, %v845
  %v888 = vpack.c.bf16 %v884, %v846
  %v889 = vpack.c.bf16 %v885, %v847
  %v894 = vunpack.c.l.b16 %v886
  %v895 = vunpack.c.l.b16 %v887
  %v896 = vunpack.c.l.b16 %v888
  %v897 = vunpack.c.l.b16 %v889
  %v898 = vunpack.c.h.b16 %v886
  %v899 = vunpack.c.h.b16 %v887
  %v900 = vunpack.c.h.b16 %v888
  %v901 = vunpack.c.h.b16 %v889
  %v902 = vpack.c.b16 %v895, %v894
  %v903 = vpack.c.b16 %v897, %v896
  %v904 = vpack.c.b16 %v899, %v898
  %v905 = vpack.c.b16 %v901, %v900
  %910 = vst [vmem:[#allocation2 + $0x20] sm:$0xff] %v902
  %911 = vst [vmem:[#allocation2 + $0x28] sm:$0xff] %v903
  %912 = vst [vmem:[#allocation2 + $0x30] sm:$0xff] %v904
  %913 = vst [vmem:[#allocation2 + $0x38] sm:$0xff] %v905
  %914 = vrot.lane.b32.xlu0 %v698, 127
  %v915 = vpop.permute.xlu0 %914
  %916 = vrot.lane.b32.xlu0 %v699, 127
  %v917 = vpop.permute.xlu0 %916
  %918 = vrot.lane.b32.xlu0 %v700, 127
  %v919 = vpop.permute.xlu0 %918
  %920 = vrot.lane.b32.xlu0 %v701, 127
  %v921 = vpop.permute.xlu0 %920
  %v922 = vsel %vm251, %v919, %v921
  %v923 = vsel %vm251, %v917, %v919
  %v924 = vsel %vm251, %v915, %v917
  %v925 = vsel %vm251, %v921, %v915
  %v926 = vld [vmem:[%s256] ss:$8 sm:$0xf]
  %v928 = vlaneseq
  %v929 = vshrl.u32 %v928, 7
  %v930 = vsub.s32 0, %v929
  %v931 = vrot.slane %v926, %v930
  %v932 = vlaneseq
  %v933 = vshrl.u32 %v932, 7
  %v934 = vsub.s32 1, %v933
  %v935 = vrot.slane %v926, %v934
  %v936 = vlaneseq
  %v937 = vshrl.u32 %v936, 7
  %v938 = vsub.s32 2, %v937
  %v939 = vrot.slane %v926, %v938
  %v940 = vlaneseq
  %v941 = vshrl.u32 %v940, 7
  %v942 = vsub.s32 3, %v941
  %v943 = vrot.slane %v926, %v942
  %v948 = vmul.f32 %v924, %v931
  %v949 = vmul.f32 %v923, %v935
  %v950 = vmul.f32 %v922, %v939
  %v951 = vmul.f32 %v925, %v943
  %v952 = vpack.c.bf16 %v948, %v698
  %v953 = vpack.c.bf16 %v949, %v699
  %v954 = vpack.c.bf16 %v950, %v700
  %v955 = vpack.c.bf16 %v951, %v701
  %v960 = vunpack.c.l.b16 %v952
  %v961 = vunpack.c.l.b16 %v953
  %v962 = vunpack.c.l.b16 %v954
  %v963 = vunpack.c.l.b16 %v955
  %v964 = vunpack.c.h.b16 %v952
  %v965 = vunpack.c.h.b16 %v953
  %v966 = vunpack.c.h.b16 %v954
  %v967 = vunpack.c.h.b16 %v955
  %v968 = vpack.c.b16 %v961, %v960
  %v969 = vpack.c.b16 %v963, %v962
  %v970 = vpack.c.b16 %v965, %v964
  %v971 = vpack.c.b16 %v967, %v966
  %976 = vst [vmem:[#allocation2 + $0x40] sm:$0xff] %v968
  %977 = vst [vmem:[#allocation2 + $0x48] sm:$0xff] %v969
  %978 = vst [vmem:[#allocation2 + $0x50] sm:$0xff] %v970
  %979 = vst [vmem:[#allocation2 + $0x58] sm:$0xff] %v971
  %980 = vrot.lane.b32.xlu0 %v698, 113
  %v981 = vpop.permute.xlu0 %980
  %982 = vrot.lane.b32.xlu0 %v699, 113
  %v983 = vpop.permute.xlu0 %982
  %984 = vrot.lane.b32.xlu0 %v700, 113
  %v985 = vpop.permute.xlu0 %984
  %986 = vrot.lane.b32.xlu0 %v701, 113
  %v987 = vpop.permute.xlu0 %986
  %v988 = vsel %vm319, %v985, %v987
  %v989 = vsel %vm319, %v983, %v985
  %v990 = vsel %vm319, %v981, %v983
  %v991 = vsel %vm319, %v987, %v981
  %v992 = vld [vmem:[%s324] ss:$8 sm:$0xf]
  %v994 = vlaneseq
  %v995 = vshrl.u32 %v994, 7
  %v996 = vsub.s32 0, %v995
  %v997 = vrot.slane %v992, %v996
  %v998 = vlaneseq
  %v999 = vshrl.u32 %v998, 7
  %v1000 = vsub.s32 1, %v999
  %v1001 = vrot.slane %v992, %v1000
  %v1002 = vlaneseq
  %v1003 = vshrl.u32 %v1002, 7
  %v1004 = vsub.s32 2, %v1003
  %v1005 = vrot.slane %v992, %v1004
  %v1006 = vlaneseq
  %v1007 = vshrl.u32 %v1006, 7
  %v1008 = vsub.s32 3, %v1007
  %v1009 = vrot.slane %v992, %v1008
  %v1014 = vmul.f32 %v990, %v997
  %v1015 = vmul.f32 %v989, %v1001
  %v1016 = vmul.f32 %v988, %v1005
  %v1017 = vmul.f32 %v991, %v1009
  %1018 = vrot.lane.b32.xlu0 %v698, 112
  %v1019 = vpop.permute.xlu0 %1018
  %1020 = vrot.lane.b32.xlu0 %v699, 112
  %v1021 = vpop.permute.xlu0 %1020
  %1022 = vrot.lane.b32.xlu0 %v700, 112
  %v1023 = vpop.permute.xlu0 %1022
  %1024 = vrot.lane.b32.xlu0 %v701, 112
  %v1025 = vpop.permute.xlu0 %1024
  %v1026 = vsel %vm359, %v1023, %v1025
  %v1027 = vsel %vm359, %v1021, %v1023
  %v1028 = vsel %vm359, %v1019, %v1021
  %v1029 = vsel %vm359, %v1025, %v1019
  %v1030 = vld [vmem:[%s364] ss:$8 sm:$0xf]
  %v1032 = vlaneseq
  %v1033 = vshrl.u32 %v1032, 7
  %v1034 = vsub.s32 0, %v1033
  %v1035 = vrot.slane %v1030, %v1034
  %v1036 = vlaneseq
  %v1037 = vshrl.u32 %v1036, 7
  %v1038 = vsub.s32 1, %v1037
  %v1039 = vrot.slane %v1030, %v1038
  %v1040 = vlaneseq
  %v1041 = vshrl.u32 %v1040, 7
  %v1042 = vsub.s32 2, %v1041
  %v1043 = vrot.slane %v1030, %v1042
  %v1044 = vlaneseq
  %v1045 = vshrl.u32 %v1044, 7
  %v1046 = vsub.s32 3, %v1045
  %v1047 = vrot.slane %v1030, %v1046
  %v1052 = vmul.f32 %v1028, %v1035
  %v1053 = vmul.f32 %v1027, %v1039
  %v1054 = vmul.f32 %v1026, %v1043
  %v1055 = vmul.f32 %v1029, %v1047
  %v1056 = vpack.c.bf16 %v1052, %v1014
  %v1057 = vpack.c.bf16 %v1053, %v1015
  %v1058 = vpack.c.bf16 %v1054, %v1016
  %v1059 = vpack.c.bf16 %v1055, %v1017
  %v1064 = vunpack.c.l.b16 %v1056
  %v1065 = vunpack.c.l.b16 %v1057
  %v1066 = vunpack.c.l.b16 %v1058
  %v1067 = vunpack.c.l.b16 %v1059
  %v1068 = vunpack.c.h.b16 %v1056
  %v1069 = vunpack.c.h.b16 %v1057
  %v1070 = vunpack.c.h.b16 %v1058
  %v1071 = vunpack.c.h.b16 %v1059
  %v1072 = vpack.c.b16 %v1065, %v1064
  %v1073 = vpack.c.b16 %v1067, %v1066
  %v1074 = vpack.c.b16 %v1069, %v1068
  %v1075 = vpack.c.b16 %v1071, %v1070
  %1080 = vst [vmem:[#allocation2 + $0x60] sm:$0xff] %v1072
  %1081 = vst [vmem:[#allocation2 + $0x68] sm:$0xff] %v1073
  %1082 = vst [vmem:[#allocation2 + $0x70] sm:$0xff] %v1074
  %1083 = vst [vmem:[#allocation2 + $0x78] sm:$0xff] %v1075
  %1084 = vrot.lane.b32.xlu0 %v698, 111
  %v1085 = vpop.permute.xlu0 %1084
  %1086 = vrot.lane.b32.xlu0 %v699, 111
  %v1087 = vpop.permute.xlu0 %1086
  %1088 = vrot.lane.b32.xlu0 %v700, 111
  %v1089 = vpop.permute.xlu0 %1088
  %1090 = vrot.lane.b32.xlu0 %v701, 111
  %v1091 = vpop.permute.xlu0 %1090
  %v1092 = vsel %vm427, %v1089, %v1091
  %v1093 = vsel %vm427, %v1087, %v1089
  %v1094 = vsel %vm427, %v1085, %v1087
  %v1095 = vsel %vm427, %v1091, %v1085
  %v1096 = vld [vmem:[%s432] ss:$8 sm:$0xf]
  %v1098 = vlaneseq
  %v1099 = vshrl.u32 %v1098, 7
  %v1100 = vsub.s32 0, %v1099
  %v1101 = vrot.slane %v1096, %v1100
  %v1102 = vlaneseq
  %v1103 = vshrl.u32 %v1102, 7
  %v1104 = vsub.s32 1, %v1103
  %v1105 = vrot.slane %v1096, %v1104
  %v1106 = vlaneseq
  %v1107 = vshrl.u32 %v1106, 7
  %v1108 = vsub.s32 2, %v1107
  %v1109 = vrot.slane %v1096, %v1108
  %v1110 = vlaneseq
  %v1111 = vshrl.u32 %v1110, 7
  %v1112 = vsub.s32 3, %v1111
  %v1113 = vrot.slane %v1096, %v1112
  %v1118 = vmul.f32 %v1094, %v1101
  %v1119 = vmul.f32 %v1093, %v1105
  %v1120 = vmul.f32 %v1092, %v1109
  %v1121 = vmul.f32 %v1095, %v1113
  %v1122 = vpack.c.bf16 0.0, %v1118
  %v1123 = vpack.c.bf16 0.0, %v1119
  %v1124 = vpack.c.bf16 0.0, %v1120
  %v1125 = vpack.c.bf16 0.0, %v1121
  %v1130 = vunpack.c.l.b16 %v1122
  %v1131 = vunpack.c.l.b16 %v1123
  %v1132 = vunpack.c.l.b16 %v1124
  %v1133 = vunpack.c.l.b16 %v1125
  %v1134 = vunpack.c.h.b16 %v1122
  %v1135 = vunpack.c.h.b16 %v1123
  %v1136 = vunpack.c.h.b16 %v1124
  %v1137 = vunpack.c.h.b16 %v1125
  %v1138 = vpack.c.b16 %v1131, %v1130
  %v1139 = vpack.c.b16 %v1133, %v1132
  %v1140 = vpack.c.b16 %v1135, %v1134
  %v1141 = vpack.c.b16 %v1137, %v1136
  %1146 = vst [vmem:[#allocation2 + $0x80] sm:$0xff] %v1138
  %1147 = vst [vmem:[#allocation2 + $0x88] sm:$0xff] %v1139
  %1148 = vst [vmem:[#allocation2 + $0x90] sm:$0xff] %v1140
  %1149 = vst [vmem:[#allocation2 + $0x98] sm:$0xff] %v1141
  %v1150 = vld [vmem:[#allocation2] sm:$0xff]
  %v1151 = vld [vmem:[#allocation2 + $0x8] sm:$0xff]
  %v1152 = vld [vmem:[#allocation2 + $0x10] sm:$0xff]
  %v1153 = vld [vmem:[#allocation2 + $0x18] sm:$0xff]
  %v1154 = vld [vmem:[#allocation2 + $0x20] sm:$0xff]
  %v1155 = vld [vmem:[#allocation2 + $0x28] sm:$0xff]
  %v1156 = vld [vmem:[#allocation2 + $0x30] sm:$0xff]
  %v1157 = vld [vmem:[#allocation2 + $0x38] sm:$0xff]
  %v1158 = vld [vmem:[#allocation2 + $0x40] sm:$0xff]
  %v1159 = vld [vmem:[#allocation2 + $0x48] sm:$0xff]
  %v1160 = vld [vmem:[#allocation2 + $0x50] sm:$0xff]
  %v1161 = vld [vmem:[#allocation2 + $0x58] sm:$0xff]
  %v1162 = vld [vmem:[#allocation2 + $0x60] sm:$0xff]
  %v1163 = vld [vmem:[#allocation2 + $0x68] sm:$0xff]
  %v1164 = vld [vmem:[#allocation2 + $0x70] sm:$0xff]
  %v1165 = vld [vmem:[#allocation2 + $0x78] sm:$0xff]
  %v1166 = vld [vmem:[#allocation2 + $0x80] sm:$0xff]
  %v1167 = vld [vmem:[#allocation2 + $0x88] sm:$0xff]
  %v1168 = vld [vmem:[#allocation2 + $0x90] sm:$0xff]
  %v1169 = vld [vmem:[#allocation2 + $0x98] sm:$0xff]
  %1171 = vset.pattern.permute.xlu0 0
  %1172 = vperm.xlu0 %1171, %v705
  %v1173 = vpop.permute.xlu0 %1172
  %v1195 = vunpack.c.l.b16 %v1150
  %v1196 = vunpack.c.h.b16 %v1150
  %v1197 = vunpack.c.l.b16 %v1151
  %v1198 = vunpack.c.h.b16 %v1151
  %v1199 = vunpack.c.l.b16 %v1152
  %v1200 = vunpack.c.h.b16 %v1152
  %v1201 = vunpack.c.l.b16 %v1153
  %v1202 = vunpack.c.h.b16 %v1153
  %v1203 = vunpack.c.l.b16 %v1154
  %v1204 = vunpack.c.h.b16 %v1154
  %v1205 = vunpack.c.l.b16 %v1155
  %v1206 = vunpack.c.h.b16 %v1155
  %v1207 = vunpack.c.l.b16 %v1156
  %v1208 = vunpack.c.h.b16 %v1156
  %v1209 = vunpack.c.l.b16 %v1157
  %v1210 = vunpack.c.h.b16 %v1157
  %v1211 = vunpack.c.l.b16 %v1158
  %v1212 = vunpack.c.h.b16 %v1158
  %v1213 = vunpack.c.l.b16 %v1159
  %v1214 = vunpack.c.h.b16 %v1159
  %v1215 = vunpack.c.l.b16 %v1160
  %v1216 = vunpack.c.h.b16 %v1160
  %v1217 = vunpack.c.l.b16 %v1161
  %v1218 = vunpack.c.h.b16 %v1161
  %v1219 = vunpack.c.l.b16 %v1162
  %v1220 = vunpack.c.h.b16 %v1162
  %v1221 = vunpack.c.l.b16 %v1163
  %v1222 = vunpack.c.h.b16 %v1163
  %v1223 = vunpack.c.l.b16 %v1164
  %v1224 = vunpack.c.h.b16 %v1164
  %v1225 = vunpack.c.l.b16 %v1165
  %v1226 = vunpack.c.h.b16 %v1165
  %v1227 = vunpack.c.l.b16 %v1166
  %v1228 = vunpack.c.h.b16 %v1166
  %v1229 = vunpack.c.l.b16 %v1167
  %v1230 = vunpack.c.h.b16 %v1167
  %v1231 = vunpack.c.l.b16 %v1168
  %v1232 = vunpack.c.h.b16 %v1168
  %v1233 = vunpack.c.l.b16 %v1169
  %v1234 = vunpack.c.h.b16 %v1169
  %v1235 = vpack.c.b16 %v1199, %v1195
  %v1236 = vpack.c.b16 %v1200, %v1196
  %v1237 = vpack.c.b16 %v1201, %v1197
  %v1238 = vpack.c.b16 %v1202, %v1198
  %v1239 = vpack.c.b16 %v1207, %v1203
  %v1240 = vpack.c.b16 %v1208, %v1204
  %v1241 = vpack.c.b16 %v1209, %v1205
  %v1242 = vpack.c.b16 %v1210, %v1206
  %v1243 = vpack.c.b16 %v1215, %v1211
  %v1244 = vpack.c.b16 %v1216, %v1212
  %v1245 = vpack.c.b16 %v1217, %v1213
  %v1246 = vpack.c.b16 %v1218, %v1214
  %v1247 = vpack.c.b16 %v1223, %v1219
  %v1248 = vpack.c.b16 %v1224, %v1220
  %v1249 = vpack.c.b16 %v1225, %v1221
  %v1250 = vpack.c.b16 %v1226, %v1222
  %v1251 = vpack.c.b16 %v1231, %v1227
  %v1252 = vpack.c.b16 %v1232, %v1228
  %v1253 = vpack.c.b16 %v1233, %v1229
  %v1254 = vpack.c.b16 %v1234, %v1230
  %v1276 = vsel %vm612, %v703, 0
  %1278 = vmatprep.subr.bf16.mxu0 0
  %1279 = vmatpush1.bf16.msra.mxu0 0
  %1280 = vmatprep.subr.bf16.mxu0 0
  %1281 = vmatpush1.bf16.msra.mxu0 0
  %1282 = vmatprep.subr.bf16.mxu0 0
  %1283 = vmatpush1.bf16.msra.mxu0 0
  %1284 = vmatprep.subr.bf16.mxu0 %v1252
  %1285 = vmatpush1.bf16.msra.mxu0 %v1251
  %1286 = vmatprep.subr.bf16.mxu0 %v1248
  %1287 = vmatpush1.bf16.msra.mxu0 %v1247
  %1288 = vmatprep.subr.bf16.mxu0 %v1244
  %1289 = vmatpush1.bf16.msra.mxu0 %v1243
  %1290 = vmatprep.subr.bf16.mxu0 %v1240
  %1291 = vmatpush1.bf16.msra.mxu0 %v1239
  %1292 = vmatprep.subr.bf16.mxu0 %v1236
  %1293 = vmatpush1.bf16.msra.mxu0 %v1235
  %1294 = vmatprep.subr.bf16.mxu0 0
  %1295 = vmatpush2.bf16.msra.mxu0 0
  %1296 = vmatprep.subr.bf16.mxu0 0
  %1297 = vmatpush2.bf16.msra.mxu0 0
  %1298 = vmatprep.subr.bf16.mxu0 0
  %1299 = vmatpush2.bf16.msra.mxu0 0
  %1300 = vmatprep.subr.bf16.mxu0 0
  %1301 = vmatpush2.bf16.msra.mxu0 0
  %1302 = vmatprep.subr.bf16.mxu0 0
  %1303 = vmatpush2.bf16.msra.mxu0 0
  %1304 = vmatprep.subr.bf16.mxu0 0
  %1305 = vmatpush2.bf16.msra.mxu0 0
  %1306 = vmatprep.subr.bf16.mxu0 0
  %1307 = vmatpush2.bf16.msra.mxu0 0
  %1308 = vmatprep.subr.bf16.mxu0 0
  %1309 = vmatpush2.bf16.msra.mxu0 0
  %1310 = vmatprep.mubr.bf16.mxu0 0
  %1311 = vmatmul.mubr.bf16.gmra.mxu0 %v1276
  %v1312 = vpop.f32.mrf.mxu0
  %v1313 = vadd.f32 %v1173, %v1312
  %v1314 = vpop.f32.mrf.mxu0
  %v1315 = vadd.f32 %v1173, %v1314
  %v1316 = vpop.f32.mrf.mxu0
  %v1317 = vpop.f32.mrf.mxu0
  %1318 = vdwg.mxu0
  %1319 = vmatprep.subr.bf16.mxu0 0
  %1320 = vmatpush1.bf16.msra.mxu0 0
  %1321 = vmatprep.subr.bf16.mxu0 0
  %1322 = vmatpush1.bf16.msra.mxu0 0
  %1323 = vmatprep.subr.bf16.mxu0 0
  %1324 = vmatpush1.bf16.msra.mxu0 0
  %1325 = vmatprep.subr.bf16.mxu0 %v1254
  %1326 = vmatpush1.bf16.msra.mxu0 %v1253
  %1327 = vmatprep.subr.bf16.mxu0 %v1250
  %1328 = vmatpush1.bf16.msra.mxu0 %v1249
  %1329 = vmatprep.subr.bf16.mxu0 %v1246
  %1330 = vmatpush1.bf16.msra.mxu0 %v1245
  %1331 = vmatprep.subr.bf16.mxu0 %v1242
  %1332 = vmatpush1.bf16.msra.mxu0 %v1241
  %1333 = vmatprep.subr.bf16.mxu0 %v1238
  %1334 = vmatpush1.bf16.msra.mxu0 %v1237
  %1335 = vmatprep.subr.bf16.mxu0 0
  %1336 = vmatpush2.bf16.msra.mxu0 0
  %1337 = vmatprep.subr.bf16.mxu0 0
  %1338 = vmatpush2.bf16.msra.mxu0 0
  %1339 = vmatprep.subr.bf16.mxu0 0
  %1340 = vmatpush2.bf16.msra.mxu0 0
  %1341 = vmatprep.subr.bf16.mxu0 0
  %1342 = vmatpush2.bf16.msra.mxu0 0
  %1343 = vmatprep.subr.bf16.mxu0 0
  %1344 = vmatpush2.bf16.msra.mxu0 0
  %1345 = vmatprep.subr.bf16.mxu0 0
  %1346 = vmatpush2.bf16.msra.mxu0 0
  %1347 = vmatprep.subr.bf16.mxu0 0
  %1348 = vmatpush2.bf16.msra.mxu0 0
  %1349 = vmatprep.subr.bf16.mxu0 0
  %1350 = vmatpush2.bf16.msra.mxu0 0
  %1351 = vmatprep.mubr.bf16.mxu0 0
  %1352 = vmatmul.mubr.bf16.gmra.mxu0 %v1276
  %v1353 = vpop.f32.mrf.mxu0
  %v1354 = vadd.f32 %v1173, %v1353
  %v1355 = vpop.f32.mrf.mxu0
  %v1356 = vadd.f32 %v1173, %v1355
  %v1357 = vpop.f32.mrf.mxu0
  %v1358 = vpop.f32.mrf.mxu0
  %1359 = vdwg.mxu0
  %s1360 = scalar_lea.vmem %s2, 8
  %v1361 = vld [vmem:[%s1360] sm:$0xf]
  %s1362 = scalar_lea.vmem %s3, 16
  %v1363 = vld [vmem:[%s1362] sm:$0xff]
  %1364 = vrot.lane.b32.xlu0 %v1313, 17
  %v1365 = vpop.permute.xlu0 %1364
  %1366 = vrot.lane.b32.xlu0 %v1315, 17
  %v1367 = vpop.permute.xlu0 %1366
  %1368 = vrot.lane.b32.xlu0 %v1354, 17
  %v1369 = vpop.permute.xlu0 %1368
  %1370 = vrot.lane.b32.xlu0 %v1356, 17
  %v1371 = vpop.permute.xlu0 %1370
  %v1372 = vsel %vm36, %v1369, %v1371
  %v1373 = vsel %vm36, %v1367, %v1369
  %v1374 = vsel %vm36, %v1365, %v1367
  %v1375 = vsel %vm36, %v1371, %v1365
  %v1376 = vld [vmem:[%s1] ss:$8 sm:$0xf]
  %v1378 = vlaneseq
  %v1379 = vshrl.u32 %v1378, 7
  %v1380 = vsub.s32 0, %v1379
  %v1381 = vrot.slane %v1376, %v1380
  %v1382 = vlaneseq
  %v1383 = vshrl.u32 %v1382, 7
  %v1384 = vsub.s32 1, %v1383
  %v1385 = vrot.slane %v1376, %v1384
  %v1386 = vlaneseq
  %v1387 = vshrl.u32 %v1386, 7
  %v1388 = vsub.s32 2, %v1387
  %v1389 = vrot.slane %v1376, %v1388
  %v1390 = vlaneseq
  %v1391 = vshrl.u32 %v1390, 7
  %v1392 = vsub.s32 3, %v1391
  %v1393 = vrot.slane %v1376, %v1392
  %v1398 = vmul.f32 %v1375, %v1381
  %v1399 = vmul.f32 %v1374, %v1385
  %v1400 = vmul.f32 %v1373, %v1389
  %v1401 = vmul.f32 %v1372, %v1393
  %1402 = vrot.lane.b32.xlu0 %v1313, 16
  %v1403 = vpop.permute.xlu0 %1402
  %1404 = vrot.lane.b32.xlu0 %v1315, 16
  %v1405 = vpop.permute.xlu0 %1404
  %1406 = vrot.lane.b32.xlu0 %v1354, 16
  %v1407 = vpop.permute.xlu0 %1406
  %1408 = vrot.lane.b32.xlu0 %v1356, 16
  %v1409 = vpop.permute.xlu0 %1408
  %v1410 = vsel %vm75, %v1407, %v1409
  %v1411 = vsel %vm75, %v1405, %v1407
  %v1412 = vsel %vm75, %v1403, %v1405
  %v1413 = vsel %vm75, %v1409, %v1403
  %v1414 = vld [vmem:[%s80] ss:$8 sm:$0xf]
  %v1416 = vlaneseq
  %v1417 = vshrl.u32 %v1416, 7
  %v1418 = vsub.s32 0, %v1417
  %v1419 = vrot.slane %v1414, %v1418
  %v1420 = vlaneseq
  %v1421 = vshrl.u32 %v1420, 7
  %v1422 = vsub.s32 1, %v1421
  %v1423 = vrot.slane %v1414, %v1422
  %v1424 = vlaneseq
  %v1425 = vshrl.u32 %v1424, 7
  %v1426 = vsub.s32 2, %v1425
  %v1427 = vrot.slane %v1414, %v1426
  %v1428 = vlaneseq
  %v1429 = vshrl.u32 %v1428, 7
  %v1430 = vsub.s32 3, %v1429
  %v1431 = vrot.slane %v1414, %v1430
  %v1436 = vmul.f32 %v1413, %v1419
  %v1437 = vmul.f32 %v1412, %v1423
  %v1438 = vmul.f32 %v1411, %v1427
  %v1439 = vmul.f32 %v1410, %v1431
  %v1440 = vpack.c.bf16 %v1436, %v1398
  %v1441 = vpack.c.bf16 %v1437, %v1399
  %v1442 = vpack.c.bf16 %v1438, %v1400
  %v1443 = vpack.c.bf16 %v1439, %v1401
  %v1448 = vunpack.c.l.b16 %v1440
  %v1449 = vunpack.c.l.b16 %v1441
  %v1450 = vunpack.c.l.b16 %v1442
  %v1451 = vunpack.c.l.b16 %v1443
  %v1452 = vunpack.c.h.b16 %v1440
  %v1453 = vunpack.c.h.b16 %v1441
  %v1454 = vunpack.c.h.b16 %v1442
  %v1455 = vunpack.c.h.b16 %v1443
  %v1456 = vpack.c.b16 %v1449, %v1448
  %v1457 = vpack.c.b16 %v1451, %v1450
  %v1458 = vpack.c.b16 %v1453, %v1452
  %v1459 = vpack.c.b16 %v1455, %v1454
  %1464 = vst [vmem:[#allocation2] sm:$0xff] %v1456
  %1465 = vst [vmem:[#allocation2 + $0x8] sm:$0xff] %v1457
  %1466 = vst [vmem:[#allocation2 + $0x10] sm:$0xff] %v1458
  %1467 = vst [vmem:[#allocation2 + $0x18] sm:$0xff] %v1459
  %1468 = vrot.lane.b32.xlu0 %v1313, 15
  %v1469 = vpop.permute.xlu0 %1468
  %1470 = vrot.lane.b32.xlu0 %v1315, 15
  %v1471 = vpop.permute.xlu0 %1470
  %1472 = vrot.lane.b32.xlu0 %v1354, 15
  %v1473 = vpop.permute.xlu0 %1472
  %1474 = vrot.lane.b32.xlu0 %v1356, 15
  %v1475 = vpop.permute.xlu0 %1474
  %v1476 = vsel %vm143, %v1473, %v1475
  %v1477 = vsel %vm143, %v1471, %v1473
  %v1478 = vsel %vm143, %v1469, %v1471
  %v1479 = vsel %vm143, %v1475, %v1469
  %v1480 = vld [vmem:[%s148] ss:$8 sm:$0xf]
  %v1482 = vlaneseq
  %v1483 = vshrl.u32 %v1482, 7
  %v1484 = vsub.s32 0, %v1483
  %v1485 = vrot.slane %v1480, %v1484
  %v1486 = vlaneseq
  %v1487 = vshrl.u32 %v1486, 7
  %v1488 = vsub.s32 1, %v1487
  %v1489 = vrot.slane %v1480, %v1488
  %v1490 = vlaneseq
  %v1491 = vshrl.u32 %v1490, 7
  %v1492 = vsub.s32 2, %v1491
  %v1493 = vrot.slane %v1480, %v1492
  %v1494 = vlaneseq
  %v1495 = vshrl.u32 %v1494, 7
  %v1496 = vsub.s32 3, %v1495
  %v1497 = vrot.slane %v1480, %v1496
  %v1502 = vmul.f32 %v1479, %v1485
  %v1503 = vmul.f32 %v1478, %v1489
  %v1504 = vmul.f32 %v1477, %v1493
  %v1505 = vmul.f32 %v1476, %v1497
  %1506 = vrot.lane.b32.xlu0 %v1313, 1
  %v1507 = vpop.permute.xlu0 %1506
  %1508 = vrot.lane.b32.xlu0 %v1315, 1
  %v1509 = vpop.permute.xlu0 %1508
  %1510 = vrot.lane.b32.xlu0 %v1354, 1
  %v1511 = vpop.permute.xlu0 %1510
  %1512 = vrot.lane.b32.xlu0 %v1356, 1
  %v1513 = vpop.permute.xlu0 %1512
  %v1514 = vsel %vm183, %v1511, %v1513
  %v1515 = vsel %vm183, %v1509, %v1511
  %v1516 = vsel %vm183, %v1507, %v1509
  %v1517 = vsel %vm183, %v1513, %v1507
  %v1518 = vld [vmem:[%s188] ss:$8 sm:$0xf]
  %v1520 = vlaneseq
  %v1521 = vshrl.u32 %v1520, 7
  %v1522 = vsub.s32 0, %v1521
  %v1523 = vrot.slane %v1518, %v1522
  %v1524 = vlaneseq
  %v1525 = vshrl.u32 %v1524, 7
  %v1526 = vsub.s32 1, %v1525
  %v1527 = vrot.slane %v1518, %v1526
  %v1528 = vlaneseq
  %v1529 = vshrl.u32 %v1528, 7
  %v1530 = vsub.s32 2, %v1529
  %v1531 = vrot.slane %v1518, %v1530
  %v1532 = vlaneseq
  %v1533 = vshrl.u32 %v1532, 7
  %v1534 = vsub.s32 3, %v1533
  %v1535 = vrot.slane %v1518, %v1534
  %v1540 = vmul.f32 %v1517, %v1523
  %v1541 = vmul.f32 %v1516, %v1527
  %v1542 = vmul.f32 %v1515, %v1531
  %v1543 = vmul.f32 %v1514, %v1535
  %v1544 = vpack.c.bf16 %v1540, %v1502
  %v1545 = vpack.c.bf16 %v1541, %v1503
  %v1546 = vpack.c.bf16 %v1542, %v1504
  %v1547 = vpack.c.bf16 %v1543, %v1505
  %v1552 = vunpack.c.l.b16 %v1544
  %v1553 = vunpack.c.l.b16 %v1545
  %v1554 = vunpack.c.l.b16 %v1546
  %v1555 = vunpack.c.l.b16 %v1547
  %v1556 = vunpack.c.h.b16 %v1544
  %v1557 = vunpack.c.h.b16 %v1545
  %v1558 = vunpack.c.h.b16 %v1546
  %v1559 = vunpack.c.h.b16 %v1547
  %v1560 = vpack.c.b16 %v1553, %v1552
  %v1561 = vpack.c.b16 %v1555, %v1554
  %v1562 = vpack.c.b16 %v1557, %v1556
  %v1563 = vpack.c.b16 %v1559, %v1558
  %1568 = vst [vmem:[#allocation2 + $0x20] sm:$0xff] %v1560
  %1569 = vst [vmem:[#allocation2 + $0x28] sm:$0xff] %v1561
  %1570 = vst [vmem:[#allocation2 + $0x30] sm:$0xff] %v1562
  %1571 = vst [vmem:[#allocation2 + $0x38] sm:$0xff] %v1563
  %1572 = vrot.lane.b32.xlu0 %v1313, 127
  %v1573 = vpop.permute.xlu0 %1572
  %1574 = vrot.lane.b32.xlu0 %v1315, 127
  %v1575 = vpop.permute.xlu0 %1574
  %1576 = vrot.lane.b32.xlu0 %v1354, 127
  %v1577 = vpop.permute.xlu0 %1576
  %1578 = vrot.lane.b32.xlu0 %v1356, 127
  %v1579 = vpop.permute.xlu0 %1578
  %v1580 = vsel %vm251, %v1577, %v1579
  %v1581 = vsel %vm251, %v1575, %v1577
  %v1582 = vsel %vm251, %v1573, %v1575
  %v1583 = vsel %vm251, %v1579, %v1573
  %v1584 = vld [vmem:[%s256] ss:$8 sm:$0xf]
  %v1586 = vlaneseq
  %v1587 = vshrl.u32 %v1586, 7
  %v1588 = vsub.s32 0, %v1587
  %v1589 = vrot.slane %v1584, %v1588
  %v1590 = vlaneseq
  %v1591 = vshrl.u32 %v1590, 7
  %v1592 = vsub.s32 1, %v1591
  %v1593 = vrot.slane %v1584, %v1592
  %v1594 = vlaneseq
  %v1595 = vshrl.u32 %v1594, 7
  %v1596 = vsub.s32 2, %v1595
  %v1597 = vrot.slane %v1584, %v1596
  %v1598 = vlaneseq
  %v1599 = vshrl.u32 %v1598, 7
  %v1600 = vsub.s32 3, %v1599
  %v1601 = vrot.slane %v1584, %v1600
  %v1606 = vmul.f32 %v1582, %v1589
  %v1607 = vmul.f32 %v1581, %v1593
  %v1608 = vmul.f32 %v1580, %v1597
  %v1609 = vmul.f32 %v1583, %v1601
  %v1610 = vpack.c.bf16 %v1606, %v1313
  %v1611 = vpack.c.bf16 %v1607, %v1315
  %v1612 = vpack.c.bf16 %v1608, %v1354
  %v1613 = vpack.c.bf16 %v1609, %v1356
  %v1618 = vunpack.c.l.b16 %v1610
  %v1619 = vunpack.c.l.b16 %v1611
  %v1620 = vunpack.c.l.b16 %v1612
  %v1621 = vunpack.c.l.b16 %v1613
  %v1622 = vunpack.c.h.b16 %v1610
  %v1623 = vunpack.c.h.b16 %v1611
  %v1624 = vunpack.c.h.b16 %v1612
  %v1625 = vunpack.c.h.b16 %v1613
  %v1626 = vpack.c.b16 %v1619, %v1618
  %v1627 = vpack.c.b16 %v1621, %v1620
  %v1628 = vpack.c.b16 %v1623, %v1622
  %v1629 = vpack.c.b16 %v1625, %v1624
  %1634 = vst [vmem:[#allocation2 + $0x40] sm:$0xff] %v1626
  %1635 = vst [vmem:[#allocation2 + $0x48] sm:$0xff] %v1627
  %1636 = vst [vmem:[#allocation2 + $0x50] sm:$0xff] %v1628
  %1637 = vst [vmem:[#allocation2 + $0x58] sm:$0xff] %v1629
  %1638 = vrot.lane.b32.xlu0 %v1313, 113
  %v1639 = vpop.permute.xlu0 %1638
  %1640 = vrot.lane.b32.xlu0 %v1315, 113
  %v1641 = vpop.permute.xlu0 %1640
  %1642 = vrot.lane.b32.xlu0 %v1354, 113
  %v1643 = vpop.permute.xlu0 %1642
  %1644 = vrot.lane.b32.xlu0 %v1356, 113
  %v1645 = vpop.permute.xlu0 %1644
  %v1646 = vsel %vm319, %v1643, %v1645
  %v1647 = vsel %vm319, %v1641, %v1643
  %v1648 = vsel %vm319, %v1639, %v1641
  %v1649 = vsel %vm319, %v1645, %v1639
  %v1650 = vld [vmem:[%s324] ss:$8 sm:$0xf]
  %v1652 = vlaneseq
  %v1653 = vshrl.u32 %v1652, 7
  %v1654 = vsub.s32 0, %v1653
  %v1655 = vrot.slane %v1650, %v1654
  %v1656 = vlaneseq
  %v1657 = vshrl.u32 %v1656, 7
  %v1658 = vsub.s32 1, %v1657
  %v1659 = vrot.slane %v1650, %v1658
  %v1660 = vlaneseq
  %v1661 = vshrl.u32 %v1660, 7
  %v1662 = vsub.s32 2, %v1661
  %v1663 = vrot.slane %v1650, %v1662
  %v1664 = vlaneseq
  %v1665 = vshrl.u32 %v1664, 7
  %v1666 = vsub.s32 3, %v1665
  %v1667 = vrot.slane %v1650, %v1666
  %v1672 = vmul.f32 %v1648, %v1655
  %v1673 = vmul.f32 %v1647, %v1659
  %v1674 = vmul.f32 %v1646, %v1663
  %v1675 = vmul.f32 %v1649, %v1667
  %1676 = vrot.lane.b32.xlu0 %v1313, 112
  %v1677 = vpop.permute.xlu0 %1676
  %1678 = vrot.lane.b32.xlu0 %v1315, 112
  %v1679 = vpop.permute.xlu0 %1678
  %1680 = vrot.lane.b32.xlu0 %v1354, 112
  %v1681 = vpop.permute.xlu0 %1680
  %1682 = vrot.lane.b32.xlu0 %v1356, 112
  %v1683 = vpop.permute.xlu0 %1682
  %v1684 = vsel %vm359, %v1681, %v1683
  %v1685 = vsel %vm359, %v1679, %v1681
  %v1686 = vsel %vm359, %v1677, %v1679
  %v1687 = vsel %vm359, %v1683, %v1677
  %v1688 = vld [vmem:[%s364] ss:$8 sm:$0xf]
  %v1690 = vlaneseq
  %v1691 = vshrl.u32 %v1690, 7
  %v1692 = vsub.s32 0, %v1691
  %v1693 = vrot.slane %v1688, %v1692
  %v1694 = vlaneseq
  %v1695 = vshrl.u32 %v1694, 7
  %v1696 = vsub.s32 1, %v1695
  %v1697 = vrot.slane %v1688, %v1696
  %v1698 = vlaneseq
  %v1699 = vshrl.u32 %v1698, 7
  %v1700 = vsub.s32 2, %v1699
  %v1701 = vrot.slane %v1688, %v1700
  %v1702 = vlaneseq
  %v1703 = vshrl.u32 %v1702, 7
  %v1704 = vsub.s32 3, %v1703
  %v1705 = vrot.slane %v1688, %v1704
  %v1710 = vmul.f32 %v1686, %v1693
  %v1711 = vmul.f32 %v1685, %v1697
  %v1712 = vmul.f32 %v1684, %v1701
  %v1713 = vmul.f32 %v1687, %v1705
  %v1714 = vpack.c.bf16 %v1710, %v1672
  %v1715 = vpack.c.bf16 %v1711, %v1673
  %v1716 = vpack.c.bf16 %v1712, %v1674
  %v1717 = vpack.c.bf16 %v1713, %v1675
  %v1722 = vunpack.c.l.b16 %v1714
  %v1723 = vunpack.c.l.b16 %v1715
  %v1724 = vunpack.c.l.b16 %v1716
  %v1725 = vunpack.c.l.b16 %v1717
  %v1726 = vunpack.c.h.b16 %v1714
  %v1727 = vunpack.c.h.b16 %v1715
  %v1728 = vunpack.c.h.b16 %v1716
  %v1729 = vunpack.c.h.b16 %v1717
  %v1730 = vpack.c.b16 %v1723, %v1722
  %v1731 = vpack.c.b16 %v1725, %v1724
  %v1732 = vpack.c.b16 %v1727, %v1726
  %v1733 = vpack.c.b16 %v1729, %v1728
  %1738 = vst [vmem:[#allocation2 + $0x60] sm:$0xff] %v1730
  %1739 = vst [vmem:[#allocation2 + $0x68] sm:$0xff] %v1731
  %1740 = vst [vmem:[#allocation2 + $0x70] sm:$0xff] %v1732
  %1741 = vst [vmem:[#allocation2 + $0x78] sm:$0xff] %v1733
  %1742 = vrot.lane.b32.xlu0 %v1313, 111
  %v1743 = vpop.permute.xlu0 %1742
  %1744 = vrot.lane.b32.xlu0 %v1315, 111
  %v1745 = vpop.permute.xlu0 %1744
  %1746 = vrot.lane.b32.xlu0 %v1354, 111
  %v1747 = vpop.permute.xlu0 %1746
  %1748 = vrot.lane.b32.xlu0 %v1356, 111
  %v1749 = vpop.permute.xlu0 %1748
  %v1750 = vsel %vm427, %v1747, %v1749
  %v1751 = vsel %vm427, %v1745, %v1747
  %v1752 = vsel %vm427, %v1743, %v1745
  %v1753 = vsel %vm427, %v1749, %v1743
  %v1754 = vld [vmem:[%s432] ss:$8 sm:$0xf]
  %v1756 = vlaneseq
  %v1757 = vshrl.u32 %v1756, 7
  %v1758 = vsub.s32 0, %v1757
  %v1759 = vrot.slane %v1754, %v1758
  %v1760 = vlaneseq
  %v1761 = vshrl.u32 %v1760, 7
  %v1762 = vsub.s32 1, %v1761
  %v1763 = vrot.slane %v1754, %v1762
  %v1764 = vlaneseq
  %v1765 = vshrl.u32 %v1764, 7
  %v1766 = vsub.s32 2, %v1765
  %v1767 = vrot.slane %v1754, %v1766
  %v1768 = vlaneseq
  %v1769 = vshrl.u32 %v1768, 7
  %v1770 = vsub.s32 3, %v1769
  %v1771 = vrot.slane %v1754, %v1770
  %v1776 = vmul.f32 %v1752, %v1759
  %v1777 = vmul.f32 %v1751, %v1763
  %v1778 = vmul.f32 %v1750, %v1767
  %v1779 = vmul.f32 %v1753, %v1771
  %v1780 = vpack.c.bf16 0.0, %v1776
  %v1781 = vpack.c.bf16 0.0, %v1777
  %v1782 = vpack.c.bf16 0.0, %v1778
  %v1783 = vpack.c.bf16 0.0, %v1779
  %v1788 = vunpack.c.l.b16 %v1780
  %v1789 = vunpack.c.l.b16 %v1781
  %v1790 = vunpack.c.l.b16 %v1782
  %v1791 = vunpack.c.l.b16 %v1783
  %v1792 = vunpack.c.h.b16 %v1780
  %v1793 = vunpack.c.h.b16 %v1781
  %v1794 = vunpack.c.h.b16 %v1782
  %v1795 = vunpack.c.h.b16 %v1783
  %v1796 = vpack.c.b16 %v1789, %v1788
  %v1797 = vpack.c.b16 %v1791, %v1790
  %v1798 = vpack.c.b16 %v1793, %v1792
  %v1799 = vpack.c.b16 %v1795, %v1794
  %1804 = vst [vmem:[#allocation2 + $0x80] sm:$0xff] %v1796
  %1805 = vst [vmem:[#allocation2 + $0x88] sm:$0xff] %v1797
  %1806 = vst [vmem:[#allocation2 + $0x90] sm:$0xff] %v1798
  %1807 = vst [vmem:[#allocation2 + $0x98] sm:$0xff] %v1799
  %v1808 = vld [vmem:[#allocation2] sm:$0xff]
  %v1809 = vld [vmem:[#allocation2 + $0x8] sm:$0xff]
  %v1810 = vld [vmem:[#allocation2 + $0x10] sm:$0xff]
  %v1811 = vld [vmem:[#allocation2 + $0x18] sm:$0xff]
  %v1812 = vld [vmem:[#allocation2 + $0x20] sm:$0xff]
  %v1813 = vld [vmem:[#allocation2 + $0x28] sm:$0xff]
  %v1814 = vld [vmem:[#allocation2 + $0x30] sm:$0xff]
  %v1815 = vld [vmem:[#allocation2 + $0x38] sm:$0xff]
  %v1816 = vld [vmem:[#allocation2 + $0x40] sm:$0xff]
  %v1817 = vld [vmem:[#allocation2 + $0x48] sm:$0xff]
  %v1818 = vld [vmem:[#allocation2 + $0x50] sm:$0xff]
  %v1819 = vld [vmem:[#allocation2 + $0x58] sm:$0xff]
  %v1820 = vld [vmem:[#allocation2 + $0x60] sm:$0xff]
  %v1821 = vld [vmem:[#allocation2 + $0x68] sm:$0xff]
  %v1822 = vld [vmem:[#allocation2 + $0x70] sm:$0xff]
  %v1823 = vld [vmem:[#allocation2 + $0x78] sm:$0xff]
  %v1824 = vld [vmem:[#allocation2 + $0x80] sm:$0xff]
  %v1825 = vld [vmem:[#allocation2 + $0x88] sm:$0xff]
  %v1826 = vld [vmem:[#allocation2 + $0x90] sm:$0xff]
  %v1827 = vld [vmem:[#allocation2 + $0x98] sm:$0xff]
  %1829 = vset.pattern.permute.xlu0 0
  %1830 = vperm.xlu0 %1829, %v1363
  %v1831 = vpop.permute.xlu0 %1830
  %v1853 = vunpack.c.l.b16 %v1808
  %v1854 = vunpack.c.h.b16 %v1808
  %v1855 = vunpack.c.l.b16 %v1809
  %v1856 = vunpack.c.h.b16 %v1809
  %v1857 = vunpack.c.l.b16 %v1810
  %v1858 = vunpack.c.h.b16 %v1810
  %v1859 = vunpack.c.l.b16 %v1811
  %v1860 = vunpack.c.h.b16 %v1811
  %v1861 = vunpack.c.l.b16 %v1812
  %v1862 = vunpack.c.h.b16 %v1812
  %v1863 = vunpack.c.l.b16 %v1813
  %v1864 = vunpack.c.h.b16 %v1813
  %v1865 = vunpack.c.l.b16 %v1814
  %v1866 = vunpack.c.h.b16 %v1814
  %v1867 = vunpack.c.l.b16 %v1815
  %v1868 = vunpack.c.h.b16 %v1815
  %v1869 = vunpack.c.l.b16 %v1816
  %v1870 = vunpack.c.h.b16 %v1816
  %v1871 = vunpack.c.l.b16 %v1817
  %v1872 = vunpack.c.h.b16 %v1817
  %v1873 = vunpack.c.l.b16 %v1818
  %v1874 = vunpack.c.h.b16 %v1818
  %v1875 = vunpack.c.l.b16 %v1819
  %v1876 = vunpack.c.h.b16 %v1819
  %v1877 = vunpack.c.l.b16 %v1820
  %v1878 = vunpack.c.h.b16 %v1820
  %v1879 = vunpack.c.l.b16 %v1821
  %v1880 = vunpack.c.h.b16 %v1821
  %v1881 = vunpack.c.l.b16 %v1822
  %v1882 = vunpack.c.h.b16 %v1822
  %v1883 = vunpack.c.l.b16 %v1823
  %v1884 = vunpack.c.h.b16 %v1823
  %v1885 = vunpack.c.l.b16 %v1824
  %v1886 = vunpack.c.h.b16 %v1824
  %v1887 = vunpack.c.l.b16 %v1825
  %v1888 = vunpack.c.h.b16 %v1825
  %v1889 = vunpack.c.l.b16 %v1826
  %v1890 = vunpack.c.h.b16 %v1826
  %v1891 = vunpack.c.l.b16 %v1827
  %v1892 = vunpack.c.h.b16 %v1827
  %v1893 = vpack.c.b16 %v1857, %v1853
  %v1894 = vpack.c.b16 %v1858, %v1854
  %v1895 = vpack.c.b16 %v1859, %v1855
  %v1896 = vpack.c.b16 %v1860, %v1856
  %v1897 = vpack.c.b16 %v1865, %v1861
  %v1898 = vpack.c.b16 %v1866, %v1862
  %v1899 = vpack.c.b16 %v1867, %v1863
  %v1900 = vpack.c.b16 %v1868, %v1864
  %v1901 = vpack.c.b16 %v1873, %v1869
  %v1902 = vpack.c.b16 %v1874, %v1870
  %v1903 = vpack.c.b16 %v1875, %v1871
  %v1904 = vpack.c.b16 %v1876, %v1872
  %v1905 = vpack.c.b16 %v1881, %v1877
  %v1906 = vpack.c.b16 %v1882, %v1878
  %v1907 = vpack.c.b16 %v1883, %v1879
  %v1908 = vpack.c.b16 %v1884, %v1880
  %v1909 = vpack.c.b16 %v1889, %v1885
  %v1910 = vpack.c.b16 %v1890, %v1886
  %v1911 = vpack.c.b16 %v1891, %v1887
  %v1912 = vpack.c.b16 %v1892, %v1888
  %v1934 = vsel %vm612, %v1361, 0
  %1936 = vmatprep.subr.bf16.mxu0 0
  %1937 = vmatpush1.bf16.msra.mxu0 0
  %1938 = vmatprep.subr.bf16.mxu0 0
  %1939 = vmatpush1.bf16.msra.mxu0 0
  %1940 = vmatprep.subr.bf16.mxu0 0
  %1941 = vmatpush1.bf16.msra.mxu0 0
  %1942 = vmatprep.subr.bf16.mxu0 %v1910
  %1943 = vmatpush1.bf16.msra.mxu0 %v1909
  %1944 = vmatprep.subr.bf16.mxu0 %v1906
  %1945 = vmatpush1.bf16.msra.mxu0 %v1905
  %1946 = vmatprep.subr.bf16.mxu0 %v1902
  %1947 = vmatpush1.bf16.msra.mxu0 %v1901
  %1948 = vmatprep.subr.bf16.mxu0 %v1898
  %1949 = vmatpush1.bf16.msra.mxu0 %v1897
  %1950 = vmatprep.subr.bf16.mxu0 %v1894
  %1951 = vmatpush1.bf16.msra.mxu0 %v1893
  %1952 = vmatprep.subr.bf16.mxu0 0
  %1953 = vmatpush2.bf16.msra.mxu0 0
  %1954 = vmatprep.subr.bf16.mxu0 0
  %1955 = vmatpush2.bf16.msra.mxu0 0
  %1956 = vmatprep.subr.bf16.mxu0 0
  %1957 = vmatpush2.bf16.msra.mxu0 0
  %1958 = vmatprep.subr.bf16.mxu0 0
  %1959 = vmatpush2.bf16.msra.mxu0 0
  %1960 = vmatprep.subr.bf16.mxu0 0
  %1961 = vmatpush2.bf16.msra.mxu0 0
  %1962 = vmatprep.subr.bf16.mxu0 0
  %1963 = vmatpush2.bf16.msra.mxu0 0
  %1964 = vmatprep.subr.bf16.mxu0 0
  %1965 = vmatpush2.bf16.msra.mxu0 0
  %1966 = vmatprep.subr.bf16.mxu0 0
  %1967 = vmatpush2.bf16.msra.mxu0 0
  %1968 = vmatprep.mubr.bf16.mxu0 0
  %1969 = vmatmul.mubr.bf16.gmra.mxu0 %v1934
  %v1970 = vpop.f32.mrf.mxu0
  %v1971 = vadd.f32 %v1831, %v1970
  %v1972 = vpop.f32.mrf.mxu0
  %v1973 = vadd.f32 %v1831, %v1972
  %v1974 = vpop.f32.mrf.mxu0
  %v1975 = vpop.f32.mrf.mxu0
  %1976 = vdwg.mxu0
  %1977 = vmatprep.subr.bf16.mxu0 0
  %1978 = vmatpush1.bf16.msra.mxu0 0
  %1979 = vmatprep.subr.bf16.mxu0 0
  %1980 = vmatpush1.bf16.msra.mxu0 0
  %1981 = vmatprep.subr.bf16.mxu0 0
  %1982 = vmatpush1.bf16.msra.mxu0 0
  %1983 = vmatprep.subr.bf16.mxu0 %v1912
  %1984 = vmatpush1.bf16.msra.mxu0 %v1911
  %1985 = vmatprep.subr.bf16.mxu0 %v1908
  %1986 = vmatpush1.bf16.msra.mxu0 %v1907
  %1987 = vmatprep.subr.bf16.mxu0 %v1904
  %1988 = vmatpush1.bf16.msra.mxu0 %v1903
  %1989 = vmatprep.subr.bf16.mxu0 %v1900
  %1990 = vmatpush1.bf16.msra.mxu0 %v1899
  %1991 = vmatprep.subr.bf16.mxu0 %v1896
  %1992 = vmatpush1.bf16.msra.mxu0 %v1895
  %1993 = vmatprep.subr.bf16.mxu0 0
  %1994 = vmatpush2.bf16.msra.mxu0 0
  %1995 = vmatprep.subr.bf16.mxu0 0
  %1996 = vmatpush2.bf16.msra.mxu0 0
  %1997 = vmatprep.subr.bf16.mxu0 0
  %1998 = vmatpush2.bf16.msra.mxu0 0
  %1999 = vmatprep.subr.bf16.mxu0 0
  %2000 = vmatpush2.bf16.msra.mxu0 0
  %2001 = vmatprep.subr.bf16.mxu0 0
  %2002 = vmatpush2.bf16.msra.mxu0 0
  %2003 = vmatprep.subr.bf16.mxu0 0
  %2004 = vmatpush2.bf16.msra.mxu0 0
  %2005 = vmatprep.subr.bf16.mxu0 0
  %2006 = vmatpush2.bf16.msra.mxu0 0
  %2007 = vmatprep.subr.bf16.mxu0 0
  %2008 = vmatpush2.bf16.msra.mxu0 0
  %2009 = vmatprep.mubr.bf16.mxu0 0
  %2010 = vmatmul.mubr.bf16.gmra.mxu0 %v1934
  %v2011 = vpop.f32.mrf.mxu0
  %v2012 = vadd.f32 %v1831, %v2011
  %v2013 = vpop.f32.mrf.mxu0
  %v2014 = vadd.f32 %v1831, %v2013
  %v2015 = vpop.f32.mrf.mxu0
  %v2016 = vpop.f32.mrf.mxu0
  %2017 = vdwg.mxu0
  %v2018 = vtanh.pop %v1971
  %v2019 = vtanh.pop %v1973
  %v2020 = vtanh.pop %v2012
  %v2021 = vtanh.pop %v2014
  %s2022 = scalar_lea.vmem %s2, 12
  %v2023 = vld [vmem:[%s2022] sm:$0xf]
  %s2024 = scalar_lea.vmem %s3, 24
  %v2025 = vld [vmem:[%s2024] sm:$0xff]
  %2026 = vrot.lane.b32.xlu0 %v2018, 17
  %v2027 = vpop.permute.xlu0 %2026
  %2028 = vrot.lane.b32.xlu0 %v2019, 17
  %v2029 = vpop.permute.xlu0 %2028
  %2030 = vrot.lane.b32.xlu0 %v2020, 17
  %v2031 = vpop.permute.xlu0 %2030
  %2032 = vrot.lane.b32.xlu0 %v2021, 17
  %v2033 = vpop.permute.xlu0 %2032
  %v2034 = vsel %vm36, %v2031, %v2033
  %v2035 = vsel %vm36, %v2029, %v2031
  %v2036 = vsel %vm36, %v2027, %v2029
  %v2037 = vsel %vm36, %v2033, %v2027
  %v2038 = vld [vmem:[%s1] ss:$8 sm:$0xf]
  %v2040 = vlaneseq
  %v2041 = vshrl.u32 %v2040, 7
  %v2042 = vsub.s32 0, %v2041
  %v2043 = vrot.slane %v2038, %v2042
  %v2044 = vlaneseq
  %v2045 = vshrl.u32 %v2044, 7
  %v2046 = vsub.s32 1, %v2045
  %v2047 = vrot.slane %v2038, %v2046
  %v2048 = vlaneseq
  %v2049 = vshrl.u32 %v2048, 7
  %v2050 = vsub.s32 2, %v2049
  %v2051 = vrot.slane %v2038, %v2050
  %v2052 = vlaneseq
  %v2053 = vshrl.u32 %v2052, 7
  %v2054 = vsub.s32 3, %v2053
  %v2055 = vrot.slane %v2038, %v2054
  %v2060 = vmul.f32 %v2037, %v2043
  %v2061 = vmul.f32 %v2036, %v2047
  %v2062 = vmul.f32 %v2035, %v2051
  %v2063 = vmul.f32 %v2034, %v2055
  %2064 = vrot.lane.b32.xlu0 %v2018, 16
  %v2065 = vpop.permute.xlu0 %2064
  %2066 = vrot.lane.b32.xlu0 %v2019, 16
  %v2067 = vpop.permute.xlu0 %2066
  %2068 = vrot.lane.b32.xlu0 %v2020, 16
  %v2069 = vpop.permute.xlu0 %2068
  %2070 = vrot.lane.b32.xlu0 %v2021, 16
  %v2071 = vpop.permute.xlu0 %2070
  %v2072 = vsel %vm75, %v2069, %v2071
  %v2073 = vsel %vm75, %v2067, %v2069
  %v2074 = vsel %vm75, %v2065, %v2067
  %v2075 = vsel %vm75, %v2071, %v2065
  %v2076 = vld [vmem:[%s80] ss:$8 sm:$0xf]
  %v2078 = vlaneseq
  %v2079 = vshrl.u32 %v2078, 7
  %v2080 = vsub.s32 0, %v2079
  %v2081 = vrot.slane %v2076, %v2080
  %v2082 = vlaneseq
  %v2083 = vshrl.u32 %v2082, 7
  %v2084 = vsub.s32 1, %v2083
  %v2085 = vrot.slane %v2076, %v2084
  %v2086 = vlaneseq
  %v2087 = vshrl.u32 %v2086, 7
  %v2088 = vsub.s32 2, %v2087
  %v2089 = vrot.slane %v2076, %v2088
  %v2090 = vlaneseq
  %v2091 = vshrl.u32 %v2090, 7
  %v2092 = vsub.s32 3, %v2091
  %v2093 = vrot.slane %v2076, %v2092
  %v2098 = vmul.f32 %v2075, %v2081
  %v2099 = vmul.f32 %v2074, %v2085
  %v2100 = vmul.f32 %v2073, %v2089
  %v2101 = vmul.f32 %v2072, %v2093
  %v2102 = vpack.c.bf16 %v2098, %v2060
  %v2103 = vpack.c.bf16 %v2099, %v2061
  %v2104 = vpack.c.bf16 %v2100, %v2062
  %v2105 = vpack.c.bf16 %v2101, %v2063
  %v2110 = vunpack.c.l.b16 %v2102
  %v2111 = vunpack.c.l.b16 %v2103
  %v2112 = vunpack.c.l.b16 %v2104
  %v2113 = vunpack.c.l.b16 %v2105
  %v2114 = vunpack.c.h.b16 %v2102
  %v2115 = vunpack.c.h.b16 %v2103
  %v2116 = vunpack.c.h.b16 %v2104
  %v2117 = vunpack.c.h.b16 %v2105
  %v2118 = vpack.c.b16 %v2111, %v2110
  %v2119 = vpack.c.b16 %v2113, %v2112
  %v2120 = vpack.c.b16 %v2115, %v2114
  %v2121 = vpack.c.b16 %v2117, %v2116
  %2126 = vst [vmem:[#allocation2] sm:$0xff] %v2118
  %2127 = vst [vmem:[#allocation2 + $0x8] sm:$0xff] %v2119
  %2128 = vst [vmem:[#allocation2 + $0x10] sm:$0xff] %v2120
  %2129 = vst [vmem:[#allocation2 + $0x18] sm:$0xff] %v2121
  %2130 = vrot.lane.b32.xlu0 %v2018, 15
  %v2131 = vpop.permute.xlu0 %2130
  %2132 = vrot.lane.b32.xlu0 %v2019, 15
  %v2133 = vpop.permute.xlu0 %2132
  %2134 = vrot.lane.b32.xlu0 %v2020, 15
  %v2135 = vpop.permute.xlu0 %2134
  %2136 = vrot.lane.b32.xlu0 %v2021, 15
  %v2137 = vpop.permute.xlu0 %2136
  %v2138 = vsel %vm143, %v2135, %v2137
  %v2139 = vsel %vm143, %v2133, %v2135
  %v2140 = vsel %vm143, %v2131, %v2133
  %v2141 = vsel %vm143, %v2137, %v2131
  %v2142 = vld [vmem:[%s148] ss:$8 sm:$0xf]
  %v2144 = vlaneseq
  %v2145 = vshrl.u32 %v2144, 7
  %v2146 = vsub.s32 0, %v2145
  %v2147 = vrot.slane %v2142, %v2146
  %v2148 = vlaneseq
  %v2149 = vshrl.u32 %v2148, 7
  %v2150 = vsub.s32 1, %v2149
  %v2151 = vrot.slane %v2142, %v2150
  %v2152 = vlaneseq
  %v2153 = vshrl.u32 %v2152, 7
  %v2154 = vsub.s32 2, %v2153
  %v2155 = vrot.slane %v2142, %v2154
  %v2156 = vlaneseq
  %v2157 = vshrl.u32 %v2156, 7
  %v2158 = vsub.s32 3, %v2157
  %v2159 = vrot.slane %v2142, %v2158
  %v2164 = vmul.f32 %v2141, %v2147
  %v2165 = vmul.f32 %v2140, %v2151
  %v2166 = vmul.f32 %v2139, %v2155
  %v2167 = vmul.f32 %v2138, %v2159
  %2168 = vrot.lane.b32.xlu0 %v2018, 1
  %v2169 = vpop.permute.xlu0 %2168
  %2170 = vrot.lane.b32.xlu0 %v2019, 1
  %v2171 = vpop.permute.xlu0 %2170
  %2172 = vrot.lane.b32.xlu0 %v2020, 1
  %v2173 = vpop.permute.xlu0 %2172
  %2174 = vrot.lane.b32.xlu0 %v2021, 1
  %v2175 = vpop.permute.xlu0 %2174
  %v2176 = vsel %vm183, %v2173, %v2175
  %v2177 = vsel %vm183, %v2171, %v2173
  %v2178 = vsel %vm183, %v2169, %v2171
  %v2179 = vsel %vm183, %v2175, %v2169
  %v2180 = vld [vmem:[%s188] ss:$8 sm:$0xf]
  %v2182 = vlaneseq
  %v2183 = vshrl.u32 %v2182, 7
  %v2184 = vsub.s32 0, %v2183
  %v2185 = vrot.slane %v2180, %v2184
  %v2186 = vlaneseq
  %v2187 = vshrl.u32 %v2186, 7
  %v2188 = vsub.s32 1, %v2187
  %v2189 = vrot.slane %v2180, %v2188
  %v2190 = vlaneseq
  %v2191 = vshrl.u32 %v2190, 7
  %v2192 = vsub.s32 2, %v2191
  %v2193 = vrot.slane %v2180, %v2192
  %v2194 = vlaneseq
  %v2195 = vshrl.u32 %v2194, 7
  %v2196 = vsub.s32 3, %v2195
  %v2197 = vrot.slane %v2180, %v2196
  %v2202 = vmul.f32 %v2179, %v2185
  %v2203 = vmul.f32 %v2178, %v2189
  %v2204 = vmul.f32 %v2177, %v2193
  %v2205 = vmul.f32 %v2176, %v2197
  %v2206 = vpack.c.bf16 %v2202, %v2164
  %v2207 = vpack.c.bf16 %v2203, %v2165
  %v2208 = vpack.c.bf16 %v2204, %v2166
  %v2209 = vpack.c.bf16 %v2205, %v2167
  %v2214 = vunpack.c.l.b16 %v2206
  %v2215 = vunpack.c.l.b16 %v2207
  %v2216 = vunpack.c.l.b16 %v2208
  %v2217 = vunpack.c.l.b16 %v2209
  %v2218 = vunpack.c.h.b16 %v2206
  %v2219 = vunpack.c.h.b16 %v2207
  %v2220 = vunpack.c.h.b16 %v2208
  %v2221 = vunpack.c.h.b16 %v2209
  %v2222 = vpack.c.b16 %v2215, %v2214
  %v2223 = vpack.c.b16 %v2217, %v2216
  %v2224 = vpack.c.b16 %v2219, %v2218
  %v2225 = vpack.c.b16 %v2221, %v2220
  %2230 = vst [vmem:[#allocation2 + $0x20] sm:$0xff] %v2222
  %2231 = vst [vmem:[#allocation2 + $0x28] sm:$0xff] %v2223
  %2232 = vst [vmem:[#allocation2 + $0x30] sm:$0xff] %v2224
  %2233 = vst [vmem:[#allocation2 + $0x38] sm:$0xff] %v2225
  %2234 = vrot.lane.b32.xlu0 %v2018, 127
  %v2235 = vpop.permute.xlu0 %2234
  %2236 = vrot.lane.b32.xlu0 %v2019, 127
  %v2237 = vpop.permute.xlu0 %2236
  %2238 = vrot.lane.b32.xlu0 %v2020, 127
  %v2239 = vpop.permute.xlu0 %2238
  %2240 = vrot.lane.b32.xlu0 %v2021, 127
  %v2241 = vpop.permute.xlu0 %2240
  %v2242 = vsel %vm251, %v2239, %v2241
  %v2243 = vsel %vm251, %v2237, %v2239
  %v2244 = vsel %vm251, %v2235, %v2237
  %v2245 = vsel %vm251, %v2241, %v2235
  %v2246 = vld [vmem:[%s256] ss:$8 sm:$0xf]
  %v2248 = vlaneseq
  %v2249 = vshrl.u32 %v2248, 7
  %v2250 = vsub.s32 0, %v2249
  %v2251 = vrot.slane %v2246, %v2250
  %v2252 = vlaneseq
  %v2253 = vshrl.u32 %v2252, 7
  %v2254 = vsub.s32 1, %v2253
  %v2255 = vrot.slane %v2246, %v2254
  %v2256 = vlaneseq
  %v2257 = vshrl.u32 %v2256, 7
  %v2258 = vsub.s32 2, %v2257
  %v2259 = vrot.slane %v2246, %v2258
  %v2260 = vlaneseq
  %v2261 = vshrl.u32 %v2260, 7
  %v2262 = vsub.s32 3, %v2261
  %v2263 = vrot.slane %v2246, %v2262
  %v2268 = vmul.f32 %v2244, %v2251
  %v2269 = vmul.f32 %v2243, %v2255
  %v2270 = vmul.f32 %v2242, %v2259
  %v2271 = vmul.f32 %v2245, %v2263
  %v2272 = vpack.c.bf16 %v2268, %v2018
  %v2273 = vpack.c.bf16 %v2269, %v2019
  %v2274 = vpack.c.bf16 %v2270, %v2020
  %v2275 = vpack.c.bf16 %v2271, %v2021
  %v2280 = vunpack.c.l.b16 %v2272
  %v2281 = vunpack.c.l.b16 %v2273
  %v2282 = vunpack.c.l.b16 %v2274
  %v2283 = vunpack.c.l.b16 %v2275
  %v2284 = vunpack.c.h.b16 %v2272
  %v2285 = vunpack.c.h.b16 %v2273
  %v2286 = vunpack.c.h.b16 %v2274
  %v2287 = vunpack.c.h.b16 %v2275
  %v2288 = vpack.c.b16 %v2281, %v2280
  %v2289 = vpack.c.b16 %v2283, %v2282
  %v2290 = vpack.c.b16 %v2285, %v2284
  %v2291 = vpack.c.b16 %v2287, %v2286
  %2296 = vst [vmem:[#allocation2 + $0x40] sm:$0xff] %v2288
  %2297 = vst [vmem:[#allocation2 + $0x48] sm:$0xff] %v2289
  %2298 = vst [vmem:[#allocation2 + $0x50] sm:$0xff] %v2290
  %2299 = vst [vmem:[#allocation2 + $0x58] sm:$0xff] %v2291
  %2300 = vrot.lane.b32.xlu0 %v2018, 113
  %v2301 = vpop.permute.xlu0 %2300
  %2302 = vrot.lane.b32.xlu0 %v2019, 113
  %v2303 = vpop.permute.xlu0 %2302
  %2304 = vrot.lane.b32.xlu0 %v2020, 113
  %v2305 = vpop.permute.xlu0 %2304
  %2306 = vrot.lane.b32.xlu0 %v2021, 113
  %v2307 = vpop.permute.xlu0 %2306
  %v2308 = vsel %vm319, %v2305, %v2307
  %v2309 = vsel %vm319, %v2303, %v2305
  %v2310 = vsel %vm319, %v2301, %v2303
  %v2311 = vsel %vm319, %v2307, %v2301
  %v2312 = vld [vmem:[%s324] ss:$8 sm:$0xf]
  %v2314 = vlaneseq
  %v2315 = vshrl.u32 %v2314, 7
  %v2316 = vsub.s32 0, %v2315
  %v2317 = vrot.slane %v2312, %v2316
  %v2318 = vlaneseq
  %v2319 = vshrl.u32 %v2318, 7
  %v2320 = vsub.s32 1, %v2319
  %v2321 = vrot.slane %v2312, %v2320
  %v2322 = vlaneseq
  %v2323 = vshrl.u32 %v2322, 7
  %v2324 = vsub.s32 2, %v2323
  %v2325 = vrot.slane %v2312, %v2324
  %v2326 = vlaneseq
  %v2327 = vshrl.u32 %v2326, 7
  %v2328 = vsub.s32 3, %v2327
  %v2329 = vrot.slane %v2312, %v2328
  %v2334 = vmul.f32 %v2310, %v2317
  %v2335 = vmul.f32 %v2309, %v2321
  %v2336 = vmul.f32 %v2308, %v2325
  %v2337 = vmul.f32 %v2311, %v2329
  %2338 = vrot.lane.b32.xlu0 %v2018, 112
  %v2339 = vpop.permute.xlu0 %2338
  %2340 = vrot.lane.b32.xlu0 %v2019, 112
  %v2341 = vpop.permute.xlu0 %2340
  %2342 = vrot.lane.b32.xlu0 %v2020, 112
  %v2343 = vpop.permute.xlu0 %2342
  %2344 = vrot.lane.b32.xlu0 %v2021, 112
  %v2345 = vpop.permute.xlu0 %2344
  %v2346 = vsel %vm359, %v2343, %v2345
  %v2347 = vsel %vm359, %v2341, %v2343
  %v2348 = vsel %vm359, %v2339, %v2341
  %v2349 = vsel %vm359, %v2345, %v2339
  %v2350 = vld [vmem:[%s364] ss:$8 sm:$0xf]
  %v2352 = vlaneseq
  %v2353 = vshrl.u32 %v2352, 7
  %v2354 = vsub.s32 0, %v2353
  %v2355 = vrot.slane %v2350, %v2354
  %v2356 = vlaneseq
  %v2357 = vshrl.u32 %v2356, 7
  %v2358 = vsub.s32 1, %v2357
  %v2359 = vrot.slane %v2350, %v2358
  %v2360 = vlaneseq
  %v2361 = vshrl.u32 %v2360, 7
  %v2362 = vsub.s32 2, %v2361
  %v2363 = vrot.slane %v2350, %v2362
  %v2364 = vlaneseq
  %v2365 = vshrl.u32 %v2364, 7
  %v2366 = vsub.s32 3, %v2365
  %v2367 = vrot.slane %v2350, %v2366
  %v2372 = vmul.f32 %v2348, %v2355
  %v2373 = vmul.f32 %v2347, %v2359
  %v2374 = vmul.f32 %v2346, %v2363
  %v2375 = vmul.f32 %v2349, %v2367
  %v2376 = vpack.c.bf16 %v2372, %v2334
  %v2377 = vpack.c.bf16 %v2373, %v2335
  %v2378 = vpack.c.bf16 %v2374, %v2336
  %v2379 = vpack.c.bf16 %v2375, %v2337
  %v2384 = vunpack.c.l.b16 %v2376
  %v2385 = vunpack.c.l.b16 %v2377
  %v2386 = vunpack.c.l.b16 %v2378
  %v2387 = vunpack.c.l.b16 %v2379
  %v2388 = vunpack.c.h.b16 %v2376
  %v2389 = vunpack.c.h.b16 %v2377
  %v2390 = vunpack.c.h.b16 %v2378
  %v2391 = vunpack.c.h.b16 %v2379
  %v2392 = vpack.c.b16 %v2385, %v2384
  %v2393 = vpack.c.b16 %v2387, %v2386
  %v2394 = vpack.c.b16 %v2389, %v2388
  %v2395 = vpack.c.b16 %v2391, %v2390
  %2400 = vst [vmem:[#allocation2 + $0x60] sm:$0xff] %v2392
  %2401 = vst [vmem:[#allocation2 + $0x68] sm:$0xff] %v2393
  %2402 = vst [vmem:[#allocation2 + $0x70] sm:$0xff] %v2394
  %2403 = vst [vmem:[#allocation2 + $0x78] sm:$0xff] %v2395
  %2404 = vrot.lane.b32.xlu0 %v2018, 111
  %v2405 = vpop.permute.xlu0 %2404
  %2406 = vrot.lane.b32.xlu0 %v2019, 111
  %v2407 = vpop.permute.xlu0 %2406
  %2408 = vrot.lane.b32.xlu0 %v2020, 111
  %v2409 = vpop.permute.xlu0 %2408
  %2410 = vrot.lane.b32.xlu0 %v2021, 111
  %v2411 = vpop.permute.xlu0 %2410
  %v2412 = vsel %vm427, %v2409, %v2411
  %v2413 = vsel %vm427, %v2407, %v2409
  %v2414 = vsel %vm427, %v2405, %v2407
  %v2415 = vsel %vm427, %v2411, %v2405
  %v2416 = vld [vmem:[%s432] ss:$8 sm:$0xf]
  %v2418 = vlaneseq
  %v2419 = vshrl.u32 %v2418, 7
  %v2420 = vsub.s32 0, %v2419
  %v2421 = vrot.slane %v2416, %v2420
  %v2422 = vlaneseq
  %v2423 = vshrl.u32 %v2422, 7
  %v2424 = vsub.s32 1, %v2423
  %v2425 = vrot.slane %v2416, %v2424
  %v2426 = vlaneseq
  %v2427 = vshrl.u32 %v2426, 7
  %v2428 = vsub.s32 2, %v2427
  %v2429 = vrot.slane %v2416, %v2428
  %v2430 = vlaneseq
  %v2431 = vshrl.u32 %v2430, 7
  %v2432 = vsub.s32 3, %v2431
  %v2433 = vrot.slane %v2416, %v2432
  %v2438 = vmul.f32 %v2414, %v2421
  %v2439 = vmul.f32 %v2413, %v2425
  %v2440 = vmul.f32 %v2412, %v2429
  %v2441 = vmul.f32 %v2415, %v2433
  %v2442 = vpack.c.bf16 0.0, %v2438
  %v2443 = vpack.c.bf16 0.0, %v2439
  %v2444 = vpack.c.bf16 0.0, %v2440
  %v2445 = vpack.c.bf16 0.0, %v2441
  %v2450 = vunpack.c.l.b16 %v2442
  %v2451 = vunpack.c.l.b16 %v2443
  %v2452 = vunpack.c.l.b16 %v2444
  %v2453 = vunpack.c.l.b16 %v2445
  %v2454 = vunpack.c.h.b16 %v2442
  %v2455 = vunpack.c.h.b16 %v2443
  %v2456 = vunpack.c.h.b16 %v2444
  %v2457 = vunpack.c.h.b16 %v2445
  %v2458 = vpack.c.b16 %v2451, %v2450
  %v2459 = vpack.c.b16 %v2453, %v2452
  %v2460 = vpack.c.b16 %v2455, %v2454
  %v2461 = vpack.c.b16 %v2457, %v2456
  %2466 = vst [vmem:[#allocation2 + $0x80] sm:$0xff] %v2458
  %2467 = vst [vmem:[#allocation2 + $0x88] sm:$0xff] %v2459
  %2468 = vst [vmem:[#allocation2 + $0x90] sm:$0xff] %v2460
  %2469 = vst [vmem:[#allocation2 + $0x98] sm:$0xff] %v2461
  %v2470 = vld [vmem:[#allocation2] sm:$0xff]
  %v2471 = vld [vmem:[#allocation2 + $0x8] sm:$0xff]
  %v2472 = vld [vmem:[#allocation2 + $0x10] sm:$0xff]
  %v2473 = vld [vmem:[#allocation2 + $0x18] sm:$0xff]
  %v2474 = vld [vmem:[#allocation2 + $0x20] sm:$0xff]
  %v2475 = vld [vmem:[#allocation2 + $0x28] sm:$0xff]
  %v2476 = vld [vmem:[#allocation2 + $0x30] sm:$0xff]
  %v2477 = vld [vmem:[#allocation2 + $0x38] sm:$0xff]
  %v2478 = vld [vmem:[#allocation2 + $0x40] sm:$0xff]
  %v2479 = vld [vmem:[#allocation2 + $0x48] sm:$0xff]
  %v2480 = vld [vmem:[#allocation2 + $0x50] sm:$0xff]
  %v2481 = vld [vmem:[#allocation2 + $0x58] sm:$0xff]
  %v2482 = vld [vmem:[#allocation2 + $0x60] sm:$0xff]
  %v2483 = vld [vmem:[#allocation2 + $0x68] sm:$0xff]
  %v2484 = vld [vmem:[#allocation2 + $0x70] sm:$0xff]
  %v2485 = vld [vmem:[#allocation2 + $0x78] sm:$0xff]
  %v2486 = vld [vmem:[#allocation2 + $0x80] sm:$0xff]
  %v2487 = vld [vmem:[#allocation2 + $0x88] sm:$0xff]
  %v2488 = vld [vmem:[#allocation2 + $0x90] sm:$0xff]
  %v2489 = vld [vmem:[#allocation2 + $0x98] sm:$0xff]
  %2491 = vset.pattern.permute.xlu0 0
  %2492 = vperm.xlu0 %2491, %v2025
  %v2493 = vpop.permute.xlu0 %2492
  %v2515 = vunpack.c.l.b16 %v2470
  %v2516 = vunpack.c.h.b16 %v2470
  %v2517 = vunpack.c.l.b16 %v2471
  %v2518 = vunpack.c.h.b16 %v2471
  %v2519 = vunpack.c.l.b16 %v2472
  %v2520 = vunpack.c.h.b16 %v2472
  %v2521 = vunpack.c.l.b16 %v2473
  %v2522 = vunpack.c.h.b16 %v2473
  %v2523 = vunpack.c.l.b16 %v2474
  %v2524 = vunpack.c.h.b16 %v2474
  %v2525 = vunpack.c.l.b16 %v2475
  %v2526 = vunpack.c.h.b16 %v2475
  %v2527 = vunpack.c.l.b16 %v2476
  %v2528 = vunpack.c.h.b16 %v2476
  %v2529 = vunpack.c.l.b16 %v2477
  %v2530 = vunpack.c.h.b16 %v2477
  %v2531 = vunpack.c.l.b16 %v2478
  %v2532 = vunpack.c.h.b16 %v2478
  %v2533 = vunpack.c.l.b16 %v2479
  %v2534 = vunpack.c.h.b16 %v2479
  %v2535 = vunpack.c.l.b16 %v2480
  %v2536 = vunpack.c.h.b16 %v2480
  %v2537 = vunpack.c.l.b16 %v2481
  %v2538 = vunpack.c.h.b16 %v2481
  %v2539 = vunpack.c.l.b16 %v2482
  %v2540 = vunpack.c.h.b16 %v2482
  %v2541 = vunpack.c.l.b16 %v2483
  %v2542 = vunpack.c.h.b16 %v2483
  %v2543 = vunpack.c.l.b16 %v2484
  %v2544 = vunpack.c.h.b16 %v2484
  %v2545 = vunpack.c.l.b16 %v2485
  %v2546 = vunpack.c.h.b16 %v2485
  %v2547 = vunpack.c.l.b16 %v2486
  %v2548 = vunpack.c.h.b16 %v2486
  %v2549 = vunpack.c.l.b16 %v2487
  %v2550 = vunpack.c.h.b16 %v2487
  %v2551 = vunpack.c.l.b16 %v2488
  %v2552 = vunpack.c.h.b16 %v2488
  %v2553 = vunpack.c.l.b16 %v2489
  %v2554 = vunpack.c.h.b16 %v2489
  %v2555 = vpack.c.b16 %v2519, %v2515
  %v2556 = vpack.c.b16 %v2520, %v2516
  %v2557 = vpack.c.b16 %v2521, %v2517
  %v2558 = vpack.c.b16 %v2522, %v2518
  %v2559 = vpack.c.b16 %v2527, %v2523
  %v2560 = vpack.c.b16 %v2528, %v2524
  %v2561 = vpack.c.b16 %v2529, %v2525
  %v2562 = vpack.c.b16 %v2530, %v2526
  %v2563 = vpack.c.b16 %v2535, %v2531
  %v2564 = vpack.c.b16 %v2536, %v2532
  %v2565 = vpack.c.b16 %v2537, %v2533
  %v2566 = vpack.c.b16 %v2538, %v2534
  %v2567 = vpack.c.b16 %v2543, %v2539
  %v2568 = vpack.c.b16 %v2544, %v2540
  %v2569 = vpack.c.b16 %v2545, %v2541
  %v2570 = vpack.c.b16 %v2546, %v2542
  %v2571 = vpack.c.b16 %v2551, %v2547
  %v2572 = vpack.c.b16 %v2552, %v2548
  %v2573 = vpack.c.b16 %v2553, %v2549
  %v2574 = vpack.c.b16 %v2554, %v2550
  %v2596 = vsel %vm612, %v2023, 0
  %2598 = vmatprep.subr.bf16.mxu0 0
  %2599 = vmatpush1.bf16.msra.mxu0 0
  %2600 = vmatprep.subr.bf16.mxu0 0
  %2601 = vmatpush1.bf16.msra.mxu0 0
  %2602 = vmatprep.subr.bf16.mxu0 0
  %2603 = vmatpush1.bf16.msra.mxu0 0
  %2604 = vmatprep.subr.bf16.mxu0 %v2572
  %2605 = vmatpush1.bf16.msra.mxu0 %v2571
  %2606 = vmatprep.subr.bf16.mxu0 %v2568
  %2607 = vmatpush1.bf16.msra.mxu0 %v2567
  %2608 = vmatprep.subr.bf16.mxu0 %v2564
  %2609 = vmatpush1.bf16.msra.mxu0 %v2563
  %2610 = vmatprep.subr.bf16.mxu0 %v2560
  %2611 = vmatpush1.bf16.msra.mxu0 %v2559
  %2612 = vmatprep.subr.bf16.mxu0 %v2556
  %2613 = vmatpush1.bf16.msra.mxu0 %v2555
  %2614 = vmatprep.subr.bf16.mxu0 0
  %2615 = vmatpush2.bf16.msra.mxu0 0
  %2616 = vmatprep.subr.bf16.mxu0 0
  %2617 = vmatpush2.bf16.msra.mxu0 0
  %2618 = vmatprep.subr.bf16.mxu0 0
  %2619 = vmatpush2.bf16.msra.mxu0 0
  %2620 = vmatprep.subr.bf16.mxu0 0
  %2621 = vmatpush2.bf16.msra.mxu0 0
  %2622 = vmatprep.subr.bf16.mxu0 0
  %2623 = vmatpush2.bf16.msra.mxu0 0
  %2624 = vmatprep.subr.bf16.mxu0 0
  %2625 = vmatpush2.bf16.msra.mxu0 0
  %2626 = vmatprep.subr.bf16.mxu0 0
  %2627 = vmatpush2.bf16.msra.mxu0 0
  %2628 = vmatprep.subr.bf16.mxu0 0
  %2629 = vmatpush2.bf16.msra.mxu0 0
  %2630 = vmatprep.mubr.bf16.mxu0 0
  %2631 = vmatmul.mubr.bf16.gmra.mxu0 %v2596
  %v2632 = vpop.f32.mrf.mxu0
  %v2633 = vadd.f32 %v2493, %v2632
  %v2634 = vpop.f32.mrf.mxu0
  %v2635 = vadd.f32 %v2493, %v2634
  %v2636 = vpop.f32.mrf.mxu0
  %v2637 = vpop.f32.mrf.mxu0
  %2638 = vdwg.mxu0
  %2639 = vmatprep.subr.bf16.mxu0 0
  %2640 = vmatpush1.bf16.msra.mxu0 0
  %2641 = vmatprep.subr.bf16.mxu0 0
  %2642 = vmatpush1.bf16.msra.mxu0 0
  %2643 = vmatprep.subr.bf16.mxu0 0
  %2644 = vmatpush1.bf16.msra.mxu0 0
  %2645 = vmatprep.subr.bf16.mxu0 %v2574
  %2646 = vmatpush1.bf16.msra.mxu0 %v2573
  %2647 = vmatprep.subr.bf16.mxu0 %v2570
  %2648 = vmatpush1.bf16.msra.mxu0 %v2569
  %2649 = vmatprep.subr.bf16.mxu0 %v2566
  %2650 = vmatpush1.bf16.msra.mxu0 %v2565
  %2651 = vmatprep.subr.bf16.mxu0 %v2562
  %2652 = vmatpush1.bf16.msra.mxu0 %v2561
  %2653 = vmatprep.subr.bf16.mxu0 %v2558
  %2654 = vmatpush1.bf16.msra.mxu0 %v2557
  %2655 = vmatprep.subr.bf16.mxu0 0
  %2656 = vmatpush2.bf16.msra.mxu0 0
  %2657 = vmatprep.subr.bf16.mxu0 0
  %2658 = vmatpush2.bf16.msra.mxu0 0
  %2659 = vmatprep.subr.bf16.mxu0 0
  %2660 = vmatpush2.bf16.msra.mxu0 0
  %2661 = vmatprep.subr.bf16.mxu0 0
  %2662 = vmatpush2.bf16.msra.mxu0 0
  %2663 = vmatprep.subr.bf16.mxu0 0
  %2664 = vmatpush2.bf16.msra.mxu0 0
  %2665 = vmatprep.subr.bf16.mxu0 0
  %2666 = vmatpush2.bf16.msra.mxu0 0
  %2667 = vmatprep.subr.bf16.mxu0 0
  %2668 = vmatpush2.bf16.msra.mxu0 0
  %2669 = vmatprep.subr.bf16.mxu0 0
  %2670 = vmatpush2.bf16.msra.mxu0 0
  %2671 = vmatprep.mubr.bf16.mxu0 0
  %2672 = vmatmul.mubr.bf16.gmra.mxu0 %v2596
  %v2673 = vpop.f32.mrf.mxu0
  %v2674 = vadd.f32 %v2493, %v2673
  %v2675 = vpop.f32.mrf.mxu0
  %v2676 = vadd.f32 %v2493, %v2675
  %v2677 = vpop.f32.mrf.mxu0
  %v2678 = vpop.f32.mrf.mxu0
  %2679 = vdwg.mxu0
  %v2680 = vmul.f32 %v2633, 0.1
  %v2681 = vmul.f32 %v2635, 0.1
  %v2682 = vmul.f32 %v2674, 0.1
  %v2683 = vmul.f32 %v2676, 0.1
  %v2684 = vadd.f32 %v1313, %v2680
  %v2685 = vadd.f32 %v1315, %v2681
  %v2686 = vadd.f32 %v1354, %v2682
  %v2687 = vadd.f32 %v1356, %v2683
  %s2688 = scalar_lea.vmem %s2, 16
  %v2689 = vld [vmem:[%s2688] sm:$0xf]
  %s2690 = scalar_lea.vmem %s3, 32
  %v2691 = vld [vmem:[%s2690] sm:$0xff]
  %2692 = vrot.lane.b32.xlu0 %v2684, 17
  %v2693 = vpop.permute.xlu0 %2692
  %2694 = vrot.lane.b32.xlu0 %v2685, 17
  %v2695 = vpop.permute.xlu0 %2694
  %2696 = vrot.lane.b32.xlu0 %v2686, 17
  %v2697 = vpop.permute.xlu0 %2696
  %2698 = vrot.lane.b32.xlu0 %v2687, 17
  %v2699 = vpop.permute.xlu0 %2698
  %v2700 = vsel %vm36, %v2697, %v2699
  %v2701 = vsel %vm36, %v2695, %v2697
  %v2702 = vsel %vm36, %v2693, %v2695
  %v2703 = vsel %vm36, %v2699, %v2693
  %v2704 = vld [vmem:[%s1] ss:$8 sm:$0xf]
  %v2706 = vlaneseq
  %v2707 = vshrl.u32 %v2706, 7
  %v2708 = vsub.s32 0, %v2707
  %v2709 = vrot.slane %v2704, %v2708
  %v2710 = vlaneseq
  %v2711 = vshrl.u32 %v2710, 7
  %v2712 = vsub.s32 1, %v2711
  %v2713 = vrot.slane %v2704, %v2712
  %v2714 = vlaneseq
  %v2715 = vshrl.u32 %v2714, 7
  %v2716 = vsub.s32 2, %v2715
  %v2717 = vrot.slane %v2704, %v2716
  %v2718 = vlaneseq
  %v2719 = vshrl.u32 %v2718, 7
  %v2720 = vsub.s32 3, %v2719
  %v2721 = vrot.slane %v2704, %v2720
  %v2726 = vmul.f32 %v2703, %v2709
  %v2727 = vmul.f32 %v2702, %v2713
  %v2728 = vmul.f32 %v2701, %v2717
  %v2729 = vmul.f32 %v2700, %v2721
  %2730 = vrot.lane.b32.xlu0 %v2684, 16
  %v2731 = vpop.permute.xlu0 %2730
  %2732 = vrot.lane.b32.xlu0 %v2685, 16
  %v2733 = vpop.permute.xlu0 %2732
  %2734 = vrot.lane.b32.xlu0 %v2686, 16
  %v2735 = vpop.permute.xlu0 %2734
  %2736 = vrot.lane.b32.xlu0 %v2687, 16
  %v2737 = vpop.permute.xlu0 %2736
  %v2738 = vsel %vm75, %v2735, %v2737
  %v2739 = vsel %vm75, %v2733, %v2735
  %v2740 = vsel %vm75, %v2731, %v2733
  %v2741 = vsel %vm75, %v2737, %v2731
  %v2742 = vld [vmem:[%s80] ss:$8 sm:$0xf]
  %v2744 = vlaneseq
  %v2745 = vshrl.u32 %v2744, 7
  %v2746 = vsub.s32 0, %v2745
  %v2747 = vrot.slane %v2742, %v2746
  %v2748 = vlaneseq
  %v2749 = vshrl.u32 %v2748, 7
  %v2750 = vsub.s32 1, %v2749
  %v2751 = vrot.slane %v2742, %v2750
  %v2752 = vlaneseq
  %v2753 = vshrl.u32 %v2752, 7
  %v2754 = vsub.s32 2, %v2753
  %v2755 = vrot.slane %v2742, %v2754
  %v2756 = vlaneseq
  %v2757 = vshrl.u32 %v2756, 7
  %v2758 = vsub.s32 3, %v2757
  %v2759 = vrot.slane %v2742, %v2758
  %v2764 = vmul.f32 %v2741, %v2747
  %v2765 = vmul.f32 %v2740, %v2751
  %v2766 = vmul.f32 %v2739, %v2755
  %v2767 = vmul.f32 %v2738, %v2759
  %v2768 = vpack.c.bf16 %v2764, %v2726
  %v2769 = vpack.c.bf16 %v2765, %v2727
  %v2770 = vpack.c.bf16 %v2766, %v2728
  %v2771 = vpack.c.bf16 %v2767, %v2729
  %v2776 = vunpack.c.l.b16 %v2768
  %v2777 = vunpack.c.l.b16 %v2769
  %v2778 = vunpack.c.l.b16 %v2770
  %v2779 = vunpack.c.l.b16 %v2771
  %v2780 = vunpack.c.h.b16 %v2768
  %v2781 = vunpack.c.h.b16 %v2769
  %v2782 = vunpack.c.h.b16 %v2770
  %v2783 = vunpack.c.h.b16 %v2771
  %v2784 = vpack.c.b16 %v2777, %v2776
  %v2785 = vpack.c.b16 %v2779, %v2778
  %v2786 = vpack.c.b16 %v2781, %v2780
  %v2787 = vpack.c.b16 %v2783, %v2782
  %2792 = vst [vmem:[#allocation2] sm:$0xff] %v2784
  %2793 = vst [vmem:[#allocation2 + $0x8] sm:$0xff] %v2785
  %2794 = vst [vmem:[#allocation2 + $0x10] sm:$0xff] %v2786
  %2795 = vst [vmem:[#allocation2 + $0x18] sm:$0xff] %v2787
  %2796 = vrot.lane.b32.xlu0 %v2684, 15
  %v2797 = vpop.permute.xlu0 %2796
  %2798 = vrot.lane.b32.xlu0 %v2685, 15
  %v2799 = vpop.permute.xlu0 %2798
  %2800 = vrot.lane.b32.xlu0 %v2686, 15
  %v2801 = vpop.permute.xlu0 %2800
  %2802 = vrot.lane.b32.xlu0 %v2687, 15
  %v2803 = vpop.permute.xlu0 %2802
  %v2804 = vsel %vm143, %v2801, %v2803
  %v2805 = vsel %vm143, %v2799, %v2801
  %v2806 = vsel %vm143, %v2797, %v2799
  %v2807 = vsel %vm143, %v2803, %v2797
  %v2808 = vld [vmem:[%s148] ss:$8 sm:$0xf]
  %v2810 = vlaneseq
  %v2811 = vshrl.u32 %v2810, 7
  %v2812 = vsub.s32 0, %v2811
  %v2813 = vrot.slane %v2808, %v2812
  %v2814 = vlaneseq
  %v2815 = vshrl.u32 %v2814, 7
  %v2816 = vsub.s32 1, %v2815
  %v2817 = vrot.slane %v2808, %v2816
  %v2818 = vlaneseq
  %v2819 = vshrl.u32 %v2818, 7
  %v2820 = vsub.s32 2, %v2819
  %v2821 = vrot.slane %v2808, %v2820
  %v2822 = vlaneseq
  %v2823 = vshrl.u32 %v2822, 7
  %v2824 = vsub.s32 3, %v2823
  %v2825 = vrot.slane %v2808, %v2824
  %v2830 = vmul.f32 %v2807, %v2813
  %v2831 = vmul.f32 %v2806, %v2817
  %v2832 = vmul.f32 %v2805, %v2821
  %v2833 = vmul.f32 %v2804, %v2825
  %2834 = vrot.lane.b32.xlu0 %v2684, 1
  %v2835 = vpop.permute.xlu0 %2834
  %2836 = vrot.lane.b32.xlu0 %v2685, 1
  %v2837 = vpop.permute.xlu0 %2836
  %2838 = vrot.lane.b32.xlu0 %v2686, 1
  %v2839 = vpop.permute.xlu0 %2838
  %2840 = vrot.lane.b32.xlu0 %v2687, 1
  %v2841 = vpop.permute.xlu0 %2840
  %v2842 = vsel %vm183, %v2839, %v2841
  %v2843 = vsel %vm183, %v2837, %v2839
  %v2844 = vsel %vm183, %v2835, %v2837
  %v2845 = vsel %vm183, %v2841, %v2835
  %v2846 = vld [vmem:[%s188] ss:$8 sm:$0xf]
  %v2848 = vlaneseq
  %v2849 = vshrl.u32 %v2848, 7
  %v2850 = vsub.s32 0, %v2849
  %v2851 = vrot.slane %v2846, %v2850
  %v2852 = vlaneseq
  %v2853 = vshrl.u32 %v2852, 7
  %v2854 = vsub.s32 1, %v2853
  %v2855 = vrot.slane %v2846, %v2854
  %v2856 = vlaneseq
  %v2857 = vshrl.u32 %v2856, 7
  %v2858 = vsub.s32 2, %v2857
  %v2859 = vrot.slane %v2846, %v2858
  %v2860 = vlaneseq
  %v2861 = vshrl.u32 %v2860, 7
  %v2862 = vsub.s32 3, %v2861
  %v2863 = vrot.slane %v2846, %v2862
  %v2868 = vmul.f32 %v2845, %v2851
  %v2869 = vmul.f32 %v2844, %v2855
  %v2870 = vmul.f32 %v2843, %v2859
  %v2871 = vmul.f32 %v2842, %v2863
  %v2872 = vpack.c.bf16 %v2868, %v2830
  %v2873 = vpack.c.bf16 %v2869, %v2831
  %v2874 = vpack.c.bf16 %v2870, %v2832
  %v2875 = vpack.c.bf16 %v2871, %v2833
  %v2880 = vunpack.c.l.b16 %v2872
  %v2881 = vunpack.c.l.b16 %v2873
  %v2882 = vunpack.c.l.b16 %v2874
  %v2883 = vunpack.c.l.b16 %v2875
  %v2884 = vunpack.c.h.b16 %v2872
  %v2885 = vunpack.c.h.b16 %v2873
  %v2886 = vunpack.c.h.b16 %v2874
  %v2887 = vunpack.c.h.b16 %v2875
  %v2888 = vpack.c.b16 %v2881, %v2880
  %v2889 = vpack.c.b16 %v2883, %v2882
  %v2890 = vpack.c.b16 %v2885, %v2884
  %v2891 = vpack.c.b16 %v2887, %v2886
  %2896 = vst [vmem:[#allocation2 + $0x20] sm:$0xff] %v2888
  %2897 = vst [vmem:[#allocation2 + $0x28] sm:$0xff] %v2889
  %2898 = vst [vmem:[#allocation2 + $0x30] sm:$0xff] %v2890
  %2899 = vst [vmem:[#allocation2 + $0x38] sm:$0xff] %v2891
  %2900 = vrot.lane.b32.xlu0 %v2684, 127
  %v2901 = vpop.permute.xlu0 %2900
  %2902 = vrot.lane.b32.xlu0 %v2685, 127
  %v2903 = vpop.permute.xlu0 %2902
  %2904 = vrot.lane.b32.xlu0 %v2686, 127
  %v2905 = vpop.permute.xlu0 %2904
  %2906 = vrot.lane.b32.xlu0 %v2687, 127
  %v2907 = vpop.permute.xlu0 %2906
  %v2908 = vsel %vm251, %v2905, %v2907
  %v2909 = vsel %vm251, %v2903, %v2905
  %v2910 = vsel %vm251, %v2901, %v2903
  %v2911 = vsel %vm251, %v2907, %v2901
  %v2912 = vld [vmem:[%s256] ss:$8 sm:$0xf]
  %v2914 = vlaneseq
  %v2915 = vshrl.u32 %v2914, 7
  %v2916 = vsub.s32 0, %v2915
  %v2917 = vrot.slane %v2912, %v2916
  %v2918 = vlaneseq
  %v2919 = vshrl.u32 %v2918, 7
  %v2920 = vsub.s32 1, %v2919
  %v2921 = vrot.slane %v2912, %v2920
  %v2922 = vlaneseq
  %v2923 = vshrl.u32 %v2922, 7
  %v2924 = vsub.s32 2, %v2923
  %v2925 = vrot.slane %v2912, %v2924
  %v2926 = vlaneseq
  %v2927 = vshrl.u32 %v2926, 7
  %v2928 = vsub.s32 3, %v2927
  %v2929 = vrot.slane %v2912, %v2928
  %v2934 = vmul.f32 %v2910, %v2917
  %v2935 = vmul.f32 %v2909, %v2921
  %v2936 = vmul.f32 %v2908, %v2925
  %v2937 = vmul.f32 %v2911, %v2929
  %v2938 = vpack.c.bf16 %v2934, %v2684
  %v2939 = vpack.c.bf16 %v2935, %v2685
  %v2940 = vpack.c.bf16 %v2936, %v2686
  %v2941 = vpack.c.bf16 %v2937, %v2687
  %v2946 = vunpack.c.l.b16 %v2938
  %v2947 = vunpack.c.l.b16 %v2939
  %v2948 = vunpack.c.l.b16 %v2940
  %v2949 = vunpack.c.l.b16 %v2941
  %v2950 = vunpack.c.h.b16 %v2938
  %v2951 = vunpack.c.h.b16 %v2939
  %v2952 = vunpack.c.h.b16 %v2940
  %v2953 = vunpack.c.h.b16 %v2941
  %v2954 = vpack.c.b16 %v2947, %v2946
  %v2955 = vpack.c.b16 %v2949, %v2948
  %v2956 = vpack.c.b16 %v2951, %v2950
  %v2957 = vpack.c.b16 %v2953, %v2952
  %2962 = vst [vmem:[#allocation2 + $0x40] sm:$0xff] %v2954
  %2963 = vst [vmem:[#allocation2 + $0x48] sm:$0xff] %v2955
  %2964 = vst [vmem:[#allocation2 + $0x50] sm:$0xff] %v2956
  %2965 = vst [vmem:[#allocation2 + $0x58] sm:$0xff] %v2957
  %2966 = vrot.lane.b32.xlu0 %v2684, 113
  %v2967 = vpop.permute.xlu0 %2966
  %2968 = vrot.lane.b32.xlu0 %v2685, 113
  %v2969 = vpop.permute.xlu0 %2968
  %2970 = vrot.lane.b32.xlu0 %v2686, 113
  %v2971 = vpop.permute.xlu0 %2970
  %2972 = vrot.lane.b32.xlu0 %v2687, 113
  %v2973 = vpop.permute.xlu0 %2972
  %v2974 = vsel %vm319, %v2971, %v2973
  %v2975 = vsel %vm319, %v2969, %v2971
  %v2976 = vsel %vm319, %v2967, %v2969
  %v2977 = vsel %vm319, %v2973, %v2967
  %v2978 = vld [vmem:[%s324] ss:$8 sm:$0xf]
  %v2980 = vlaneseq
  %v2981 = vshrl.u32 %v2980, 7
  %v2982 = vsub.s32 0, %v2981
  %v2983 = vrot.slane %v2978, %v2982
  %v2984 = vlaneseq
  %v2985 = vshrl.u32 %v2984, 7
  %v2986 = vsub.s32 1, %v2985
  %v2987 = vrot.slane %v2978, %v2986
  %v2988 = vlaneseq
  %v2989 = vshrl.u32 %v2988, 7
  %v2990 = vsub.s32 2, %v2989
  %v2991 = vrot.slane %v2978, %v2990
  %v2992 = vlaneseq
  %v2993 = vshrl.u32 %v2992, 7
  %v2994 = vsub.s32 3, %v2993
  %v2995 = vrot.slane %v2978, %v2994
  %v3000 = vmul.f32 %v2976, %v2983
  %v3001 = vmul.f32 %v2975, %v2987
  %v3002 = vmul.f32 %v2974, %v2991
  %v3003 = vmul.f32 %v2977, %v2995
  %3004 = vrot.lane.b32.xlu0 %v2684, 112
  %v3005 = vpop.permute.xlu0 %3004
  %3006 = vrot.lane.b32.xlu0 %v2685, 112
  %v3007 = vpop.permute.xlu0 %3006
  %3008 = vrot.lane.b32.xlu0 %v2686, 112
  %v3009 = vpop.permute.xlu0 %3008
  %3010 = vrot.lane.b32.xlu0 %v2687, 112
  %v3011 = vpop.permute.xlu0 %3010
  %v3012 = vsel %vm359, %v3009, %v3011
  %v3013 = vsel %vm359, %v3007, %v3009
  %v3014 = vsel %vm359, %v3005, %v3007
  %v3015 = vsel %vm359, %v3011, %v3005
  %v3016 = vld [vmem:[%s364] ss:$8 sm:$0xf]
  %v3018 = vlaneseq
  %v3019 = vshrl.u32 %v3018, 7
  %v3020 = vsub.s32 0, %v3019
  %v3021 = vrot.slane %v3016, %v3020
  %v3022 = vlaneseq
  %v3023 = vshrl.u32 %v3022, 7
  %v3024 = vsub.s32 1, %v3023
  %v3025 = vrot.slane %v3016, %v3024
  %v3026 = vlaneseq
  %v3027 = vshrl.u32 %v3026, 7
  %v3028 = vsub.s32 2, %v3027
  %v3029 = vrot.slane %v3016, %v3028
  %v3030 = vlaneseq
  %v3031 = vshrl.u32 %v3030, 7
  %v3032 = vsub.s32 3, %v3031
  %v3033 = vrot.slane %v3016, %v3032
  %v3038 = vmul.f32 %v3014, %v3021
  %v3039 = vmul.f32 %v3013, %v3025
  %v3040 = vmul.f32 %v3012, %v3029
  %v3041 = vmul.f32 %v3015, %v3033
  %v3042 = vpack.c.bf16 %v3038, %v3000
  %v3043 = vpack.c.bf16 %v3039, %v3001
  %v3044 = vpack.c.bf16 %v3040, %v3002
  %v3045 = vpack.c.bf16 %v3041, %v3003
  %v3050 = vunpack.c.l.b16 %v3042
  %v3051 = vunpack.c.l.b16 %v3043
  %v3052 = vunpack.c.l.b16 %v3044
  %v3053 = vunpack.c.l.b16 %v3045
  %v3054 = vunpack.c.h.b16 %v3042
  %v3055 = vunpack.c.h.b16 %v3043
  %v3056 = vunpack.c.h.b16 %v3044
  %v3057 = vunpack.c.h.b16 %v3045
  %v3058 = vpack.c.b16 %v3051, %v3050
  %v3059 = vpack.c.b16 %v3053, %v3052
  %v3060 = vpack.c.b16 %v3055, %v3054
  %v3061 = vpack.c.b16 %v3057, %v3056
  %3066 = vst [vmem:[#allocation2 + $0x60] sm:$0xff] %v3058
  %3067 = vst [vmem:[#allocation2 + $0x68] sm:$0xff] %v3059
  %3068 = vst [vmem:[#allocation2 + $0x70] sm:$0xff] %v3060
  %3069 = vst [vmem:[#allocation2 + $0x78] sm:$0xff] %v3061
  %3070 = vrot.lane.b32.xlu0 %v2684, 111
  %v3071 = vpop.permute.xlu0 %3070
  %3072 = vrot.lane.b32.xlu0 %v2685, 111
  %v3073 = vpop.permute.xlu0 %3072
  %3074 = vrot.lane.b32.xlu0 %v2686, 111
  %v3075 = vpop.permute.xlu0 %3074
  %3076 = vrot.lane.b32.xlu0 %v2687, 111
  %v3077 = vpop.permute.xlu0 %3076
  %v3078 = vsel %vm427, %v3075, %v3077
  %v3079 = vsel %vm427, %v3073, %v3075
  %v3080 = vsel %vm427, %v3071, %v3073
  %v3081 = vsel %vm427, %v3077, %v3071
  %v3082 = vld [vmem:[%s432] ss:$8 sm:$0xf]
  %v3084 = vlaneseq
  %v3085 = vshrl.u32 %v3084, 7
  %v3086 = vsub.s32 0, %v3085
  %v3087 = vrot.slane %v3082, %v3086
  %v3088 = vlaneseq
  %v3089 = vshrl.u32 %v3088, 7
  %v3090 = vsub.s32 1, %v3089
  %v3091 = vrot.slane %v3082, %v3090
  %v3092 = vlaneseq
  %v3093 = vshrl.u32 %v3092, 7
  %v3094 = vsub.s32 2, %v3093
  %v3095 = vrot.slane %v3082, %v3094
  %v3096 = vlaneseq
  %v3097 = vshrl.u32 %v3096, 7
  %v3098 = vsub.s32 3, %v3097
  %v3099 = vrot.slane %v3082, %v3098
  %v3104 = vmul.f32 %v3080, %v3087
  %v3105 = vmul.f32 %v3079, %v3091
  %v3106 = vmul.f32 %v3078, %v3095
  %v3107 = vmul.f32 %v3081, %v3099
  %v3108 = vpack.c.bf16 0.0, %v3104
  %v3109 = vpack.c.bf16 0.0, %v3105
  %v3110 = vpack.c.bf16 0.0, %v3106
  %v3111 = vpack.c.bf16 0.0, %v3107
  %v3116 = vunpack.c.l.b16 %v3108
  %v3117 = vunpack.c.l.b16 %v3109
  %v3118 = vunpack.c.l.b16 %v3110
  %v3119 = vunpack.c.l.b16 %v3111
  %v3120 = vunpack.c.h.b16 %v3108
  %v3121 = vunpack.c.h.b16 %v3109
  %v3122 = vunpack.c.h.b16 %v3110
  %v3123 = vunpack.c.h.b16 %v3111
  %v3124 = vpack.c.b16 %v3117, %v3116
  %v3125 = vpack.c.b16 %v3119, %v3118
  %v3126 = vpack.c.b16 %v3121, %v3120
  %v3127 = vpack.c.b16 %v3123, %v3122
  %3132 = vst [vmem:[#allocation2 + $0x80] sm:$0xff] %v3124
  %3133 = vst [vmem:[#allocation2 + $0x88] sm:$0xff] %v3125
  %3134 = vst [vmem:[#allocation2 + $0x90] sm:$0xff] %v3126
  %3135 = vst [vmem:[#allocation2 + $0x98] sm:$0xff] %v3127
  %v3136 = vld [vmem:[#allocation2] sm:$0xff]
  %v3137 = vld [vmem:[#allocation2 + $0x8] sm:$0xff]
  %v3138 = vld [vmem:[#allocation2 + $0x10] sm:$0xff]
  %v3139 = vld [vmem:[#allocation2 + $0x18] sm:$0xff]
  %v3140 = vld [vmem:[#allocation2 + $0x20] sm:$0xff]
  %v3141 = vld [vmem:[#allocation2 + $0x28] sm:$0xff]
  %v3142 = vld [vmem:[#allocation2 + $0x30] sm:$0xff]
  %v3143 = vld [vmem:[#allocation2 + $0x38] sm:$0xff]
  %v3144 = vld [vmem:[#allocation2 + $0x40] sm:$0xff]
  %v3145 = vld [vmem:[#allocation2 + $0x48] sm:$0xff]
  %v3146 = vld [vmem:[#allocation2 + $0x50] sm:$0xff]
  %v3147 = vld [vmem:[#allocation2 + $0x58] sm:$0xff]
  %v3148 = vld [vmem:[#allocation2 + $0x60] sm:$0xff]
  %v3149 = vld [vmem:[#allocation2 + $0x68] sm:$0xff]
  %v3150 = vld [vmem:[#allocation2 + $0x70] sm:$0xff]
  %v3151 = vld [vmem:[#allocation2 + $0x78] sm:$0xff]
  %v3152 = vld [vmem:[#allocation2 + $0x80] sm:$0xff]
  %v3153 = vld [vmem:[#allocation2 + $0x88] sm:$0xff]
  %v3154 = vld [vmem:[#allocation2 + $0x90] sm:$0xff]
  %v3155 = vld [vmem:[#allocation2 + $0x98] sm:$0xff]
  %3157 = vset.pattern.permute.xlu0 0
  %3158 = vperm.xlu0 %3157, %v2691
  %v3159 = vpop.permute.xlu0 %3158
  %v3181 = vunpack.c.l.b16 %v3136
  %v3182 = vunpack.c.h.b16 %v3136
  %v3183 = vunpack.c.l.b16 %v3137
  %v3184 = vunpack.c.h.b16 %v3137
  %v3185 = vunpack.c.l.b16 %v3138
  %v3186 = vunpack.c.h.b16 %v3138
  %v3187 = vunpack.c.l.b16 %v3139
  %v3188 = vunpack.c.h.b16 %v3139
  %v3189 = vunpack.c.l.b16 %v3140
  %v3190 = vunpack.c.h.b16 %v3140
  %v3191 = vunpack.c.l.b16 %v3141
  %v3192 = vunpack.c.h.b16 %v3141
  %v3193 = vunpack.c.l.b16 %v3142
  %v3194 = vunpack.c.h.b16 %v3142
  %v3195 = vunpack.c.l.b16 %v3143
  %v3196 = vunpack.c.h.b16 %v3143
  %v3197 = vunpack.c.l.b16 %v3144
  %v3198 = vunpack.c.h.b16 %v3144
  %v3199 = vunpack.c.l.b16 %v3145
  %v3200 = vunpack.c.h.b16 %v3145
  %v3201 = vunpack.c.l.b16 %v3146
  %v3202 = vunpack.c.h.b16 %v3146
  %v3203 = vunpack.c.l.b16 %v3147
  %v3204 = vunpack.c.h.b16 %v3147
  %v3205 = vunpack.c.l.b16 %v3148
  %v3206 = vunpack.c.h.b16 %v3148
  %v3207 = vunpack.c.l.b16 %v3149
  %v3208 = vunpack.c.h.b16 %v3149
  %v3209 = vunpack.c.l.b16 %v3150
  %v3210 = vunpack.c.h.b16 %v3150
  %v3211 = vunpack.c.l.b16 %v3151
  %v3212 = vunpack.c.h.b16 %v3151
  %v3213 = vunpack.c.l.b16 %v3152
  %v3214 = vunpack.c.h.b16 %v3152
  %v3215 = vunpack.c.l.b16 %v3153
  %v3216 = vunpack.c.h.b16 %v3153
  %v3217 = vunpack.c.l.b16 %v3154
  %v3218 = vunpack.c.h.b16 %v3154
  %v3219 = vunpack.c.l.b16 %v3155
  %v3220 = vunpack.c.h.b16 %v3155
  %v3221 = vpack.c.b16 %v3185, %v3181
  %v3222 = vpack.c.b16 %v3186, %v3182
  %v3223 = vpack.c.b16 %v3187, %v3183
  %v3224 = vpack.c.b16 %v3188, %v3184
  %v3225 = vpack.c.b16 %v3193, %v3189
  %v3226 = vpack.c.b16 %v3194, %v3190
  %v3227 = vpack.c.b16 %v3195, %v3191
  %v3228 = vpack.c.b16 %v3196, %v3192
  %v3229 = vpack.c.b16 %v3201, %v3197
  %v3230 = vpack.c.b16 %v3202, %v3198
  %v3231 = vpack.c.b16 %v3203, %v3199
  %v3232 = vpack.c.b16 %v3204, %v3200
  %v3233 = vpack.c.b16 %v3209, %v3205
  %v3234 = vpack.c.b16 %v3210, %v3206
  %v3235 = vpack.c.b16 %v3211, %v3207
  %v3236 = vpack.c.b16 %v3212, %v3208
  %v3237 = vpack.c.b16 %v3217, %v3213
  %v3238 = vpack.c.b16 %v3218, %v3214
  %v3239 = vpack.c.b16 %v3219, %v3215
  %v3240 = vpack.c.b16 %v3220, %v3216
  %v3262 = vsel %vm612, %v2689, 0
  %3264 = vmatprep.subr.bf16.mxu0 0
  %3265 = vmatpush1.bf16.msra.mxu0 0
  %3266 = vmatprep.subr.bf16.mxu0 0
  %3267 = vmatpush1.bf16.msra.mxu0 0
  %3268 = vmatprep.subr.bf16.mxu0 0
  %3269 = vmatpush1.bf16.msra.mxu0 0
  %3270 = vmatprep.subr.bf16.mxu0 %v3238
  %3271 = vmatpush1.bf16.msra.mxu0 %v3237
  %3272 = vmatprep.subr.bf16.mxu0 %v3234
  %3273 = vmatpush1.bf16.msra.mxu0 %v3233
  %3274 = vmatprep.subr.bf16.mxu0 %v3230
  %3275 = vmatpush1.bf16.msra.mxu0 %v3229
  %3276 = vmatprep.subr.bf16.mxu0 %v3226
  %3277 = vmatpush1.bf16.msra.mxu0 %v3225
  %3278 = vmatprep.subr.bf16.mxu0 %v3222
  %3279 = vmatpush1.bf16.msra.mxu0 %v3221
  %3280 = vmatprep.subr.bf16.mxu0 0
  %3281 = vmatpush2.bf16.msra.mxu0 0
  %3282 = vmatprep.subr.bf16.mxu0 0
  %3283 = vmatpush2.bf16.msra.mxu0 0
  %3284 = vmatprep.subr.bf16.mxu0 0
  %3285 = vmatpush2.bf16.msra.mxu0 0
  %3286 = vmatprep.subr.bf16.mxu0 0
  %3287 = vmatpush2.bf16.msra.mxu0 0
  %3288 = vmatprep.subr.bf16.mxu0 0
  %3289 = vmatpush2.bf16.msra.mxu0 0
  %3290 = vmatprep.subr.bf16.mxu0 0
  %3291 = vmatpush2.bf16.msra.mxu0 0
  %3292 = vmatprep.subr.bf16.mxu0 0
  %3293 = vmatpush2.bf16.msra.mxu0 0
  %3294 = vmatprep.subr.bf16.mxu0 0
  %3295 = vmatpush2.bf16.msra.mxu0 0
  %3296 = vmatprep.mubr.bf16.mxu0 0
  %3297 = vmatmul.mubr.bf16.gmra.mxu0 %v3262
  %v3298 = vpop.f32.mrf.mxu0
  %v3299 = vadd.f32 %v3159, %v3298
  %v3300 = vpop.f32.mrf.mxu0
  %v3301 = vadd.f32 %v3159, %v3300
  %v3302 = vpop.f32.mrf.mxu0
  %v3303 = vpop.f32.mrf.mxu0
  %3304 = vdwg.mxu0
  %3305 = vmatprep.subr.bf16.mxu0 0
  %3306 = vmatpush1.bf16.msra.mxu0 0
  %3307 = vmatprep.subr.bf16.mxu0 0
  %3308 = vmatpush1.bf16.msra.mxu0 0
  %3309 = vmatprep.subr.bf16.mxu0 0
  %3310 = vmatpush1.bf16.msra.mxu0 0
  %3311 = vmatprep.subr.bf16.mxu0 %v3240
  %3312 = vmatpush1.bf16.msra.mxu0 %v3239
  %3313 = vmatprep.subr.bf16.mxu0 %v3236
  %3314 = vmatpush1.bf16.msra.mxu0 %v3235
  %3315 = vmatprep.subr.bf16.mxu0 %v3232
  %3316 = vmatpush1.bf16.msra.mxu0 %v3231
  %3317 = vmatprep.subr.bf16.mxu0 %v3228
  %3318 = vmatpush1.bf16.msra.mxu0 %v3227
  %3319 = vmatprep.subr.bf16.mxu0 %v3224
  %3320 = vmatpush1.bf16.msra.mxu0 %v3223
  %3321 = vmatprep.subr.bf16.mxu0 0
  %3322 = vmatpush2.bf16.msra.mxu0 0
  %3323 = vmatprep.subr.bf16.mxu0 0
  %3324 = vmatpush2.bf16.msra.mxu0 0
  %3325 = vmatprep.subr.bf16.mxu0 0
  %3326 = vmatpush2.bf16.msra.mxu0 0
  %3327 = vmatprep.subr.bf16.mxu0 0
  %3328 = vmatpush2.bf16.msra.mxu0 0
  %3329 = vmatprep.subr.bf16.mxu0 0
  %3330 = vmatpush2.bf16.msra.mxu0 0
  %3331 = vmatprep.subr.bf16.mxu0 0
  %3332 = vmatpush2.bf16.msra.mxu0 0
  %3333 = vmatprep.subr.bf16.mxu0 0
  %3334 = vmatpush2.bf16.msra.mxu0 0
  %3335 = vmatprep.subr.bf16.mxu0 0
  %3336 = vmatpush2.bf16.msra.mxu0 0
  %3337 = vmatprep.mubr.bf16.mxu0 0
  %3338 = vmatmul.mubr.bf16.gmra.mxu0 %v3262
  %v3339 = vpop.f32.mrf.mxu0
  %v3340 = vadd.f32 %v3159, %v3339
  %v3341 = vpop.f32.mrf.mxu0
  %v3342 = vadd.f32 %v3159, %v3341
  %v3343 = vpop.f32.mrf.mxu0
  %v3344 = vpop.f32.mrf.mxu0
  %3345 = vdwg.mxu0
  %v3346 = vmax.f32 %v3299, 0.0
  %v3347 = vmax.f32 %v3301, 0.0
  %v3348 = vmax.f32 %v3340, 0.0
  %v3349 = vmax.f32 %v3342, 0.0
  %3350 = vst [vmem:[%s4] sm:$0xff] %v2684
  %3351 = vst [vmem:[%s4 + $0x8] sm:$0xff] %v2685
  %3352 = vst [vmem:[%s4 + $0x10] sm:$0xff] %v2686
  %3353 = vst [vmem:[%s4 + $0x18] sm:$0xff] %v2687
  %s3354 = scalar_lea.vmem %s2, 20
  %v3355 = vld [vmem:[%s3354] sm:$0xf]
  %s3356 = scalar_lea.vmem %s3, 40
  %v3357 = vld [vmem:[%s3356] sm:$0xff]
  %3358 = vrot.lane.b32.xlu0 %v3346, 17
  %v3359 = vpop.permute.xlu0 %3358
  %3360 = vrot.lane.b32.xlu0 %v3347, 17
  %v3361 = vpop.permute.xlu0 %3360
  %3362 = vrot.lane.b32.xlu0 %v3348, 17
  %v3363 = vpop.permute.xlu0 %3362
  %3364 = vrot.lane.b32.xlu0 %v3349, 17
  %v3365 = vpop.permute.xlu0 %3364
  %v3366 = vsel %vm36, %v3363, %v3365
  %v3367 = vsel %vm36, %v3361, %v3363
  %v3368 = vsel %vm36, %v3359, %v3361
  %v3369 = vsel %vm36, %v3365, %v3359
  %v3370 = vld [vmem:[%s1] ss:$8 sm:$0xf]
  %v3372 = vlaneseq
  %v3373 = vshrl.u32 %v3372, 7
  %v3374 = vsub.s32 0, %v3373
  %v3375 = vrot.slane %v3370, %v3374
  %v3376 = vlaneseq
  %v3377 = vshrl.u32 %v3376, 7
  %v3378 = vsub.s32 1, %v3377
  %v3379 = vrot.slane %v3370, %v3378
  %v3380 = vlaneseq
  %v3381 = vshrl.u32 %v3380, 7
  %v3382 = vsub.s32 2, %v3381
  %v3383 = vrot.slane %v3370, %v3382
  %v3384 = vlaneseq
  %v3385 = vshrl.u32 %v3384, 7
  %v3386 = vsub.s32 3, %v3385
  %v3387 = vrot.slane %v3370, %v3386
  %v3392 = vmul.f32 %v3369, %v3375
  %v3393 = vmul.f32 %v3368, %v3379
  %v3394 = vmul.f32 %v3367, %v3383
  %v3395 = vmul.f32 %v3366, %v3387
  %3396 = vrot.lane.b32.xlu0 %v3346, 16
  %v3397 = vpop.permute.xlu0 %3396
  %3398 = vrot.lane.b32.xlu0 %v3347, 16
  %v3399 = vpop.permute.xlu0 %3398
  %3400 = vrot.lane.b32.xlu0 %v3348, 16
  %v3401 = vpop.permute.xlu0 %3400
  %3402 = vrot.lane.b32.xlu0 %v3349, 16
  %v3403 = vpop.permute.xlu0 %3402
  %v3404 = vsel %vm75, %v3401, %v3403
  %v3405 = vsel %vm75, %v3399, %v3401
  %v3406 = vsel %vm75, %v3397, %v3399
  %v3407 = vsel %vm75, %v3403, %v3397
  %v3408 = vld [vmem:[%s80] ss:$8 sm:$0xf]
  %v3410 = vlaneseq
  %v3411 = vshrl.u32 %v3410, 7
  %v3412 = vsub.s32 0, %v3411
  %v3413 = vrot.slane %v3408, %v3412
  %v3414 = vlaneseq
  %v3415 = vshrl.u32 %v3414, 7
  %v3416 = vsub.s32 1, %v3415
  %v3417 = vrot.slane %v3408, %v3416
  %v3418 = vlaneseq
  %v3419 = vshrl.u32 %v3418, 7
  %v3420 = vsub.s32 2, %v3419
  %v3421 = vrot.slane %v3408, %v3420
  %v3422 = vlaneseq
  %v3423 = vshrl.u32 %v3422, 7
  %v3424 = vsub.s32 3, %v3423
  %v3425 = vrot.slane %v3408, %v3424
  %v3430 = vmul.f32 %v3407, %v3413
  %v3431 = vmul.f32 %v3406, %v3417
  %v3432 = vmul.f32 %v3405, %v3421
  %v3433 = vmul.f32 %v3404, %v3425
  %v3434 = vpack.c.bf16 %v3430, %v3392
  %v3435 = vpack.c.bf16 %v3431, %v3393
  %v3436 = vpack.c.bf16 %v3432, %v3394
  %v3437 = vpack.c.bf16 %v3433, %v3395
  %v3442 = vunpack.c.l.b16 %v3434
  %v3443 = vunpack.c.l.b16 %v3435
  %v3444 = vunpack.c.l.b16 %v3436
  %v3445 = vunpack.c.l.b16 %v3437
  %v3446 = vunpack.c.h.b16 %v3434
  %v3447 = vunpack.c.h.b16 %v3435
  %v3448 = vunpack.c.h.b16 %v3436
  %v3449 = vunpack.c.h.b16 %v3437
  %v3450 = vpack.c.b16 %v3443, %v3442
  %v3451 = vpack.c.b16 %v3445, %v3444
  %v3452 = vpack.c.b16 %v3447, %v3446
  %v3453 = vpack.c.b16 %v3449, %v3448
  %3458 = vst [vmem:[#allocation2] sm:$0xff] %v3450
  %3459 = vst [vmem:[#allocation2 + $0x8] sm:$0xff] %v3451
  %3460 = vst [vmem:[#allocation2 + $0x10] sm:$0xff] %v3452
  %3461 = vst [vmem:[#allocation2 + $0x18] sm:$0xff] %v3453
  %3462 = vrot.lane.b32.xlu0 %v3346, 15
  %v3463 = vpop.permute.xlu0 %3462
  %3464 = vrot.lane.b32.xlu0 %v3347, 15
  %v3465 = vpop.permute.xlu0 %3464
  %3466 = vrot.lane.b32.xlu0 %v3348, 15
  %v3467 = vpop.permute.xlu0 %3466
  %3468 = vrot.lane.b32.xlu0 %v3349, 15
  %v3469 = vpop.permute.xlu0 %3468
  %v3470 = vsel %vm143, %v3467, %v3469
  %v3471 = vsel %vm143, %v3465, %v3467
  %v3472 = vsel %vm143, %v3463, %v3465
  %v3473 = vsel %vm143, %v3469, %v3463
  %v3474 = vld [vmem:[%s148] ss:$8 sm:$0xf]
  %v3476 = vlaneseq
  %v3477 = vshrl.u32 %v3476, 7
  %v3478 = vsub.s32 0, %v3477
  %v3479 = vrot.slane %v3474, %v3478
  %v3480 = vlaneseq
  %v3481 = vshrl.u32 %v3480, 7
  %v3482 = vsub.s32 1, %v3481
  %v3483 = vrot.slane %v3474, %v3482
  %v3484 = vlaneseq
  %v3485 = vshrl.u32 %v3484, 7
  %v3486 = vsub.s32 2, %v3485
  %v3487 = vrot.slane %v3474, %v3486
  %v3488 = vlaneseq
  %v3489 = vshrl.u32 %v3488, 7
  %v3490 = vsub.s32 3, %v3489
  %v3491 = vrot.slane %v3474, %v3490
  %v3496 = vmul.f32 %v3473, %v3479
  %v3497 = vmul.f32 %v3472, %v3483
  %v3498 = vmul.f32 %v3471, %v3487
  %v3499 = vmul.f32 %v3470, %v3491
  %3500 = vrot.lane.b32.xlu0 %v3346, 1
  %v3501 = vpop.permute.xlu0 %3500
  %3502 = vrot.lane.b32.xlu0 %v3347, 1
  %v3503 = vpop.permute.xlu0 %3502
  %3504 = vrot.lane.b32.xlu0 %v3348, 1
  %v3505 = vpop.permute.xlu0 %3504
  %3506 = vrot.lane.b32.xlu0 %v3349, 1
  %v3507 = vpop.permute.xlu0 %3506
  %v3508 = vsel %vm183, %v3505, %v3507
  %v3509 = vsel %vm183, %v3503, %v3505
  %v3510 = vsel %vm183, %v3501, %v3503
  %v3511 = vsel %vm183, %v3507, %v3501
  %v3512 = vld [vmem:[%s188] ss:$8 sm:$0xf]
  %v3514 = vlaneseq
  %v3515 = vshrl.u32 %v3514, 7
  %v3516 = vsub.s32 0, %v3515
  %v3517 = vrot.slane %v3512, %v3516
  %v3518 = vlaneseq
  %v3519 = vshrl.u32 %v3518, 7
  %v3520 = vsub.s32 1, %v3519
  %v3521 = vrot.slane %v3512, %v3520
  %v3522 = vlaneseq
  %v3523 = vshrl.u32 %v3522, 7
  %v3524 = vsub.s32 2, %v3523
  %v3525 = vrot.slane %v3512, %v3524
  %v3526 = vlaneseq
  %v3527 = vshrl.u32 %v3526, 7
  %v3528 = vsub.s32 3, %v3527
  %v3529 = vrot.slane %v3512, %v3528
  %v3534 = vmul.f32 %v3511, %v3517
  %v3535 = vmul.f32 %v3510, %v3521
  %v3536 = vmul.f32 %v3509, %v3525
  %v3537 = vmul.f32 %v3508, %v3529
  %v3538 = vpack.c.bf16 %v3534, %v3496
  %v3539 = vpack.c.bf16 %v3535, %v3497
  %v3540 = vpack.c.bf16 %v3536, %v3498
  %v3541 = vpack.c.bf16 %v3537, %v3499
  %v3546 = vunpack.c.l.b16 %v3538
  %v3547 = vunpack.c.l.b16 %v3539
  %v3548 = vunpack.c.l.b16 %v3540
  %v3549 = vunpack.c.l.b16 %v3541
  %v3550 = vunpack.c.h.b16 %v3538
  %v3551 = vunpack.c.h.b16 %v3539
  %v3552 = vunpack.c.h.b16 %v3540
  %v3553 = vunpack.c.h.b16 %v3541
  %v3554 = vpack.c.b16 %v3547, %v3546
  %v3555 = vpack.c.b16 %v3549, %v3548
  %v3556 = vpack.c.b16 %v3551, %v3550
  %v3557 = vpack.c.b16 %v3553, %v3552
  %3562 = vst [vmem:[#allocation2 + $0x20] sm:$0xff] %v3554
  %3563 = vst [vmem:[#allocation2 + $0x28] sm:$0xff] %v3555
  %3564 = vst [vmem:[#allocation2 + $0x30] sm:$0xff] %v3556
  %3565 = vst [vmem:[#allocation2 + $0x38] sm:$0xff] %v3557
  %3566 = vrot.lane.b32.xlu0 %v3346, 127
  %v3567 = vpop.permute.xlu0 %3566
  %3568 = vrot.lane.b32.xlu0 %v3347, 127
  %v3569 = vpop.permute.xlu0 %3568
  %3570 = vrot.lane.b32.xlu0 %v3348, 127
  %v3571 = vpop.permute.xlu0 %3570
  %3572 = vrot.lane.b32.xlu0 %v3349, 127
  %v3573 = vpop.permute.xlu0 %3572
  %v3574 = vsel %vm251, %v3571, %v3573
  %v3575 = vsel %vm251, %v3569, %v3571
  %v3576 = vsel %vm251, %v3567, %v3569
  %v3577 = vsel %vm251, %v3573, %v3567
  %v3578 = vld [vmem:[%s256] ss:$8 sm:$0xf]
  %v3580 = vlaneseq
  %v3581 = vshrl.u32 %v3580, 7
  %v3582 = vsub.s32 0, %v3581
  %v3583 = vrot.slane %v3578, %v3582
  %v3584 = vlaneseq
  %v3585 = vshrl.u32 %v3584, 7
  %v3586 = vsub.s32 1, %v3585
  %v3587 = vrot.slane %v3578, %v3586
  %v3588 = vlaneseq
  %v3589 = vshrl.u32 %v3588, 7
  %v3590 = vsub.s32 2, %v3589
  %v3591 = vrot.slane %v3578, %v3590
  %v3592 = vlaneseq
  %v3593 = vshrl.u32 %v3592, 7
  %v3594 = vsub.s32 3, %v3593
  %v3595 = vrot.slane %v3578, %v3594
  %v3600 = vmul.f32 %v3576, %v3583
  %v3601 = vmul.f32 %v3575, %v3587
  %v3602 = vmul.f32 %v3574, %v3591
  %v3603 = vmul.f32 %v3577, %v3595
  %v3604 = vpack.c.bf16 %v3600, %v3346
  %v3605 = vpack.c.bf16 %v3601, %v3347
  %v3606 = vpack.c.bf16 %v3602, %v3348
  %v3607 = vpack.c.bf16 %v3603, %v3349
  %v3612 = vunpack.c.l.b16 %v3604
  %v3613 = vunpack.c.l.b16 %v3605
  %v3614 = vunpack.c.l.b16 %v3606
  %v3615 = vunpack.c.l.b16 %v3607
  %v3616 = vunpack.c.h.b16 %v3604
  %v3617 = vunpack.c.h.b16 %v3605
  %v3618 = vunpack.c.h.b16 %v3606
  %v3619 = vunpack.c.h.b16 %v3607
  %v3620 = vpack.c.b16 %v3613, %v3612
  %v3621 = vpack.c.b16 %v3615, %v3614
  %v3622 = vpack.c.b16 %v3617, %v3616
  %v3623 = vpack.c.b16 %v3619, %v3618
  %3628 = vst [vmem:[#allocation2 + $0x40] sm:$0xff] %v3620
  %3629 = vst [vmem:[#allocation2 + $0x48] sm:$0xff] %v3621
  %3630 = vst [vmem:[#allocation2 + $0x50] sm:$0xff] %v3622
  %3631 = vst [vmem:[#allocation2 + $0x58] sm:$0xff] %v3623
  %3632 = vrot.lane.b32.xlu0 %v3346, 113
  %v3633 = vpop.permute.xlu0 %3632
  %3634 = vrot.lane.b32.xlu0 %v3347, 113
  %v3635 = vpop.permute.xlu0 %3634
  %3636 = vrot.lane.b32.xlu0 %v3348, 113
  %v3637 = vpop.permute.xlu0 %3636
  %3638 = vrot.lane.b32.xlu0 %v3349, 113
  %v3639 = vpop.permute.xlu0 %3638
  %v3640 = vsel %vm319, %v3637, %v3639
  %v3641 = vsel %vm319, %v3635, %v3637
  %v3642 = vsel %vm319, %v3633, %v3635
  %v3643 = vsel %vm319, %v3639, %v3633
  %v3644 = vld [vmem:[%s324] ss:$8 sm:$0xf]
  %v3646 = vlaneseq
  %v3647 = vshrl.u32 %v3646, 7
  %v3648 = vsub.s32 0, %v3647
  %v3649 = vrot.slane %v3644, %v3648
  %v3650 = vlaneseq
  %v3651 = vshrl.u32 %v3650, 7
  %v3652 = vsub.s32 1, %v3651
  %v3653 = vrot.slane %v3644, %v3652
  %v3654 = vlaneseq
  %v3655 = vshrl.u32 %v3654, 7
  %v3656 = vsub.s32 2, %v3655
  %v3657 = vrot.slane %v3644, %v3656
  %v3658 = vlaneseq
  %v3659 = vshrl.u32 %v3658, 7
  %v3660 = vsub.s32 3, %v3659
  %v3661 = vrot.slane %v3644, %v3660
  %v3666 = vmul.f32 %v3642, %v3649
  %v3667 = vmul.f32 %v3641, %v3653
  %v3668 = vmul.f32 %v3640, %v3657
  %v3669 = vmul.f32 %v3643, %v3661
  %3670 = vrot.lane.b32.xlu0 %v3346, 112
  %v3671 = vpop.permute.xlu0 %3670
  %3672 = vrot.lane.b32.xlu0 %v3347, 112
  %v3673 = vpop.permute.xlu0 %3672
  %3674 = vrot.lane.b32.xlu0 %v3348, 112
  %v3675 = vpop.permute.xlu0 %3674
  %3676 = vrot.lane.b32.xlu0 %v3349, 112
  %v3677 = vpop.permute.xlu0 %3676
  %v3678 = vsel %vm359, %v3675, %v3677
  %v3679 = vsel %vm359, %v3673, %v3675
  %v3680 = vsel %vm359, %v3671, %v3673
  %v3681 = vsel %vm359, %v3677, %v3671
  %v3682 = vld [vmem:[%s364] ss:$8 sm:$0xf]
  %v3684 = vlaneseq
  %v3685 = vshrl.u32 %v3684, 7
  %v3686 = vsub.s32 0, %v3685
  %v3687 = vrot.slane %v3682, %v3686
  %v3688 = vlaneseq
  %v3689 = vshrl.u32 %v3688, 7
  %v3690 = vsub.s32 1, %v3689
  %v3691 = vrot.slane %v3682, %v3690
  %v3692 = vlaneseq
  %v3693 = vshrl.u32 %v3692, 7
  %v3694 = vsub.s32 2, %v3693
  %v3695 = vrot.slane %v3682, %v3694
  %v3696 = vlaneseq
  %v3697 = vshrl.u32 %v3696, 7
  %v3698 = vsub.s32 3, %v3697
  %v3699 = vrot.slane %v3682, %v3698
  %v3704 = vmul.f32 %v3680, %v3687
  %v3705 = vmul.f32 %v3679, %v3691
  %v3706 = vmul.f32 %v3678, %v3695
  %v3707 = vmul.f32 %v3681, %v3699
  %v3708 = vpack.c.bf16 %v3704, %v3666
  %v3709 = vpack.c.bf16 %v3705, %v3667
  %v3710 = vpack.c.bf16 %v3706, %v3668
  %v3711 = vpack.c.bf16 %v3707, %v3669
  %v3716 = vunpack.c.l.b16 %v3708
  %v3717 = vunpack.c.l.b16 %v3709
  %v3718 = vunpack.c.l.b16 %v3710
  %v3719 = vunpack.c.l.b16 %v3711
  %v3720 = vunpack.c.h.b16 %v3708
  %v3721 = vunpack.c.h.b16 %v3709
  %v3722 = vunpack.c.h.b16 %v3710
  %v3723 = vunpack.c.h.b16 %v3711
  %v3724 = vpack.c.b16 %v3717, %v3716
  %v3725 = vpack.c.b16 %v3719, %v3718
  %v3726 = vpack.c.b16 %v3721, %v3720
  %v3727 = vpack.c.b16 %v3723, %v3722
  %3732 = vst [vmem:[#allocation2 + $0x60] sm:$0xff] %v3724
  %3733 = vst [vmem:[#allocation2 + $0x68] sm:$0xff] %v3725
  %3734 = vst [vmem:[#allocation2 + $0x70] sm:$0xff] %v3726
  %3735 = vst [vmem:[#allocation2 + $0x78] sm:$0xff] %v3727
  %3736 = vrot.lane.b32.xlu0 %v3346, 111
  %v3737 = vpop.permute.xlu0 %3736
  %3738 = vrot.lane.b32.xlu0 %v3347, 111
  %v3739 = vpop.permute.xlu0 %3738
  %3740 = vrot.lane.b32.xlu0 %v3348, 111
  %v3741 = vpop.permute.xlu0 %3740
  %3742 = vrot.lane.b32.xlu0 %v3349, 111
  %v3743 = vpop.permute.xlu0 %3742
  %v3744 = vsel %vm427, %v3741, %v3743
  %v3745 = vsel %vm427, %v3739, %v3741
  %v3746 = vsel %vm427, %v3737, %v3739
  %v3747 = vsel %vm427, %v3743, %v3737
  %v3748 = vld [vmem:[%s432] ss:$8 sm:$0xf]
  %v3750 = vlaneseq
  %v3751 = vshrl.u32 %v3750, 7
  %v3752 = vsub.s32 0, %v3751
  %v3753 = vrot.slane %v3748, %v3752
  %v3754 = vlaneseq
  %v3755 = vshrl.u32 %v3754, 7
  %v3756 = vsub.s32 1, %v3755
  %v3757 = vrot.slane %v3748, %v3756
  %v3758 = vlaneseq
  %v3759 = vshrl.u32 %v3758, 7
  %v3760 = vsub.s32 2, %v3759
  %v3761 = vrot.slane %v3748, %v3760
  %v3762 = vlaneseq
  %v3763 = vshrl.u32 %v3762, 7
  %v3764 = vsub.s32 3, %v3763
  %v3765 = vrot.slane %v3748, %v3764
  %v3770 = vmul.f32 %v3746, %v3753
  %v3771 = vmul.f32 %v3745, %v3757
  %v3772 = vmul.f32 %v3744, %v3761
  %v3773 = vmul.f32 %v3747, %v3765
  %v3774 = vpack.c.bf16 0.0, %v3770
  %v3775 = vpack.c.bf16 0.0, %v3771
  %v3776 = vpack.c.bf16 0.0, %v3772
  %v3777 = vpack.c.bf16 0.0, %v3773
  %v3782 = vunpack.c.l.b16 %v3774
  %v3783 = vunpack.c.l.b16 %v3775
  %v3784 = vunpack.c.l.b16 %v3776
  %v3785 = vunpack.c.l.b16 %v3777
  %v3786 = vunpack.c.h.b16 %v3774
  %v3787 = vunpack.c.h.b16 %v3775
  %v3788 = vunpack.c.h.b16 %v3776
  %v3789 = vunpack.c.h.b16 %v3777
  %v3790 = vpack.c.b16 %v3783, %v3782
  %v3791 = vpack.c.b16 %v3785, %v3784
  %v3792 = vpack.c.b16 %v3787, %v3786
  %v3793 = vpack.c.b16 %v3789, %v3788
  %3798 = vst [vmem:[#allocation2 + $0x80] sm:$0xff] %v3790
  %3799 = vst [vmem:[#allocation2 + $0x88] sm:$0xff] %v3791
  %3800 = vst [vmem:[#allocation2 + $0x90] sm:$0xff] %v3792
  %3801 = vst [vmem:[#allocation2 + $0x98] sm:$0xff] %v3793
  %v3802 = vld [vmem:[#allocation2] sm:$0xff]
  %v3803 = vld [vmem:[#allocation2 + $0x8] sm:$0xff]
  %v3804 = vld [vmem:[#allocation2 + $0x10] sm:$0xff]
  %v3805 = vld [vmem:[#allocation2 + $0x18] sm:$0xff]
  %v3806 = vld [vmem:[#allocation2 + $0x20] sm:$0xff]
  %v3807 = vld [vmem:[#allocation2 + $0x28] sm:$0xff]
  %v3808 = vld [vmem:[#allocation2 + $0x30] sm:$0xff]
  %v3809 = vld [vmem:[#allocation2 + $0x38] sm:$0xff]
  %v3810 = vld [vmem:[#allocation2 + $0x40] sm:$0xff]
  %v3811 = vld [vmem:[#allocation2 + $0x48] sm:$0xff]
  %v3812 = vld [vmem:[#allocation2 + $0x50] sm:$0xff]
  %v3813 = vld [vmem:[#allocation2 + $0x58] sm:$0xff]
  %v3814 = vld [vmem:[#allocation2 + $0x60] sm:$0xff]
  %v3815 = vld [vmem:[#allocation2 + $0x68] sm:$0xff]
  %v3816 = vld [vmem:[#allocation2 + $0x70] sm:$0xff]
  %v3817 = vld [vmem:[#allocation2 + $0x78] sm:$0xff]
  %v3818 = vld [vmem:[#allocation2 + $0x80] sm:$0xff]
  %v3819 = vld [vmem:[#allocation2 + $0x88] sm:$0xff]
  %v3820 = vld [vmem:[#allocation2 + $0x90] sm:$0xff]
  %v3821 = vld [vmem:[#allocation2 + $0x98] sm:$0xff]
  %3823 = vset.pattern.permute.xlu0 0
  %3824 = vperm.xlu0 %3823, %v3357
  %v3825 = vpop.permute.xlu0 %3824
  %v3847 = vunpack.c.l.b16 %v3802
  %v3848 = vunpack.c.h.b16 %v3802
  %v3849 = vunpack.c.l.b16 %v3803
  %v3850 = vunpack.c.h.b16 %v3803
  %v3851 = vunpack.c.l.b16 %v3804
  %v3852 = vunpack.c.h.b16 %v3804
  %v3853 = vunpack.c.l.b16 %v3805
  %v3854 = vunpack.c.h.b16 %v3805
  %v3855 = vunpack.c.l.b16 %v3806
  %v3856 = vunpack.c.h.b16 %v3806
  %v3857 = vunpack.c.l.b16 %v3807
  %v3858 = vunpack.c.h.b16 %v3807
  %v3859 = vunpack.c.l.b16 %v3808
  %v3860 = vunpack.c.h.b16 %v3808
  %v3861 = vunpack.c.l.b16 %v3809
  %v3862 = vunpack.c.h.b16 %v3809
  %v3863 = vunpack.c.l.b16 %v3810
  %v3864 = vunpack.c.h.b16 %v3810
  %v3865 = vunpack.c.l.b16 %v3811
  %v3866 = vunpack.c.h.b16 %v3811
  %v3867 = vunpack.c.l.b16 %v3812
  %v3868 = vunpack.c.h.b16 %v3812
  %v3869 = vunpack.c.l.b16 %v3813
  %v3870 = vunpack.c.h.b16 %v3813
  %v3871 = vunpack.c.l.b16 %v3814
  %v3872 = vunpack.c.h.b16 %v3814
  %v3873 = vunpack.c.l.b16 %v3815
  %v3874 = vunpack.c.h.b16 %v3815
  %v3875 = vunpack.c.l.b16 %v3816
  %v3876 = vunpack.c.h.b16 %v3816
  %v3877 = vunpack.c.l.b16 %v3817
  %v3878 = vunpack.c.h.b16 %v3817
  %v3879 = vunpack.c.l.b16 %v3818
  %v3880 = vunpack.c.h.b16 %v3818
  %v3881 = vunpack.c.l.b16 %v3819
  %v3882 = vunpack.c.h.b16 %v3819
  %v3883 = vunpack.c.l.b16 %v3820
  %v3884 = vunpack.c.h.b16 %v3820
  %v3885 = vunpack.c.l.b16 %v3821
  %v3886 = vunpack.c.h.b16 %v3821
  %v3887 = vpack.c.b16 %v3851, %v3847
  %v3888 = vpack.c.b16 %v3852, %v3848
  %v3889 = vpack.c.b16 %v3853, %v3849
  %v3890 = vpack.c.b16 %v3854, %v3850
  %v3891 = vpack.c.b16 %v3859, %v3855
  %v3892 = vpack.c.b16 %v3860, %v3856
  %v3893 = vpack.c.b16 %v3861, %v3857
  %v3894 = vpack.c.b16 %v3862, %v3858
  %v3895 = vpack.c.b16 %v3867, %v3863
  %v3896 = vpack.c.b16 %v3868, %v3864
  %v3897 = vpack.c.b16 %v3869, %v3865
  %v3898 = vpack.c.b16 %v3870, %v3866
  %v3899 = vpack.c.b16 %v3875, %v3871
  %v3900 = vpack.c.b16 %v3876, %v3872
  %v3901 = vpack.c.b16 %v3877, %v3873
  %v3902 = vpack.c.b16 %v3878, %v3874
  %v3903 = vpack.c.b16 %v3883, %v3879
  %v3904 = vpack.c.b16 %v3884, %v3880
  %v3905 = vpack.c.b16 %v3885, %v3881
  %v3906 = vpack.c.b16 %v3886, %v3882
  %v3928 = vsel %vm612, %v3355, 0
  %3930 = vmatprep.subr.bf16.mxu0 0
  %3931 = vmatpush1.bf16.msra.mxu0 0
  %3932 = vmatprep.subr.bf16.mxu0 0
  %3933 = vmatpush1.bf16.msra.mxu0 0
  %3934 = vmatprep.subr.bf16.mxu0 0
  %3935 = vmatpush1.bf16.msra.mxu0 0
  %3936 = vmatprep.subr.bf16.mxu0 %v3904
  %3937 = vmatpush1.bf16.msra.mxu0 %v3903
  %3938 = vmatprep.subr.bf16.mxu0 %v3900
  %3939 = vmatpush1.bf16.msra.mxu0 %v3899
  %3940 = vmatprep.subr.bf16.mxu0 %v3896
  %3941 = vmatpush1.bf16.msra.mxu0 %v3895
  %3942 = vmatprep.subr.bf16.mxu0 %v3892
  %3943 = vmatpush1.bf16.msra.mxu0 %v3891
  %3944 = vmatprep.subr.bf16.mxu0 %v3888
  %3945 = vmatpush1.bf16.msra.mxu0 %v3887
  %3946 = vmatprep.subr.bf16.mxu0 0
  %3947 = vmatpush2.bf16.msra.mxu0 0
  %3948 = vmatprep.subr.bf16.mxu0 0
  %3949 = vmatpush2.bf16.msra.mxu0 0
  %3950 = vmatprep.subr.bf16.mxu0 0
  %3951 = vmatpush2.bf16.msra.mxu0 0
  %3952 = vmatprep.subr.bf16.mxu0 0
  %3953 = vmatpush2.bf16.msra.mxu0 0
  %3954 = vmatprep.subr.bf16.mxu0 0
  %3955 = vmatpush2.bf16.msra.mxu0 0
  %3956 = vmatprep.subr.bf16.mxu0 0
  %3957 = vmatpush2.bf16.msra.mxu0 0
  %3958 = vmatprep.subr.bf16.mxu0 0
  %3959 = vmatpush2.bf16.msra.mxu0 0
  %3960 = vmatprep.subr.bf16.mxu0 0
  %3961 = vmatpush2.bf16.msra.mxu0 0
  %3962 = vmatprep.mubr.bf16.mxu0 0
  %3963 = vmatmul.mubr.bf16.gmra.mxu0 %v3928
  %v3964 = vpop.f32.mrf.mxu0
  %v3965 = vadd.f32 %v3825, %v3964
  %v3966 = vpop.f32.mrf.mxu0
  %v3967 = vadd.f32 %v3825, %v3966
  %v3968 = vpop.f32.mrf.mxu0
  %v3969 = vpop.f32.mrf.mxu0
  %3970 = vdwg.mxu0
  %3971 = vmatprep.subr.bf16.mxu0 0
  %3972 = vmatpush1.bf16.msra.mxu0 0
  %3973 = vmatprep.subr.bf16.mxu0 0
  %3974 = vmatpush1.bf16.msra.mxu0 0
  %3975 = vmatprep.subr.bf16.mxu0 0
  %3976 = vmatpush1.bf16.msra.mxu0 0
  %3977 = vmatprep.subr.bf16.mxu0 %v3906
  %3978 = vmatpush1.bf16.msra.mxu0 %v3905
  %3979 = vmatprep.subr.bf16.mxu0 %v3902
  %3980 = vmatpush1.bf16.msra.mxu0 %v3901
  %3981 = vmatprep.subr.bf16.mxu0 %v3898
  %3982 = vmatpush1.bf16.msra.mxu0 %v3897
  %3983 = vmatprep.subr.bf16.mxu0 %v3894
  %3984 = vmatpush1.bf16.msra.mxu0 %v3893
  %3985 = vmatprep.subr.bf16.mxu0 %v3890
  %3986 = vmatpush1.bf16.msra.mxu0 %v3889
  %3987 = vmatprep.subr.bf16.mxu0 0
  %3988 = vmatpush2.bf16.msra.mxu0 0
  %3989 = vmatprep.subr.bf16.mxu0 0
  %3990 = vmatpush2.bf16.msra.mxu0 0
  %3991 = vmatprep.subr.bf16.mxu0 0
  %3992 = vmatpush2.bf16.msra.mxu0 0
  %3993 = vmatprep.subr.bf16.mxu0 0
  %3994 = vmatpush2.bf16.msra.mxu0 0
  %3995 = vmatprep.subr.bf16.mxu0 0
  %3996 = vmatpush2.bf16.msra.mxu0 0
  %3997 = vmatprep.subr.bf16.mxu0 0
  %3998 = vmatpush2.bf16.msra.mxu0 0
  %3999 = vmatprep.subr.bf16.mxu0 0
  %4000 = vmatpush2.bf16.msra.mxu0 0
  %4001 = vmatprep.subr.bf16.mxu0 0
  %4002 = vmatpush2.bf16.msra.mxu0 0
  %4003 = vmatprep.mubr.bf16.mxu0 0
  %4004 = vmatmul.mubr.bf16.gmra.mxu0 %v3928
  %v4005 = vpop.f32.mrf.mxu0
  %v4006 = vadd.f32 %v3825, %v4005
  %v4007 = vpop.f32.mrf.mxu0
  %v4008 = vadd.f32 %v3825, %v4007
  %v4009 = vpop.f32.mrf.mxu0
  %v4010 = vpop.f32.mrf.mxu0
  %4011 = vdwg.mxu0
  %4012 = vst [vmem:[%s5] sm:$0xff] %v3965
  %4013 = vst [vmem:[%s5 + $0x8] sm:$0xff] %v3967
  %4014 = vst [vmem:[%s5 + $0x10] sm:$0xff] %v4006
  %4015 = vst [vmem:[%s5 + $0x18] sm:$0xff] %v4008
  // Predicated region
  $region18: #{_lp_forward.1} parent=0 // pred_check
    _
  $region19: #{_lp_forward.1} parent=0 // pred_check_branch
    %4017 = sbr.rel (0) target = $region21
  $region20: #{_lp_forward.1} parent=0 // pred_region
    _
  $region21: #{_lp_forward.1} parent=0 // pred_fallthru
    _
  // Predicated region
  $region22: #{_lp_forward.1} parent=0 // pred_check
    _
  $region23: #{_lp_forward.1} parent=0 // pred_check_branch
    %4019 = sbr.rel (0) target = $region25
  $region24: #{_lp_forward.1} parent=0 // pred_region
    _
  $region25: #{_lp_forward.1} parent=0 // pred_fallthru
    _
  // Predicated region
  $region26: #{_lp_forward.1} parent=0 // pred_check
    _
  $region27: #{_lp_forward.1} parent=0 // pred_check_branch
    %4021 = sbr.rel (0) target = $region29
  $region28: #{_lp_forward.1} parent=0 // pred_region
    _
  $region29: #{_lp_forward.1} parent=0 // pred_fallthru
    _
  // Predicated region
  $region30: #{_lp_forward.1} parent=0 // pred_check
    _
  $region31: #{_lp_forward.1} parent=0 // pred_check_branch
    %4023 = sbr.rel (0) target = $region33
  $region32: #{_lp_forward.1} parent=0 // pred_region
    _
  $region33: #{_lp_forward.1} parent=0 // pred_fallthru
    _

</llo_original>
